<compile_context>
chip_gen: v7x
topology: tpu7x:2x2x1
jax: 0.10.0
libtpu: 0.0.40
codegen_flags: <defaults>
</compile_context>

<pallas_src>
import functools
import math

import jax
import jax.numpy as jnp
from jax import lax
from jax.experimental import pallas as pl
from jax.experimental.pallas import tpu as pltpu


def _sigmoid(z):
    # tanh-form sigmoid: pure EUP, no VALU divide.
    return 0.5 * jnp.tanh(0.5 * z) + 0.5


def _round_up(v, m):
    return (v + m - 1) // m * m


# ---------------------------------------------------------------------------
# Fused kernel: all LSTM layers + final Linear in one pallas_call
# ---------------------------------------------------------------------------
def _fused_lstm_kernel(*refs, num_layers, hidden, seq):
    # inputs : x_ref (seq*bp, in_f) time-major flattened bf16,
    #          per layer: wih_t (in_f, 4Hp) bf16, whh_t (Hp, 4Hp) bf16,
    #                     b (1, 4Hp) f32 (gate order [i,f,o,g]),
    #          then w_out_t (Hp, out) bf16, b_out (1, out) f32
    # outputs: out_ref (bp, out) f32
    # scratch: xw (seq*bp, 4Hp) f32, hseq (seq*bp, Hp) f32, h/c (bp, Hp) f32
    n_in = 1 + 3 * num_layers + 2
    x_ref = refs[0]
    layer_refs = refs[1:1 + 3 * num_layers]
    w_out_ref = refs[1 + 3 * num_layers]
    b_out_ref = refs[2 + 3 * num_layers]
    out_ref = refs[n_in]
    xw_ref, hseq_ref, h_ref, c_ref = refs[n_in + 1:]

    H = hidden                       # lane-padded hidden (multiple of 128)
    bp = h_ref.shape[0]              # sublane-padded batch (multiple of 8)

    for li in range(num_layers):
        wih_t_ref = layer_refs[3 * li + 0]
        whh_t_ref = layer_refs[3 * li + 1]
        b_ref = layer_refs[3 * li + 2]
        is_last = li == num_layers - 1

        # ---- hoisted input projection: whole sequence, one bf16 MXU matmul ----
        if li == 0:
            x_flat = x_ref[...]                               # bf16 (seq*bp, in_f)
        else:
            x_flat = hseq_ref[...].astype(jnp.bfloat16)       # bf16 (seq*bp, Hp)
        xw_ref[...] = (jnp.dot(x_flat, wih_t_ref[...],
                               preferred_element_type=jnp.float32)
                       + b_ref[...])                          # f32 (seq*bp, 4Hp)

        h_ref[...] = jnp.zeros_like(h_ref)
        c_ref[...] = jnp.zeros_like(c_ref)

        # ---- serial recurrence: only h @ W_hh^T + gate math per step ----
        # TODO(synk): keep W_hh resident in MXU weight regs via
        #   pltpu.matmul_push_rhs/acc_lhs/pop instead of re-issuing the dot.
        def step(t, carry, whh_t_ref=whh_t_ref, is_last=is_last):
            row = pl.multiple_of(t * bp, 8)                   # aligned sublane offset
            h_bf = h_ref[...].astype(jnp.bfloat16)
            gates = (xw_ref[pl.ds(row, bp), :]
                     + jnp.dot(h_bf, whh_t_ref[...],
                               preferred_element_type=jnp.float32))  # f32 (bp, 4H)
            # gate order is [i, f, o | g]: sigmoid on 3H lanes, tanh on H lanes.
            sig = _sigmoid(gates[:, :3 * H])
            g_g = jnp.tanh(gates[:, 3 * H:])
            i_g = sig[:, 0 * H:1 * H]
            f_g = sig[:, 1 * H:2 * H]
            o_g = sig[:, 2 * H:3 * H]
            c_new = f_g * c_ref[...] + i_g * g_g
            h_new = o_g * jnp.tanh(c_new)
            c_ref[...] = c_new
            h_ref[...] = h_new
            if not is_last:
                # only intermediate layers need the full sequence of h_t
                hseq_ref[pl.ds(row, bp), :] = h_new
            return carry

        lax.fori_loop(0, seq, step, 0,
                      unroll=(seq if seq <= 16 else 4))

    # ---- final Linear on the last-timestep hidden state of the last layer ----
    out_ref[...] = (jnp.dot(h_ref[...].astype(jnp.bfloat16), w_out_ref[...],
                            preferred_element_type=jnp.float32)
                    + b_out_ref[...])


# ---------------------------------------------------------------------------
# Host-side weight massaging: gate reorder [i,f,g,o] -> [i,f,o,g] + padding
# ---------------------------------------------------------------------------
def _reorder_pad_gates(w, H, Hp):
    """Split leading 4H axis into [i,f,g,o], reorder to [i,f,o,g], zero-pad
    each gate chunk to Hp."""
    i, f, g, o = jnp.split(w, 4, axis=0)
    chunks = []
    for ch in (i, f, o, g):
        if Hp != H:
            pad = [(0, Hp - H)] + [(0, 0)] * (w.ndim - 1)
            ch = jnp.pad(ch, pad)
        chunks.append(ch)
    return jnp.concatenate(chunks, axis=0)


def _pad_last(a, new_size):
    pad = new_size - a.shape[-1]
    if pad == 0:
        return a
    return jnp.pad(a, [(0, 0)] * (a.ndim - 1) + [(0, pad)])


def lstm_model_forward(x, params, hidden):
    """x: (batch, seq, input_size) batch_first, like the PyTorch module."""
    batch, seq, in_f = x.shape
    num_layers = len(params["lstm"])
    out_f = params["w_out"].shape[0]

    Hp = _round_up(hidden, 128)       # lane-dense hidden
    bp = _round_up(batch, 8)          # sublane-dense batch

    # time-major, batch zero-padded to bp, flattened; bf16 for the MXU.
    x_tm = jnp.transpose(x, (1, 0, 2))                        # (seq, batch, in)
    x_tm = jnp.pad(x_tm, ((0, 0), (0, bp - batch), (0, 0)))
    x_flat = x_tm.reshape(seq * bp, in_f).astype(jnp.bfloat16)

    args = [x_flat]
    in_specs = [pl.BlockSpec(x_flat.shape, lambda: (0, 0))]
    for li, layer in enumerate(params["lstm"]):
        w_ih = layer["w_ih"]                                  # (4H, in_f or H)
        w_hh = layer["w_hh"]                                  # (4H, H)
        if li > 0:
            w_ih = _pad_last(w_ih, Hp)                        # padded-h inputs
        w_hh = _pad_last(w_hh, Hp)
        wih_t = jnp.transpose(_reorder_pad_gates(w_ih, hidden, Hp)).astype(jnp.bfloat16)
        whh_t = jnp.transpose(_reorder_pad_gates(w_hh, hidden, Hp)).astype(jnp.bfloat16)
        b = _reorder_pad_gates(layer["b_ih"] + layer["b_hh"], hidden, Hp)
        b = b.reshape(1, 4 * Hp).astype(jnp.float32)
        args += [wih_t, whh_t, b]
        in_specs += [
            pl.BlockSpec(wih_t.shape, lambda: (0, 0)),
            pl.BlockSpec(whh_t.shape, lambda: (0, 0)),
            pl.BlockSpec(b.shape, lambda: (0, 0)),
        ]
    w_out_t = jnp.transpose(_pad_last(params["w_out"], Hp)).astype(jnp.bfloat16)
    b_out = params["b_out"].reshape(1, out_f).astype(jnp.float32)
    args += [w_out_t, b_out]
    in_specs += [
        pl.BlockSpec(w_out_t.shape, lambda: (0, 0)),
        pl.BlockSpec(b_out.shape, lambda: (0, 0)),
    ]

    scratch_shapes = [
        pltpu.VMEM((seq * bp, 4 * Hp), jnp.float32),  # xw  (hoisted input proj)
        pltpu.VMEM((seq * bp, Hp), jnp.float32),      # hseq (feeds next layer)
        pltpu.VMEM((bp, Hp), jnp.float32),            # h
        pltpu.VMEM((bp, Hp), jnp.float32),            # c
    ]

    arg_bytes = sum(int(math.prod(a.shape)) * a.dtype.itemsize for a in args)
    scratch_bytes = (seq * bp * 4 * Hp + seq * bp * Hp + 2 * bp * Hp) * 4
    vmem_limit = int(min(64 << 20,
                         max(32 << 20, 2 * arg_bytes + scratch_bytes + (4 << 20))))

    kernel = functools.partial(_fused_lstm_kernel, num_layers=num_layers,
                               hidden=Hp, seq=seq)
    out = pl.pallas_call(
        kernel,
        out_shape=jax.ShapeDtypeStruct((bp, out_f), jnp.float32),
        in_specs=in_specs,
        out_specs=pl.BlockSpec((bp, out_f), lambda: (0, 0)),
        scratch_shapes=scratch_shapes,
        compiler_params=pltpu.CompilerParams(vmem_limit_bytes=vmem_limit),
    )(*args)
    return out[:batch]


# ---------------------------------------------------------------------------
# Pure-JAX reference (f32 end-to-end) for correctness check
# ---------------------------------------------------------------------------
def lstm_model_ref(x, params, hidden):
    batch = x.shape[0]
    seq = x.shape[1]
    layer_in = x
    for layer in params["lstm"]:
        h = jnp.zeros((batch, hidden), jnp.float32)
        c = jnp.zeros((batch, hidden), jnp.float32)
        outs = []
        for t in range(seq):
            x_t = layer_in[:, t, :]
            gates = (x_t @ layer["w_ih"].T + layer["b_ih"]
                     + h @ layer["w_hh"].T + layer["b_hh"])
            i_g = jax.nn.sigmoid(gates[:, 0 * hidden:1 * hidden])
            f_g = jax.nn.sigmoid(gates[:, 1 * hidden:2 * hidden])
            g_g = jnp.tanh(gates[:, 2 * hidden:3 * hidden])
            o_g = jax.nn.sigmoid(gates[:, 3 * hidden:4 * hidden])
            c = f_g * c + i_g * g_g
            h = o_g * jnp.tanh(c)
            outs.append(h)
        layer_in = jnp.stack(outs, axis=1)
    return layer_in[:, -1] @ params["w_out"].T + params["b_out"]


# ---------------------------------------------------------------------------
# Deterministic parameter construction (PyTorch-style U(-1/sqrt(H), 1/sqrt(H)))
# ---------------------------------------------------------------------------
def init_params(key, input_size, hidden, num_layers, output_size):
    k = 1.0 / jnp.sqrt(jnp.float32(hidden))
    params = {"lstm": []}
    for l in range(num_layers):
        in_f = input_size if l == 0 else hidden
        key, k1, k2, k3, k4 = jax.random.split(key, 5)
        params["lstm"].append({
            "w_ih": jax.random.uniform(k1, (4 * hidden, in_f), jnp.float32, -k, k),
            "w_hh": jax.random.uniform(k2, (4 * hidden, hidden), jnp.float32, -k, k),
            "b_ih": jax.random.uniform(k3, (4 * hidden,), jnp.float32, -k, k),
            "b_hh": jax.random.uniform(k4, (4 * hidden,), jnp.float32, -k, k),
        })
    key, k5, k6 = jax.random.split(key, 3)
    params["w_out"] = jax.random.uniform(k5, (output_size, hidden), jnp.float32, -k, k)
    params["b_out"] = jax.random.uniform(k6, (output_size,), jnp.float32, -k, k)
    return params


if __name__ == "__main__":
    batch, seq = 2, 8
    input_size, hidden, num_layers, output_size = 8, 32, 2, 1

    key = jax.random.PRNGKey(0)
    key, xkey = jax.random.split(key)
    x = jax.random.normal(xkey, (batch, seq, input_size), jnp.float32)
    params = init_params(key, input_size, hidden, num_layers, output_size)

    fwd = jax.jit(lstm_model_forward, static_argnames=("hidden",))
    out = fwd(x, params, hidden=hidden)
    out = jax.block_until_ready(out)

    ref = lstm_model_ref(x, params, hidden)
    assert out.shape == (batch, output_size)
    # Kernel uses bf16 matmul operands (f32 accumulation), so compare against
    # the f32 reference with a bf16-appropriate tolerance.
    assert jnp.allclose(out, ref, atol=3e-2, rtol=3e-2), (out, ref)

    print("KERNEL_OK")
</pallas_src>

<mosaic_0001>
module attributes {stable_mosaic.version = 11 : i64} {
  func.func @_fused_lstm_kernel(%arg0: memref<64x8xbf16, #tpu.memory_space<vmem>>, %arg1: memref<8x512xbf16, #tpu.memory_space<vmem>>, %arg2: memref<128x512xbf16, #tpu.memory_space<vmem>>, %arg3: memref<1x512xf32, #tpu.memory_space<vmem>>, %arg4: memref<128x512xbf16, #tpu.memory_space<vmem>>, %arg5: memref<128x512xbf16, #tpu.memory_space<vmem>>, %arg6: memref<1x512xf32, #tpu.memory_space<vmem>>, %arg7: memref<128x1xbf16, #tpu.memory_space<vmem>>, %arg8: memref<1x1xf32, #tpu.memory_space<vmem>>, %arg9: memref<8x1xf32, #tpu.memory_space<vmem>>, %arg10: memref<64x512xf32, #tpu.memory_space<vmem>>, %arg11: memref<64x128xf32, #tpu.memory_space<vmem>>, %arg12: memref<8x128xf32, #tpu.memory_space<vmem>>, %arg13: memref<8x128xf32, #tpu.memory_space<vmem>>) attributes {dimension_semantics = [], scalar_prefetch = 0 : i64, scratch_operands = 4 : i64, tpu.core_type = #tpu.core_type<tc>} {
    %c0 = arith.constant 0 : index
    %c0_0 = arith.constant 0 : index
    %0 = vector.load %arg0[%c0, %c0_0] : memref<64x8xbf16, #tpu.memory_space<vmem>>, vector<64x8xbf16>
    %c0_1 = arith.constant 0 : index
    %c0_2 = arith.constant 0 : index
    %1 = vector.load %arg1[%c0_1, %c0_2] : memref<8x512xbf16, #tpu.memory_space<vmem>>, vector<8x512xbf16>
    %cst = arith.constant dense<0.000000e+00> : vector<64x512xf32>
    %2 = tpu.matmul %0, %1, %cst {dimension_numbers = #tpu.dot_dimension_numbers<[1], [0], [0], [1], [0, 0, 1, 1], [], []>} : vector<64x8xbf16>, vector<8x512xbf16>, vector<64x512xf32> -> vector<64x512xf32>
    %c0_3 = arith.constant 0 : index
    %c0_4 = arith.constant 0 : index
    %3 = vector.load %arg3[%c0_3, %c0_4] : memref<1x512xf32, #tpu.memory_space<vmem>>, vector<1x512xf32>
    %4 = vector.broadcast %3 : vector<1x512xf32> to vector<64x512xf32>
    %5 = arith.addf %2, %4 : vector<64x512xf32>
    %c0_5 = arith.constant 0 : index
    %c0_6 = arith.constant 0 : index
    %6 = vector.load %arg10[%c0_5, %c0_6] : memref<64x512xf32, #tpu.memory_space<vmem>>, vector<64x512xf32>
    tpu.vector_store %arg10[%c0_5, %c0_6], %5 {strides = array<i32>} : memref<64x512xf32, #tpu.memory_space<vmem>>, vector<64x512xf32>,
    %cst_7 = arith.constant 0.000000e+00 : f32
    %7 = vector.broadcast %cst_7 : f32 to vector<8x128xf32>
    %c0_8 = arith.constant 0 : index
    %c0_9 = arith.constant 0 : index
    %8 = vector.load %arg12[%c0_8, %c0_9] : memref<8x128xf32, #tpu.memory_space<vmem>>, vector<8x128xf32>
    tpu.vector_store %arg12[%c0_8, %c0_9], %7 {strides = array<i32>} : memref<8x128xf32, #tpu.memory_space<vmem>>, vector<8x128xf32>,
    %cst_10 = arith.constant 0.000000e+00 : f32
    %9 = vector.broadcast %cst_10 : f32 to vector<8x128xf32>
    %c0_11 = arith.constant 0 : index
    %c0_12 = arith.constant 0 : index
    %10 = vector.load %arg13[%c0_11, %c0_12] : memref<8x128xf32, #tpu.memory_space<vmem>>, vector<8x128xf32>
    tpu.vector_store %arg13[%c0_11, %c0_12], %9 {strides = array<i32>} : memref<8x128xf32, #tpu.memory_space<vmem>>, vector<8x128xf32>,
    %c0_i32 = arith.constant 0 : i32
    %c8_i32 = arith.constant 8 : i32
    %11 = arith.muli %c0_i32, %c8_i32 : i32
    %12 = tpu.assume_multiple %11, 8 : i32
    %c0_13 = arith.constant 0 : index
    %c0_14 = arith.constant 0 : index
    %13 = vector.load %arg12[%c0_13, %c0_14] : memref<8x128xf32, #tpu.memory_space<vmem>>, vector<8x128xf32>
    %14 = arith.truncf %13 : vector<8x128xf32> to vector<8x128xbf16>
    %15 = arith.index_cast %12 : i32 to index
    %c0_15 = arith.constant 0 : index
    %16 = vector.load %arg10[%15, %c0_15] : memref<64x512xf32, #tpu.memory_space<vmem>>, vector<8x512xf32>
    %c0_16 = arith.constant 0 : index
    %c0_17 = arith.constant 0 : index
    %17 = vector.load %arg2[%c0_16, %c0_17] : memref<128x512xbf16, #tpu.memory_space<vmem>>, vector<128x512xbf16>
    %cst_18 = arith.constant dense<0.000000e+00> : vector<8x512xf32>
    %18 = tpu.matmul %14, %17, %cst_18 {dimension_numbers = #tpu.dot_dimension_numbers<[1], [0], [0], [1], [0, 0, 1, 1], [], []>} : vector<8x128xbf16>, vector<128x512xbf16>, vector<8x512xf32> -> vector<8x512xf32>
    %19 = arith.addf %16, %18 : vector<8x512xf32>
    %20 = vector.extract_strided_slice %19 {offsets = [0, 0], sizes = [8, 384], strides = [1, 1]} : vector<8x512xf32> to vector<8x384xf32>
    %cst_19 = arith.constant 5.000000e-01 : f32
    %21 = vector.broadcast %cst_19 : f32 to vector<8x384xf32>
    %22 = arith.mulf %21, %20 : vector<8x384xf32>
    %23 = math.tanh %22 : vector<8x384xf32>
    %cst_20 = arith.constant 5.000000e-01 : f32
    %24 = vector.broadcast %cst_20 : f32 to vector<8x384xf32>
    %25 = arith.mulf %24, %23 : vector<8x384xf32>
    %cst_21 = arith.constant 5.000000e-01 : f32
    %26 = vector.broadcast %cst_21 : f32 to vector<8x384xf32>
    %27 = arith.addf %25, %26 : vector<8x384xf32>
    %28 = vector.extract_strided_slice %19 {offsets = [0, 384], sizes = [8, 128], strides = [1, 1]} : vector<8x512xf32> to vector<8x128xf32>
    %29 = math.tanh %28 : vector<8x128xf32>
    %30 = vector.extract_strided_slice %27 {offsets = [0, 0], sizes = [8, 128], strides = [1, 1]} : vector<8x384xf32> to vector<8x128xf32>
    %31 = vector.extract_strided_slice %27 {offsets = [0, 128], sizes = [8, 128], strides = [1, 1]} : vector<8x384xf32> to vector<8x128xf32>
    %32 = vector.extract_strided_slice %27 {offsets = [0, 256], sizes = [8, 128], strides = [1, 1]} : vector<8x384xf32> to vector<8x128xf32>
    %c0_22 = arith.constant 0 : index
    %c0_23 = arith.constant 0 : index
    %33 = vector.load %arg13[%c0_22, %c0_23] : memref<8x128xf32, #tpu.memory_space<vmem>>, vector<8x128xf32>
    %34 = arith.mulf %31, %33 : vector<8x128xf32>
    %35 = arith.mulf %30, %29 : vector<8x128xf32>
    %36 = arith.addf %34, %35 : vector<8x128xf32>
    %37 = math.tanh %36 : vector<8x128xf32>
    %38 = arith.mulf %32, %37 : vector<8x128xf32>
    %c0_24 = arith.constant 0 : index
    %c0_25 = arith.constant 0 : index
    %39 = vector.load %arg13[%c0_24, %c0_25] : memref<8x128xf32, #tpu.memory_space<vmem>>, vector<8x128xf32>
    tpu.vector_store %arg13[%c0_24, %c0_25], %36 {strides = array<i32>} : memref<8x128xf32, #tpu.memory_space<vmem>>, vector<8x128xf32>,
    %c0_26 = arith.constant 0 : index
    %c0_27 = arith.constant 0 : index
    %40 = vector.load %arg12[%c0_26, %c0_27] : memref<8x128xf32, #tpu.memory_space<vmem>>, vector<8x128xf32>
    tpu.vector_store %arg12[%c0_26, %c0_27], %38 {strides = array<i32>} : memref<8x128xf32, #tpu.memory_space<vmem>>, vector<8x128xf32>,
    %41 = arith.index_cast %12 : i32 to index
    %c0_28 = arith.constant 0 : index
    %42 = vector.load %arg11[%41, %c0_28] : memref<64x128xf32, #tpu.memory_space<vmem>>, vector<8x128xf32>
    tpu.vector_store %arg11[%41, %c0_28], %38 {strides = array<i32>} : memref<64x128xf32, #tpu.memory_space<vmem>>, vector<8x128xf32>,
    %c1_i32 = arith.constant 1 : i32
    %c8_i32_29 = arith.constant 8 : i32
    %43 = arith.muli %c1_i32, %c8_i32_29 : i32
    %44 = tpu.assume_multiple %43, 8 : i32
    %c0_30 = arith.constant 0 : index
    %c0_31 = arith.constant 0 : index
    %45 = vector.load %arg12[%c0_30, %c0_31] : memref<8x128xf32, #tpu.memory_space<vmem>>, vector<8x128xf32>
    %46 = arith.truncf %45 : vector<8x128xf32> to vector<8x128xbf16>
    %47 = arith.index_cast %44 : i32 to index
    %c0_32 = arith.constant 0 : index
    %48 = vector.load %arg10[%47, %c0_32] : memref<64x512xf32, #tpu.memory_space<vmem>>, vector<8x512xf32>
    %c0_33 = arith.constant 0 : index
    %c0_34 = arith.constant 0 : index
    %49 = vector.load %arg2[%c0_33, %c0_34] : memref<128x512xbf16, #tpu.memory_space<vmem>>, vector<128x512xbf16>
    %cst_35 = arith.constant dense<0.000000e+00> : vector<8x512xf32>
    %50 = tpu.matmul %46, %49, %cst_35 {dimension_numbers = #tpu.dot_dimension_numbers<[1], [0], [0], [1], [0, 0, 1, 1], [], []>} : vector<8x128xbf16>, vector<128x512xbf16>, vector<8x512xf32> -> vector<8x512xf32>
    %51 = arith.addf %48, %50 : vector<8x512xf32>
    %52 = vector.extract_strided_slice %51 {offsets = [0, 0], sizes = [8, 384], strides = [1, 1]} : vector<8x512xf32> to vector<8x384xf32>
    %cst_36 = arith.constant 5.000000e-01 : f32
    %53 = vector.broadcast %cst_36 : f32 to vector<8x384xf32>
    %54 = arith.mulf %53, %52 : vector<8x384xf32>
    %55 = math.tanh %54 : vector<8x384xf32>
    %cst_37 = arith.constant 5.000000e-01 : f32
    %56 = vector.broadcast %cst_37 : f32 to vector<8x384xf32>
    %57 = arith.mulf %56, %55 : vector<8x384xf32>
    %cst_38 = arith.constant 5.000000e-01 : f32
    %58 = vector.broadcast %cst_38 : f32 to vector<8x384xf32>
    %59 = arith.addf %57, %58 : vector<8x384xf32>
    %60 = vector.extract_strided_slice %51 {offsets = [0, 384], sizes = [8, 128], strides = [1, 1]} : vector<8x512xf32> to vector<8x128xf32>
    %61 = math.tanh %60 : vector<8x128xf32>
    %62 = vector.extract_strided_slice %59 {offsets = [0, 0], sizes = [8, 128], strides = [1, 1]} : vector<8x384xf32> to vector<8x128xf32>
    %63 = vector.extract_strided_slice %59 {offsets = [0, 128], sizes = [8, 128], strides = [1, 1]} : vector<8x384xf32> to vector<8x128xf32>
    %64 = vector.extract_strided_slice %59 {offsets = [0, 256], sizes = [8, 128], strides = [1, 1]} : vector<8x384xf32> to vector<8x128xf32>
    %c0_39 = arith.constant 0 : index
    %c0_40 = arith.constant 0 : index
    %65 = vector.load %arg13[%c0_39, %c0_40] : memref<8x128xf32, #tpu.memory_space<vmem>>, vector<8x128xf32>
    %66 = arith.mulf %63, %65 : vector<8x128xf32>
    %67 = arith.mulf %62, %61 : vector<8x128xf32>
    %68 = arith.addf %66, %67 : vector<8x128xf32>
    %69 = math.tanh %68 : vector<8x128xf32>
    %70 = arith.mulf %64, %69 : vector<8x128xf32>
    %c0_41 = arith.constant 0 : index
    %c0_42 = arith.constant 0 : index
    %71 = vector.load %arg13[%c0_41, %c0_42] : memref<8x128xf32, #tpu.memory_space<vmem>>, vector<8x128xf32>
    tpu.vector_store %arg13[%c0_41, %c0_42], %68 {strides = array<i32>} : memref<8x128xf32, #tpu.memory_space<vmem>>, vector<8x128xf32>,
    %c0_43 = arith.constant 0 : index
    %c0_44 = arith.constant 0 : index
    %72 = vector.load %arg12[%c0_43, %c0_44] : memref<8x128xf32, #tpu.memory_space<vmem>>, vector<8x128xf32>
    tpu.vector_store %arg12[%c0_43, %c0_44], %70 {strides = array<i32>} : memref<8x128xf32, #tpu.memory_space<vmem>>, vector<8x128xf32>,
    %73 = arith.index_cast %44 : i32 to index
    %c0_45 = arith.constant 0 : index
    %74 = vector.load %arg11[%73, %c0_45] : memref<64x128xf32, #tpu.memory_space<vmem>>, vector<8x128xf32>
    tpu.vector_store %arg11[%73, %c0_45], %70 {strides = array<i32>} : memref<64x128xf32, #tpu.memory_space<vmem>>, vector<8x128xf32>,
    %c2_i32 = arith.constant 2 : i32
    %c8_i32_46 = arith.constant 8 : i32
    %75 = arith.muli %c2_i32, %c8_i32_46 : i32
    %76 = tpu.assume_multiple %75, 8 : i32
    %c0_47 = arith.constant 0 : index
    %c0_48 = arith.constant 0 : index
    %77 = vector.load %arg12[%c0_47, %c0_48] : memref<8x128xf32, #tpu.memory_space<vmem>>, vector<8x128xf32>
    %78 = arith.truncf %77 : vector<8x128xf32> to vector<8x128xbf16>
    %79 = arith.index_cast %76 : i32 to index
    %c0_49 = arith.constant 0 : index
    %80 = vector.load %arg10[%79, %c0_49] : memref<64x512xf32, #tpu.memory_space<vmem>>, vector<8x512xf32>
    %c0_50 = arith.constant 0 : index
    %c0_51 = arith.constant 0 : index
    %81 = vector.load %arg2[%c0_50, %c0_51] : memref<128x512xbf16, #tpu.memory_space<vmem>>, vector<128x512xbf16>
    %cst_52 = arith.constant dense<0.000000e+00> : vector<8x512xf32>
    %82 = tpu.matmul %78, %81, %cst_52 {dimension_numbers = #tpu.dot_dimension_numbers<[1], [0], [0], [1], [0, 0, 1, 1], [], []>} : vector<8x128xbf16>, vector<128x512xbf16>, vector<8x512xf32> -> vector<8x512xf32>
    %83 = arith.addf %80, %82 : vector<8x512xf32>
    %84 = vector.extract_strided_slice %83 {offsets = [0, 0], sizes = [8, 384], strides = [1, 1]} : vector<8x512xf32> to vector<8x384xf32>
    %cst_53 = arith.constant 5.000000e-01 : f32
    %85 = vector.broadcast %cst_53 : f32 to vector<8x384xf32>
    %86 = arith.mulf %85, %84 : vector<8x384xf32>
    %87 = math.tanh %86 : vector<8x384xf32>
    %cst_54 = arith.constant 5.000000e-01 : f32
    %88 = vector.broadcast %cst_54 : f32 to vector<8x384xf32>
    %89 = arith.mulf %88, %87 : vector<8x384xf32>
    %cst_55 = arith.constant 5.000000e-01 : f32
    %90 = vector.broadcast %cst_55 : f32 to vector<8x384xf32>
    %91 = arith.addf %89, %90 : vector<8x384xf32>
    %92 = vector.extract_strided_slice %83 {offsets = [0, 384], sizes = [8, 128], strides = [1, 1]} : vector<8x512xf32> to vector<8x128xf32>
    %93 = math.tanh %92 : vector<8x128xf32>
    %94 = vector.extract_strided_slice %91 {offsets = [0, 0], sizes = [8, 128], strides = [1, 1]} : vector<8x384xf32> to vector<8x128xf32>
    %95 = vector.extract_strided_slice %91 {offsets = [0, 128], sizes = [8, 128], strides = [1, 1]} : vector<8x384xf32> to vector<8x128xf32>
    %96 = vector.extract_strided_slice %91 {offsets = [0, 256], sizes = [8, 128], strides = [1, 1]} : vector<8x384xf32> to vector<8x128xf32>
    %c0_56 = arith.constant 0 : index
    %c0_57 = arith.constant 0 : index
    %97 = vector.load %arg13[%c0_56, %c0_57] : memref<8x128xf32, #tpu.memory_space<vmem>>, vector<8x128xf32>
    %98 = arith.mulf %95, %97 : vector<8x128xf32>
    %99 = arith.mulf %94, %93 : vector<8x128xf32>
    %100 = arith.addf %98, %99 : vector<8x128xf32>
    %101 = math.tanh %100 : vector<8x128xf32>
    %102 = arith.mulf %96, %101 : vector<8x128xf32>
    %c0_58 = arith.constant 0 : index
    %c0_59 = arith.constant 0 : index
    %103 = vector.load %arg13[%c0_58, %c0_59] : memref<8x128xf32, #tpu.memory_space<vmem>>, vector<8x128xf32>
    tpu.vector_store %arg13[%c0_58, %c0_59], %100 {strides = array<i32>} : memref<8x128xf32, #tpu.memory_space<vmem>>, vector<8x128xf32>,
    %c0_60 = arith.constant 0 : index
    %c0_61 = arith.constant 0 : index
    %104 = vector.load %arg12[%c0_60, %c0_61] : memref<8x128xf32, #tpu.memory_space<vmem>>, vector<8x128xf32>
    tpu.vector_store %arg12[%c0_60, %c0_61], %102 {strides = array<i32>} : memref<8x128xf32, #tpu.memory_space<vmem>>, vector<8x128xf32>,
    %105 = arith.index_cast %76 : i32 to index
    %c0_62 = arith.constant 0 : index
    %106 = vector.load %arg11[%105, %c0_62] : memref<64x128xf32, #tpu.memory_space<vmem>>, vector<8x128xf32>
    tpu.vector_store %arg11[%105, %c0_62], %102 {strides = array<i32>} : memref<64x128xf32, #tpu.memory_space<vmem>>, vector<8x128xf32>,
    %c3_i32 = arith.constant 3 : i32
    %c8_i32_63 = arith.constant 8 : i32
    %107 = arith.muli %c3_i32, %c8_i32_63 : i32
    %108 = tpu.assume_multiple %107, 8 : i32
    %c0_64 = arith.constant 0 : index
    %c0_65 = arith.constant 0 : index
    %109 = vector.load %arg12[%c0_64, %c0_65] : memref<8x128xf32, #tpu.memory_space<vmem>>, vector<8x128xf32>
    %110 = arith.truncf %109 : vector<8x128xf32> to vector<8x128xbf16>
    %111 = arith.index_cast %108 : i32 to index
    %c0_66 = arith.constant 0 : index
    %112 = vector.load %arg10[%111, %c0_66] : memref<64x512xf32, #tpu.memory_space<vmem>>, vector<8x512xf32>
    %c0_67 = arith.constant 0 : index
    %c0_68 = arith.constant 0 : index
    %113 = vector.load %arg2[%c0_67, %c0_68] : memref<128x512xbf16, #tpu.memory_space<vmem>>, vector<128x512xbf16>
    %cst_69 = arith.constant dense<0.000000e+00> : vector<8x512xf32>
    %114 = tpu.matmul %110, %113, %cst_69 {dimension_numbers = #tpu.dot_dimension_numbers<[1], [0], [0], [1], [0, 0, 1, 1], [], []>} : vector<8x128xbf16>, vector<128x512xbf16>, vector<8x512xf32> -> vector<8x512xf32>
    %115 = arith.addf %112, %114 : vector<8x512xf32>
    %116 = vector.extract_strided_slice %115 {offsets = [0, 0], sizes = [8, 384], strides = [1, 1]} : vector<8x512xf32> to vector<8x384xf32>
    %cst_70 = arith.constant 5.000000e-01 : f32
    %117 = vector.broadcast %cst_70 : f32 to vector<8x384xf32>
    %118 = arith.mulf %117, %116 : vector<8x384xf32>
    %119 = math.tanh %118 : vector<8x384xf32>
    %cst_71 = arith.constant 5.000000e-01 : f32
    %120 = vector.broadcast %cst_71 : f32 to vector<8x384xf32>
    %121 = arith.mulf %120, %119 : vector<8x384xf32>
    %cst_72 = arith.constant 5.000000e-01 : f32
    %122 = vector.broadcast %cst_72 : f32 to vector<8x384xf32>
    %123 = arith.addf %121, %122 : vector<8x384xf32>
    %124 = vector.extract_strided_slice %115 {offsets = [0, 384], sizes = [8, 128], strides = [1, 1]} : vector<8x512xf32> to vector<8x128xf32>
    %125 = math.tanh %124 : vector<8x128xf32>
    %126 = vector.extract_strided_slice %123 {offsets = [0, 0], sizes = [8, 128], strides = [1, 1]} : vector<8x384xf32> to vector<8x128xf32>
    %127 = vector.extract_strided_slice %123 {offsets = [0, 128], sizes = [8, 128], strides = [1, 1]} : vector<8x384xf32> to vector<8x128xf32>
    %128 = vector.extract_strided_slice %123 {offsets = [0, 256], sizes = [8, 128], strides = [1, 1]} : vector<8x384xf32> to vector<8x128xf32>
    %c0_73 = arith.constant 0 : index
    %c0_74 = arith.constant 0 : index
    %129 = vector.load %arg13[%c0_73, %c0_74] : memref<8x128xf32, #tpu.memory_space<vmem>>, vector<8x128xf32>
    %130 = arith.mulf %127, %129 : vector<8x128xf32>
    %131 = arith.mulf %126, %125 : vector<8x128xf32>
    %132 = arith.addf %130, %131 : vector<8x128xf32>
    %133 = math.tanh %132 : vector<8x128xf32>
    %134 = arith.mulf %128, %133 : vector<8x128xf32>
    %c0_75 = arith.constant 0 : index
    %c0_76 = arith.constant 0 : index
    %135 = vector.load %arg13[%c0_75, %c0_76] : memref<8x128xf32, #tpu.memory_space<vmem>>, vector<8x128xf32>
    tpu.vector_store %arg13[%c0_75, %c0_76], %132 {strides = array<i32>} : memref<8x128xf32, #tpu.memory_space<vmem>>, vector<8x128xf32>,
    %c0_77 = arith.constant 0 : index
    %c0_78 = arith.constant 0 : index
    %136 = vector.load %arg12[%c0_77, %c0_78] : memref<8x128xf32, #tpu.memory_space<vmem>>, vector<8x128xf32>
    tpu.vector_store %arg12[%c0_77, %c0_78], %134 {strides = array<i32>} : memref<8x128xf32, #tpu.memory_space<vmem>>, vector<8x128xf32>,
    %137 = arith.index_cast %108 : i32 to index
    %c0_79 = arith.constant 0 : index
    %138 = vector.load %arg11[%137, %c0_79] : memref<64x128xf32, #tpu.memory_space<vmem>>, vector<8x128xf32>
    tpu.vector_store %arg11[%137, %c0_79], %134 {strides = array<i32>} : memref<64x128xf32, #tpu.memory_space<vmem>>, vector<8x128xf32>,
    %c4_i32 = arith.constant 4 : i32
    %c8_i32_80 = arith.constant 8 : i32
    %139 = arith.muli %c4_i32, %c8_i32_80 : i32
    %140 = tpu.assume_multiple %139, 8 : i32
    %c0_81 = arith.constant 0 : index
    %c0_82 = arith.constant 0 : index
    %141 = vector.load %arg12[%c0_81, %c0_82] : memref<8x128xf32, #tpu.memory_space<vmem>>, vector<8x128xf32>
    %142 = arith.truncf %141 : vector<8x128xf32> to vector<8x128xbf16>
    %143 = arith.index_cast %140 : i32 to index
    %c0_83 = arith.constant 0 : index
    %144 = vector.load %arg10[%143, %c0_83] : memref<64x512xf32, #tpu.memory_space<vmem>>, vector<8x512xf32>
    %c0_84 = arith.constant 0 : index
    %c0_85 = arith.constant 0 : index
    %145 = vector.load %arg2[%c0_84, %c0_85] : memref<128x512xbf16, #tpu.memory_space<vmem>>, vector<128x512xbf16>
    %cst_86 = arith.constant dense<0.000000e+00> : vector<8x512xf32>
    %146 = tpu.matmul %142, %145, %cst_86 {dimension_numbers = #tpu.dot_dimension_numbers<[1], [0], [0], [1], [0, 0, 1, 1], [], []>} : vector<8x128xbf16>, vector<128x512xbf16>, vector<8x512xf32> -> vector<8x512xf32>
    %147 = arith.addf %144, %146 : vector<8x512xf32>
    %148 = vector.extract_strided_slice %147 {offsets = [0, 0], sizes = [8, 384], strides = [1, 1]} : vector<8x512xf32> to vector<8x384xf32>
    %cst_87 = arith.constant 5.000000e-01 : f32
    %149 = vector.broadcast %cst_87 : f32 to vector<8x384xf32>
    %150 = arith.mulf %149, %148 : vector<8x384xf32>
    %151 = math.tanh %150 : vector<8x384xf32>
    %cst_88 = arith.constant 5.000000e-01 : f32
    %152 = vector.broadcast %cst_88 : f32 to vector<8x384xf32>
    %153 = arith.mulf %152, %151 : vector<8x384xf32>
    %cst_89 = arith.constant 5.000000e-01 : f32
    %154 = vector.broadcast %cst_89 : f32 to vector<8x384xf32>
    %155 = arith.addf %153, %154 : vector<8x384xf32>
    %156 = vector.extract_strided_slice %147 {offsets = [0, 384], sizes = [8, 128], strides = [1, 1]} : vector<8x512xf32> to vector<8x128xf32>
    %157 = math.tanh %156 : vector<8x128xf32>
    %158 = vector.extract_strided_slice %155 {offsets = [0, 0], sizes = [8, 128], strides = [1, 1]} : vector<8x384xf32> to vector<8x128xf32>
    %159 = vector.extract_strided_slice %155 {offsets = [0, 128], sizes = [8, 128], strides = [1, 1]} : vector<8x384xf32> to vector<8x128xf32>
    %160 = vector.extract_strided_slice %155 {offsets = [0, 256], sizes = [8, 128], strides = [1, 1]} : vector<8x384xf32> to vector<8x128xf32>
    %c0_90 = arith.constant 0 : index
    %c0_91 = arith.constant 0 : index
    %161 = vector.load %arg13[%c0_90, %c0_91] : memref<8x128xf32, #tpu.memory_space<vmem>>, vector<8x128xf32>
    %162 = arith.mulf %159, %161 : vector<8x128xf32>
    %163 = arith.mulf %158, %157 : vector<8x128xf32>
    %164 = arith.addf %162, %163 : vector<8x128xf32>
    %165 = math.tanh %164 : vector<8x128xf32>
    %166 = arith.mulf %160, %165 : vector<8x128xf32>
    %c0_92 = arith.constant 0 : index
    %c0_93 = arith.constant 0 : index
    %167 = vector.load %arg13[%c0_92, %c0_93] : memref<8x128xf32, #tpu.memory_space<vmem>>, vector<8x128xf32>
    tpu.vector_store %arg13[%c0_92, %c0_93], %164 {strides = array<i32>} : memref<8x128xf32, #tpu.memory_space<vmem>>, vector<8x128xf32>,
    %c0_94 = arith.constant 0 : index
    %c0_95 = arith.constant 0 : index
    %168 = vector.load %arg12[%c0_94, %c0_95] : memref<8x128xf32, #tpu.memory_space<vmem>>, vector<8x128xf32>
    tpu.vector_store %arg12[%c0_94, %c0_95], %166 {strides = array<i32>} : memref<8x128xf32, #tpu.memory_space<vmem>>, vector<8x128xf32>,
    %169 = arith.index_cast %140 : i32 to index
    %c0_96 = arith.constant 0 : index
    %170 = vector.load %arg11[%169, %c0_96] : memref<64x128xf32, #tpu.memory_space<vmem>>, vector<8x128xf32>
    tpu.vector_store %arg11[%169, %c0_96], %166 {strides = array<i32>} : memref<64x128xf32, #tpu.memory_space<vmem>>, vector<8x128xf32>,
    %c5_i32 = arith.constant 5 : i32
    %c8_i32_97 = arith.constant 8 : i32
    %171 = arith.muli %c5_i32, %c8_i32_97 : i32
    %172 = tpu.assume_multiple %171, 8 : i32
    %c0_98 = arith.constant 0 : index
    %c0_99 = arith.constant 0 : index
    %173 = vector.load %arg12[%c0_98, %c0_99] : memref<8x128xf32, #tpu.memory_space<vmem>>, vector<8x128xf32>
    %174 = arith.truncf %173 : vector<8x128xf32> to vector<8x128xbf16>
    %175 = arith.index_cast %172 : i32 to index
    %c0_100 = arith.constant 0 : index
    %176 = vector.load %arg10[%175, %c0_100] : memref<64x512xf32, #tpu.memory_space<vmem>>, vector<8x512xf32>
    %c0_101 = arith.constant 0 : index
    %c0_102 = arith.constant 0 : index
    %177 = vector.load %arg2[%c0_101, %c0_102] : memref<128x512xbf16, #tpu.memory_space<vmem>>, vector<128x512xbf16>
    %cst_103 = arith.constant dense<0.000000e+00> : vector<8x512xf32>
    %178 = tpu.matmul %174, %177, %cst_103 {dimension_numbers = #tpu.dot_dimension_numbers<[1], [0], [0], [1], [0, 0, 1, 1], [], []>} : vector<8x128xbf16>, vector<128x512xbf16>, vector<8x512xf32> -> vector<8x512xf32>
    %179 = arith.addf %176, %178 : vector<8x512xf32>
    %180 = vector.extract_strided_slice %179 {offsets = [0, 0], sizes = [8, 384], strides = [1, 1]} : vector<8x512xf32> to vector<8x384xf32>
    %cst_104 = arith.constant 5.000000e-01 : f32
    %181 = vector.broadcast %cst_104 : f32 to vector<8x384xf32>
    %182 = arith.mulf %181, %180 : vector<8x384xf32>
    %183 = math.tanh %182 : vector<8x384xf32>
    %cst_105 = arith.constant 5.000000e-01 : f32
    %184 = vector.broadcast %cst_105 : f32 to vector<8x384xf32>
    %185 = arith.mulf %184, %183 : vector<8x384xf32>
    %cst_106 = arith.constant 5.000000e-01 : f32
    %186 = vector.broadcast %cst_106 : f32 to vector<8x384xf32>
    %187 = arith.addf %185, %186 : vector<8x384xf32>
    %188 = vector.extract_strided_slice %179 {offsets = [0, 384], sizes = [8, 128], strides = [1, 1]} : vector<8x512xf32> to vector<8x128xf32>
    %189 = math.tanh %188 : vector<8x128xf32>
    %190 = vector.extract_strided_slice %187 {offsets = [0, 0], sizes = [8, 128], strides = [1, 1]} : vector<8x384xf32> to vector<8x128xf32>
    %191 = vector.extract_strided_slice %187 {offsets = [0, 128], sizes = [8, 128], strides = [1, 1]} : vector<8x384xf32> to vector<8x128xf32>
    %192 = vector.extract_strided_slice %187 {offsets = [0, 256], sizes = [8, 128], strides = [1, 1]} : vector<8x384xf32> to vector<8x128xf32>
    %c0_107 = arith.constant 0 : index
    %c0_108 = arith.constant 0 : index
    %193 = vector.load %arg13[%c0_107, %c0_108] : memref<8x128xf32, #tpu.memory_space<vmem>>, vector<8x128xf32>
    %194 = arith.mulf %191, %193 : vector<8x128xf32>
    %195 = arith.mulf %190, %189 : vector<8x128xf32>
    %196 = arith.addf %194, %195 : vector<8x128xf32>
    %197 = math.tanh %196 : vector<8x128xf32>
    %198 = arith.mulf %192, %197 : vector<8x128xf32>
    %c0_109 = arith.constant 0 : index
    %c0_110 = arith.constant 0 : index
    %199 = vector.load %arg13[%c0_109, %c0_110] : memref<8x128xf32, #tpu.memory_space<vmem>>, vector<8x128xf32>
    tpu.vector_store %arg13[%c0_109, %c0_110], %196 {strides = array<i32>} : memref<8x128xf32, #tpu.memory_space<vmem>>, vector<8x128xf32>,
    %c0_111 = arith.constant 0 : index
    %c0_112 = arith.constant 0 : index
    %200 = vector.load %arg12[%c0_111, %c0_112] : memref<8x128xf32, #tpu.memory_space<vmem>>, vector<8x128xf32>
    tpu.vector_store %arg12[%c0_111, %c0_112], %198 {strides = array<i32>} : memref<8x128xf32, #tpu.memory_space<vmem>>, vector<8x128xf32>,
    %201 = arith.index_cast %172 : i32 to index
    %c0_113 = arith.constant 0 : index
    %202 = vector.load %arg11[%201, %c0_113] : memref<64x128xf32, #tpu.memory_space<vmem>>, vector<8x128xf32>
    tpu.vector_store %arg11[%201, %c0_113], %198 {strides = array<i32>} : memref<64x128xf32, #tpu.memory_space<vmem>>, vector<8x128xf32>,
    %c6_i32 = arith.constant 6 : i32
    %c8_i32_114 = arith.constant 8 : i32
    %203 = arith.muli %c6_i32, %c8_i32_114 : i32
    %204 = tpu.assume_multiple %203, 8 : i32
    %c0_115 = arith.constant 0 : index
    %c0_116 = arith.constant 0 : index
    %205 = vector.load %arg12[%c0_115, %c0_116] : memref<8x128xf32, #tpu.memory_space<vmem>>, vector<8x128xf32>
    %206 = arith.truncf %205 : vector<8x128xf32> to vector<8x128xbf16>
    %207 = arith.index_cast %204 : i32 to index
    %c0_117 = arith.constant 0 : index
    %208 = vector.load %arg10[%207, %c0_117] : memref<64x512xf32, #tpu.memory_space<vmem>>, vector<8x512xf32>
    %c0_118 = arith.constant 0 : index
    %c0_119 = arith.constant 0 : index
    %209 = vector.load %arg2[%c0_118, %c0_119] : memref<128x512xbf16, #tpu.memory_space<vmem>>, vector<128x512xbf16>
    %cst_120 = arith.constant dense<0.000000e+00> : vector<8x512xf32>
    %210 = tpu.matmul %206, %209, %cst_120 {dimension_numbers = #tpu.dot_dimension_numbers<[1], [0], [0], [1], [0, 0, 1, 1], [], []>} : vector<8x128xbf16>, vector<128x512xbf16>, vector<8x512xf32> -> vector<8x512xf32>
    %211 = arith.addf %208, %210 : vector<8x512xf32>
    %212 = vector.extract_strided_slice %211 {offsets = [0, 0], sizes = [8, 384], strides = [1, 1]} : vector<8x512xf32> to vector<8x384xf32>
    %cst_121 = arith.constant 5.000000e-01 : f32
    %213 = vector.broadcast %cst_121 : f32 to vector<8x384xf32>
    %214 = arith.mulf %213, %212 : vector<8x384xf32>
    %215 = math.tanh %214 : vector<8x384xf32>
    %cst_122 = arith.constant 5.000000e-01 : f32
    %216 = vector.broadcast %cst_122 : f32 to vector<8x384xf32>
    %217 = arith.mulf %216, %215 : vector<8x384xf32>
    %cst_123 = arith.constant 5.000000e-01 : f32
    %218 = vector.broadcast %cst_123 : f32 to vector<8x384xf32>
    %219 = arith.addf %217, %218 : vector<8x384xf32>
    %220 = vector.extract_strided_slice %211 {offsets = [0, 384], sizes = [8, 128], strides = [1, 1]} : vector<8x512xf32> to vector<8x128xf32>
    %221 = math.tanh %220 : vector<8x128xf32>
    %222 = vector.extract_strided_slice %219 {offsets = [0, 0], sizes = [8, 128], strides = [1, 1]} : vector<8x384xf32> to vector<8x128xf32>
    %223 = vector.extract_strided_slice %219 {offsets = [0, 128], sizes = [8, 128], strides = [1, 1]} : vector<8x384xf32> to vector<8x128xf32>
    %224 = vector.extract_strided_slice %219 {offsets = [0, 256], sizes = [8, 128], strides = [1, 1]} : vector<8x384xf32> to vector<8x128xf32>
    %c0_124 = arith.constant 0 : index
    %c0_125 = arith.constant 0 : index
    %225 = vector.load %arg13[%c0_124, %c0_125] : memref<8x128xf32, #tpu.memory_space<vmem>>, vector<8x128xf32>
    %226 = arith.mulf %223, %225 : vector<8x128xf32>
    %227 = arith.mulf %222, %221 : vector<8x128xf32>
    %228 = arith.addf %226, %227 : vector<8x128xf32>
    %229 = math.tanh %228 : vector<8x128xf32>
    %230 = arith.mulf %224, %229 : vector<8x128xf32>
    %c0_126 = arith.constant 0 : index
    %c0_127 = arith.constant 0 : index
    %231 = vector.load %arg13[%c0_126, %c0_127] : memref<8x128xf32, #tpu.memory_space<vmem>>, vector<8x128xf32>
    tpu.vector_store %arg13[%c0_126, %c0_127], %228 {strides = array<i32>} : memref<8x128xf32, #tpu.memory_space<vmem>>, vector<8x128xf32>,
    %c0_128 = arith.constant 0 : index
    %c0_129 = arith.constant 0 : index
    %232 = vector.load %arg12[%c0_128, %c0_129] : memref<8x128xf32, #tpu.memory_space<vmem>>, vector<8x128xf32>
    tpu.vector_store %arg12[%c0_128, %c0_129], %230 {strides = array<i32>} : memref<8x128xf32, #tpu.memory_space<vmem>>, vector<8x128xf32>,
    %233 = arith.index_cast %204 : i32 to index
    %c0_130 = arith.constant 0 : index
    %234 = vector.load %arg11[%233, %c0_130] : memref<64x128xf32, #tpu.memory_space<vmem>>, vector<8x128xf32>
    tpu.vector_store %arg11[%233, %c0_130], %230 {strides = array<i32>} : memref<64x128xf32, #tpu.memory_space<vmem>>, vector<8x128xf32>,
    %c7_i32 = arith.constant 7 : i32
    %c8_i32_131 = arith.constant 8 : i32
    %235 = arith.muli %c7_i32, %c8_i32_131 : i32
    %236 = tpu.assume_multiple %235, 8 : i32
    %c0_132 = arith.constant 0 : index
    %c0_133 = arith.constant 0 : index
    %237 = vector.load %arg12[%c0_132, %c0_133] : memref<8x128xf32, #tpu.memory_space<vmem>>, vector<8x128xf32>
    %238 = arith.truncf %237 : vector<8x128xf32> to vector<8x128xbf16>
    %239 = arith.index_cast %236 : i32 to index
    %c0_134 = arith.constant 0 : index
    %240 = vector.load %arg10[%239, %c0_134] : memref<64x512xf32, #tpu.memory_space<vmem>>, vector<8x512xf32>
    %c0_135 = arith.constant 0 : index
    %c0_136 = arith.constant 0 : index
    %241 = vector.load %arg2[%c0_135, %c0_136] : memref<128x512xbf16, #tpu.memory_space<vmem>>, vector<128x512xbf16>
    %cst_137 = arith.constant dense<0.000000e+00> : vector<8x512xf32>
    %242 = tpu.matmul %238, %241, %cst_137 {dimension_numbers = #tpu.dot_dimension_numbers<[1], [0], [0], [1], [0, 0, 1, 1], [], []>} : vector<8x128xbf16>, vector<128x512xbf16>, vector<8x512xf32> -> vector<8x512xf32>
    %243 = arith.addf %240, %242 : vector<8x512xf32>
    %244 = vector.extract_strided_slice %243 {offsets = [0, 0], sizes = [8, 384], strides = [1, 1]} : vector<8x512xf32> to vector<8x384xf32>
    %cst_138 = arith.constant 5.000000e-01 : f32
    %245 = vector.broadcast %cst_138 : f32 to vector<8x384xf32>
    %246 = arith.mulf %245, %244 : vector<8x384xf32>
    %247 = math.tanh %246 : vector<8x384xf32>
    %cst_139 = arith.constant 5.000000e-01 : f32
    %248 = vector.broadcast %cst_139 : f32 to vector<8x384xf32>
    %249 = arith.mulf %248, %247 : vector<8x384xf32>
    %cst_140 = arith.constant 5.000000e-01 : f32
    %250 = vector.broadcast %cst_140 : f32 to vector<8x384xf32>
    %251 = arith.addf %249, %250 : vector<8x384xf32>
    %252 = vector.extract_strided_slice %243 {offsets = [0, 384], sizes = [8, 128], strides = [1, 1]} : vector<8x512xf32> to vector<8x128xf32>
    %253 = math.tanh %252 : vector<8x128xf32>
    %254 = vector.extract_strided_slice %251 {offsets = [0, 0], sizes = [8, 128], strides = [1, 1]} : vector<8x384xf32> to vector<8x128xf32>
    %255 = vector.extract_strided_slice %251 {offsets = [0, 128], sizes = [8, 128], strides = [1, 1]} : vector<8x384xf32> to vector<8x128xf32>
    %256 = vector.extract_strided_slice %251 {offsets = [0, 256], sizes = [8, 128], strides = [1, 1]} : vector<8x384xf32> to vector<8x128xf32>
    %c0_141 = arith.constant 0 : index
    %c0_142 = arith.constant 0 : index
    %257 = vector.load %arg13[%c0_141, %c0_142] : memref<8x128xf32, #tpu.memory_space<vmem>>, vector<8x128xf32>
    %258 = arith.mulf %255, %257 : vector<8x128xf32>
    %259 = arith.mulf %254, %253 : vector<8x128xf32>
    %260 = arith.addf %258, %259 : vector<8x128xf32>
    %261 = math.tanh %260 : vector<8x128xf32>
    %262 = arith.mulf %256, %261 : vector<8x128xf32>
    %c0_143 = arith.constant 0 : index
    %c0_144 = arith.constant 0 : index
    %263 = vector.load %arg13[%c0_143, %c0_144] : memref<8x128xf32, #tpu.memory_space<vmem>>, vector<8x128xf32>
    tpu.vector_store %arg13[%c0_143, %c0_144], %260 {strides = array<i32>} : memref<8x128xf32, #tpu.memory_space<vmem>>, vector<8x128xf32>,
    %c0_145 = arith.constant 0 : index
    %c0_146 = arith.constant 0 : index
    %264 = vector.load %arg12[%c0_145, %c0_146] : memref<8x128xf32, #tpu.memory_space<vmem>>, vector<8x128xf32>
    tpu.vector_store %arg12[%c0_145, %c0_146], %262 {strides = array<i32>} : memref<8x128xf32, #tpu.memory_space<vmem>>, vector<8x128xf32>,
    %265 = arith.index_cast %236 : i32 to index
    %c0_147 = arith.constant 0 : index
    %266 = vector.load %arg11[%265, %c0_147] : memref<64x128xf32, #tpu.memory_space<vmem>>, vector<8x128xf32>
    tpu.vector_store %arg11[%265, %c0_147], %262 {strides = array<i32>} : memref<64x128xf32, #tpu.memory_space<vmem>>, vector<8x128xf32>,
    %c8_i32_148 = arith.constant 8 : i32
    %c0_149 = arith.constant 0 : index
    %c0_150 = arith.constant 0 : index
    %267 = vector.load %arg11[%c0_149, %c0_150] : memref<64x128xf32, #tpu.memory_space<vmem>>, vector<64x128xf32>
    %268 = arith.truncf %267 : vector<64x128xf32> to vector<64x128xbf16>
    %c0_151 = arith.constant 0 : index
    %c0_152 = arith.constant 0 : index
    %269 = vector.load %arg4[%c0_151, %c0_152] : memref<128x512xbf16, #tpu.memory_space<vmem>>, vector<128x512xbf16>
    %cst_153 = arith.constant dense<0.000000e+00> : vector<64x512xf32>
    %270 = tpu.matmul %268, %269, %cst_153 {dimension_numbers = #tpu.dot_dimension_numbers<[1], [0], [0], [1], [0, 0, 1, 1], [], []>} : vector<64x128xbf16>, vector<128x512xbf16>, vector<64x512xf32> -> vector<64x512xf32>
    %c0_154 = arith.constant 0 : index
    %c0_155 = arith.constant 0 : index
    %271 = vector.load %arg6[%c0_154, %c0_155] : memref<1x512xf32, #tpu.memory_space<vmem>>, vector<1x512xf32>
    %272 = vector.broadcast %271 : vector<1x512xf32> to vector<64x512xf32>
    %273 = arith.addf %270, %272 : vector<64x512xf32>
    %c0_156 = arith.constant 0 : index
    %c0_157 = arith.constant 0 : index
    %274 = vector.load %arg10[%c0_156, %c0_157] : memref<64x512xf32, #tpu.memory_space<vmem>>, vector<64x512xf32>
    tpu.vector_store %arg10[%c0_156, %c0_157], %273 {strides = array<i32>} : memref<64x512xf32, #tpu.memory_space<vmem>>, vector<64x512xf32>,
    %cst_158 = arith.constant 0.000000e+00 : f32
    %275 = vector.broadcast %cst_158 : f32 to vector<8x128xf32>
    %c0_159 = arith.constant 0 : index
    %c0_160 = arith.constant 0 : index
    %276 = vector.load %arg12[%c0_159, %c0_160] : memref<8x128xf32, #tpu.memory_space<vmem>>, vector<8x128xf32>
    tpu.vector_store %arg12[%c0_159, %c0_160], %275 {strides = array<i32>} : memref<8x128xf32, #tpu.memory_space<vmem>>, vector<8x128xf32>,
    %cst_161 = arith.constant 0.000000e+00 : f32
    %277 = vector.broadcast %cst_161 : f32 to vector<8x128xf32>
    %c0_162 = arith.constant 0 : index
    %c0_163 = arith.constant 0 : index
    %278 = vector.load %arg13[%c0_162, %c0_163] : memref<8x128xf32, #tpu.memory_space<vmem>>, vector<8x128xf32>
    tpu.vector_store %arg13[%c0_162, %c0_163], %277 {strides = array<i32>} : memref<8x128xf32, #tpu.memory_space<vmem>>, vector<8x128xf32>,
    %c0_i32_164 = arith.constant 0 : i32
    %c8_i32_165 = arith.constant 8 : i32
    %279 = arith.muli %c0_i32_164, %c8_i32_165 : i32
    %280 = tpu.assume_multiple %279, 8 : i32
    %c0_166 = arith.constant 0 : index
    %c0_167 = arith.constant 0 : index
    %281 = vector.load %arg12[%c0_166, %c0_167] : memref<8x128xf32, #tpu.memory_space<vmem>>, vector<8x128xf32>
    %282 = arith.truncf %281 : vector<8x128xf32> to vector<8x128xbf16>
    %283 = arith.index_cast %280 : i32 to index
    %c0_168 = arith.constant 0 : index
    %284 = vector.load %arg10[%283, %c0_168] : memref<64x512xf32, #tpu.memory_space<vmem>>, vector<8x512xf32>
    %c0_169 = arith.constant 0 : index
    %c0_170 = arith.constant 0 : index
    %285 = vector.load %arg5[%c0_169, %c0_170] : memref<128x512xbf16, #tpu.memory_space<vmem>>, vector<128x512xbf16>
    %cst_171 = arith.constant dense<0.000000e+00> : vector<8x512xf32>
    %286 = tpu.matmul %282, %285, %cst_171 {dimension_numbers = #tpu.dot_dimension_numbers<[1], [0], [0], [1], [0, 0, 1, 1], [], []>} : vector<8x128xbf16>, vector<128x512xbf16>, vector<8x512xf32> -> vector<8x512xf32>
    %287 = arith.addf %284, %286 : vector<8x512xf32>
    %288 = vector.extract_strided_slice %287 {offsets = [0, 0], sizes = [8, 384], strides = [1, 1]} : vector<8x512xf32> to vector<8x384xf32>
    %cst_172 = arith.constant 5.000000e-01 : f32
    %289 = vector.broadcast %cst_172 : f32 to vector<8x384xf32>
    %290 = arith.mulf %289, %288 : vector<8x384xf32>
    %291 = math.tanh %290 : vector<8x384xf32>
    %cst_173 = arith.constant 5.000000e-01 : f32
    %292 = vector.broadcast %cst_173 : f32 to vector<8x384xf32>
    %293 = arith.mulf %292, %291 : vector<8x384xf32>
    %cst_174 = arith.constant 5.000000e-01 : f32
    %294 = vector.broadcast %cst_174 : f32 to vector<8x384xf32>
    %295 = arith.addf %293, %294 : vector<8x384xf32>
    %296 = vector.extract_strided_slice %287 {offsets = [0, 384], sizes = [8, 128], strides = [1, 1]} : vector<8x512xf32> to vector<8x128xf32>
    %297 = math.tanh %296 : vector<8x128xf32>
    %298 = vector.extract_strided_slice %295 {offsets = [0, 0], sizes = [8, 128], strides = [1, 1]} : vector<8x384xf32> to vector<8x128xf32>
    %299 = vector.extract_strided_slice %295 {offsets = [0, 128], sizes = [8, 128], strides = [1, 1]} : vector<8x384xf32> to vector<8x128xf32>
    %300 = vector.extract_strided_slice %295 {offsets = [0, 256], sizes = [8, 128], strides = [1, 1]} : vector<8x384xf32> to vector<8x128xf32>
    %c0_175 = arith.constant 0 : index
    %c0_176 = arith.constant 0 : index
    %301 = vector.load %arg13[%c0_175, %c0_176] : memref<8x128xf32, #tpu.memory_space<vmem>>, vector<8x128xf32>
    %302 = arith.mulf %299, %301 : vector<8x128xf32>
    %303 = arith.mulf %298, %297 : vector<8x128xf32>
    %304 = arith.addf %302, %303 : vector<8x128xf32>
    %305 = math.tanh %304 : vector<8x128xf32>
    %306 = arith.mulf %300, %305 : vector<8x128xf32>
    %c0_177 = arith.constant 0 : index
    %c0_178 = arith.constant 0 : index
    %307 = vector.load %arg13[%c0_177, %c0_178] : memref<8x128xf32, #tpu.memory_space<vmem>>, vector<8x128xf32>
    tpu.vector_store %arg13[%c0_177, %c0_178], %304 {strides = array<i32>} : memref<8x128xf32, #tpu.memory_space<vmem>>, vector<8x128xf32>,
    %c0_179 = arith.constant 0 : index
    %c0_180 = arith.constant 0 : index
    %308 = vector.load %arg12[%c0_179, %c0_180] : memref<8x128xf32, #tpu.memory_space<vmem>>, vector<8x128xf32>
    tpu.vector_store %arg12[%c0_179, %c0_180], %306 {strides = array<i32>} : memref<8x128xf32, #tpu.memory_space<vmem>>, vector<8x128xf32>,
    %c1_i32_181 = arith.constant 1 : i32
    %c8_i32_182 = arith.constant 8 : i32
    %309 = arith.muli %c1_i32_181, %c8_i32_182 : i32
    %310 = tpu.assume_multiple %309, 8 : i32
    %c0_183 = arith.constant 0 : index
    %c0_184 = arith.constant 0 : index
    %311 = vector.load %arg12[%c0_183, %c0_184] : memref<8x128xf32, #tpu.memory_space<vmem>>, vector<8x128xf32>
    %312 = arith.truncf %311 : vector<8x128xf32> to vector<8x128xbf16>
    %313 = arith.index_cast %310 : i32 to index
    %c0_185 = arith.constant 0 : index
    %314 = vector.load %arg10[%313, %c0_185] : memref<64x512xf32, #tpu.memory_space<vmem>>, vector<8x512xf32>
    %c0_186 = arith.constant 0 : index
    %c0_187 = arith.constant 0 : index
    %315 = vector.load %arg5[%c0_186, %c0_187] : memref<128x512xbf16, #tpu.memory_space<vmem>>, vector<128x512xbf16>
    %cst_188 = arith.constant dense<0.000000e+00> : vector<8x512xf32>
    %316 = tpu.matmul %312, %315, %cst_188 {dimension_numbers = #tpu.dot_dimension_numbers<[1], [0], [0], [1], [0, 0, 1, 1], [], []>} : vector<8x128xbf16>, vector<128x512xbf16>, vector<8x512xf32> -> vector<8x512xf32>
    %317 = arith.addf %314, %316 : vector<8x512xf32>
    %318 = vector.extract_strided_slice %317 {offsets = [0, 0], sizes = [8, 384], strides = [1, 1]} : vector<8x512xf32> to vector<8x384xf32>
    %cst_189 = arith.constant 5.000000e-01 : f32
    %319 = vector.broadcast %cst_189 : f32 to vector<8x384xf32>
    %320 = arith.mulf %319, %318 : vector<8x384xf32>
    %321 = math.tanh %320 : vector<8x384xf32>
    %cst_190 = arith.constant 5.000000e-01 : f32
    %322 = vector.broadcast %cst_190 : f32 to vector<8x384xf32>
    %323 = arith.mulf %322, %321 : vector<8x384xf32>
    %cst_191 = arith.constant 5.000000e-01 : f32
    %324 = vector.broadcast %cst_191 : f32 to vector<8x384xf32>
    %325 = arith.addf %323, %324 : vector<8x384xf32>
    %326 = vector.extract_strided_slice %317 {offsets = [0, 384], sizes = [8, 128], strides = [1, 1]} : vector<8x512xf32> to vector<8x128xf32>
    %327 = math.tanh %326 : vector<8x128xf32>
    %328 = vector.extract_strided_slice %325 {offsets = [0, 0], sizes = [8, 128], strides = [1, 1]} : vector<8x384xf32> to vector<8x128xf32>
    %329 = vector.extract_strided_slice %325 {offsets = [0, 128], sizes = [8, 128], strides = [1, 1]} : vector<8x384xf32> to vector<8x128xf32>
    %330 = vector.extract_strided_slice %325 {offsets = [0, 256], sizes = [8, 128], strides = [1, 1]} : vector<8x384xf32> to vector<8x128xf32>
    %c0_192 = arith.constant 0 : index
    %c0_193 = arith.constant 0 : index
    %331 = vector.load %arg13[%c0_192, %c0_193] : memref<8x128xf32, #tpu.memory_space<vmem>>, vector<8x128xf32>
    %332 = arith.mulf %329, %331 : vector<8x128xf32>
    %333 = arith.mulf %328, %327 : vector<8x128xf32>
    %334 = arith.addf %332, %333 : vector<8x128xf32>
    %335 = math.tanh %334 : vector<8x128xf32>
    %336 = arith.mulf %330, %335 : vector<8x128xf32>
    %c0_194 = arith.constant 0 : index
    %c0_195 = arith.constant 0 : index
    %337 = vector.load %arg13[%c0_194, %c0_195] : memref<8x128xf32, #tpu.memory_space<vmem>>, vector<8x128xf32>
    tpu.vector_store %arg13[%c0_194, %c0_195], %334 {strides = array<i32>} : memref<8x128xf32, #tpu.memory_space<vmem>>, vector<8x128xf32>,
    %c0_196 = arith.constant 0 : index
    %c0_197 = arith.constant 0 : index
    %338 = vector.load %arg12[%c0_196, %c0_197] : memref<8x128xf32, #tpu.memory_space<vmem>>, vector<8x128xf32>
    tpu.vector_store %arg12[%c0_196, %c0_197], %336 {strides = array<i32>} : memref<8x128xf32, #tpu.memory_space<vmem>>, vector<8x128xf32>,
    %c2_i32_198 = arith.constant 2 : i32
    %c8_i32_199 = arith.constant 8 : i32
    %339 = arith.muli %c2_i32_198, %c8_i32_199 : i32
    %340 = tpu.assume_multiple %339, 8 : i32
    %c0_200 = arith.constant 0 : index
    %c0_201 = arith.constant 0 : index
    %341 = vector.load %arg12[%c0_200, %c0_201] : memref<8x128xf32, #tpu.memory_space<vmem>>, vector<8x128xf32>
    %342 = arith.truncf %341 : vector<8x128xf32> to vector<8x128xbf16>
    %343 = arith.index_cast %340 : i32 to index
    %c0_202 = arith.constant 0 : index
    %344 = vector.load %arg10[%343, %c0_202] : memref<64x512xf32, #tpu.memory_space<vmem>>, vector<8x512xf32>
    %c0_203 = arith.constant 0 : index
    %c0_204 = arith.constant 0 : index
    %345 = vector.load %arg5[%c0_203, %c0_204] : memref<128x512xbf16, #tpu.memory_space<vmem>>, vector<128x512xbf16>
    %cst_205 = arith.constant dense<0.000000e+00> : vector<8x512xf32>
    %346 = tpu.matmul %342, %345, %cst_205 {dimension_numbers = #tpu.dot_dimension_numbers<[1], [0], [0], [1], [0, 0, 1, 1], [], []>} : vector<8x128xbf16>, vector<128x512xbf16>, vector<8x512xf32> -> vector<8x512xf32>
    %347 = arith.addf %344, %346 : vector<8x512xf32>
    %348 = vector.extract_strided_slice %347 {offsets = [0, 0], sizes = [8, 384], strides = [1, 1]} : vector<8x512xf32> to vector<8x384xf32>
    %cst_206 = arith.constant 5.000000e-01 : f32
    %349 = vector.broadcast %cst_206 : f32 to vector<8x384xf32>
    %350 = arith.mulf %349, %348 : vector<8x384xf32>
    %351 = math.tanh %350 : vector<8x384xf32>
    %cst_207 = arith.constant 5.000000e-01 : f32
    %352 = vector.broadcast %cst_207 : f32 to vector<8x384xf32>
    %353 = arith.mulf %352, %351 : vector<8x384xf32>
    %cst_208 = arith.constant 5.000000e-01 : f32
    %354 = vector.broadcast %cst_208 : f32 to vector<8x384xf32>
    %355 = arith.addf %353, %354 : vector<8x384xf32>
    %356 = vector.extract_strided_slice %347 {offsets = [0, 384], sizes = [8, 128], strides = [1, 1]} : vector<8x512xf32> to vector<8x128xf32>
    %357 = math.tanh %356 : vector<8x128xf32>
    %358 = vector.extract_strided_slice %355 {offsets = [0, 0], sizes = [8, 128], strides = [1, 1]} : vector<8x384xf32> to vector<8x128xf32>
    %359 = vector.extract_strided_slice %355 {offsets = [0, 128], sizes = [8, 128], strides = [1, 1]} : vector<8x384xf32> to vector<8x128xf32>
    %360 = vector.extract_strided_slice %355 {offsets = [0, 256], sizes = [8, 128], strides = [1, 1]} : vector<8x384xf32> to vector<8x128xf32>
    %c0_209 = arith.constant 0 : index
    %c0_210 = arith.constant 0 : index
    %361 = vector.load %arg13[%c0_209, %c0_210] : memref<8x128xf32, #tpu.memory_space<vmem>>, vector<8x128xf32>
    %362 = arith.mulf %359, %361 : vector<8x128xf32>
    %363 = arith.mulf %358, %357 : vector<8x128xf32>
    %364 = arith.addf %362, %363 : vector<8x128xf32>
    %365 = math.tanh %364 : vector<8x128xf32>
    %366 = arith.mulf %360, %365 : vector<8x128xf32>
    %c0_211 = arith.constant 0 : index
    %c0_212 = arith.constant 0 : index
    %367 = vector.load %arg13[%c0_211, %c0_212] : memref<8x128xf32, #tpu.memory_space<vmem>>, vector<8x128xf32>
    tpu.vector_store %arg13[%c0_211, %c0_212], %364 {strides = array<i32>} : memref<8x128xf32, #tpu.memory_space<vmem>>, vector<8x128xf32>,
    %c0_213 = arith.constant 0 : index
    %c0_214 = arith.constant 0 : index
    %368 = vector.load %arg12[%c0_213, %c0_214] : memref<8x128xf32, #tpu.memory_space<vmem>>, vector<8x128xf32>
    tpu.vector_store %arg12[%c0_213, %c0_214], %366 {strides = array<i32>} : memref<8x128xf32, #tpu.memory_space<vmem>>, vector<8x128xf32>,
    %c3_i32_215 = arith.constant 3 : i32
    %c8_i32_216 = arith.constant 8 : i32
    %369 = arith.muli %c3_i32_215, %c8_i32_216 : i32
    %370 = tpu.assume_multiple %369, 8 : i32
    %c0_217 = arith.constant 0 : index
    %c0_218 = arith.constant 0 : index
    %371 = vector.load %arg12[%c0_217, %c0_218] : memref<8x128xf32, #tpu.memory_space<vmem>>, vector<8x128xf32>
    %372 = arith.truncf %371 : vector<8x128xf32> to vector<8x128xbf16>
    %373 = arith.index_cast %370 : i32 to index
    %c0_219 = arith.constant 0 : index
    %374 = vector.load %arg10[%373, %c0_219] : memref<64x512xf32, #tpu.memory_space<vmem>>, vector<8x512xf32>
    %c0_220 = arith.constant 0 : index
    %c0_221 = arith.constant 0 : index
    %375 = vector.load %arg5[%c0_220, %c0_221] : memref<128x512xbf16, #tpu.memory_space<vmem>>, vector<128x512xbf16>
    %cst_222 = arith.constant dense<0.000000e+00> : vector<8x512xf32>
    %376 = tpu.matmul %372, %375, %cst_222 {dimension_numbers = #tpu.dot_dimension_numbers<[1], [0], [0], [1], [0, 0, 1, 1], [], []>} : vector<8x128xbf16>, vector<128x512xbf16>, vector<8x512xf32> -> vector<8x512xf32>
    %377 = arith.addf %374, %376 : vector<8x512xf32>
    %378 = vector.extract_strided_slice %377 {offsets = [0, 0], sizes = [8, 384], strides = [1, 1]} : vector<8x512xf32> to vector<8x384xf32>
    %cst_223 = arith.constant 5.000000e-01 : f32
    %379 = vector.broadcast %cst_223 : f32 to vector<8x384xf32>
    %380 = arith.mulf %379, %378 : vector<8x384xf32>
    %381 = math.tanh %380 : vector<8x384xf32>
    %cst_224 = arith.constant 5.000000e-01 : f32
    %382 = vector.broadcast %cst_224 : f32 to vector<8x384xf32>
    %383 = arith.mulf %382, %381 : vector<8x384xf32>
    %cst_225 = arith.constant 5.000000e-01 : f32
    %384 = vector.broadcast %cst_225 : f32 to vector<8x384xf32>
    %385 = arith.addf %383, %384 : vector<8x384xf32>
    %386 = vector.extract_strided_slice %377 {offsets = [0, 384], sizes = [8, 128], strides = [1, 1]} : vector<8x512xf32> to vector<8x128xf32>
    %387 = math.tanh %386 : vector<8x128xf32>
    %388 = vector.extract_strided_slice %385 {offsets = [0, 0], sizes = [8, 128], strides = [1, 1]} : vector<8x384xf32> to vector<8x128xf32>
    %389 = vector.extract_strided_slice %385 {offsets = [0, 128], sizes = [8, 128], strides = [1, 1]} : vector<8x384xf32> to vector<8x128xf32>
    %390 = vector.extract_strided_slice %385 {offsets = [0, 256], sizes = [8, 128], strides = [1, 1]} : vector<8x384xf32> to vector<8x128xf32>
    %c0_226 = arith.constant 0 : index
    %c0_227 = arith.constant 0 : index
    %391 = vector.load %arg13[%c0_226, %c0_227] : memref<8x128xf32, #tpu.memory_space<vmem>>, vector<8x128xf32>
    %392 = arith.mulf %389, %391 : vector<8x128xf32>
    %393 = arith.mulf %388, %387 : vector<8x128xf32>
    %394 = arith.addf %392, %393 : vector<8x128xf32>
    %395 = math.tanh %394 : vector<8x128xf32>
    %396 = arith.mulf %390, %395 : vector<8x128xf32>
    %c0_228 = arith.constant 0 : index
    %c0_229 = arith.constant 0 : index
    %397 = vector.load %arg13[%c0_228, %c0_229] : memref<8x128xf32, #tpu.memory_space<vmem>>, vector<8x128xf32>
    tpu.vector_store %arg13[%c0_228, %c0_229], %394 {strides = array<i32>} : memref<8x128xf32, #tpu.memory_space<vmem>>, vector<8x128xf32>,
    %c0_230 = arith.constant 0 : index
    %c0_231 = arith.constant 0 : index
    %398 = vector.load %arg12[%c0_230, %c0_231] : memref<8x128xf32, #tpu.memory_space<vmem>>, vector<8x128xf32>
    tpu.vector_store %arg12[%c0_230, %c0_231], %396 {strides = array<i32>} : memref<8x128xf32, #tpu.memory_space<vmem>>, vector<8x128xf32>,
    %c4_i32_232 = arith.constant 4 : i32
    %c8_i32_233 = arith.constant 8 : i32
    %399 = arith.muli %c4_i32_232, %c8_i32_233 : i32
    %400 = tpu.assume_multiple %399, 8 : i32
    %c0_234 = arith.constant 0 : index
    %c0_235 = arith.constant 0 : index
    %401 = vector.load %arg12[%c0_234, %c0_235] : memref<8x128xf32, #tpu.memory_space<vmem>>, vector<8x128xf32>
    %402 = arith.truncf %401 : vector<8x128xf32> to vector<8x128xbf16>
    %403 = arith.index_cast %400 : i32 to index
    %c0_236 = arith.constant 0 : index
    %404 = vector.load %arg10[%403, %c0_236] : memref<64x512xf32, #tpu.memory_space<vmem>>, vector<8x512xf32>
    %c0_237 = arith.constant 0 : index
    %c0_238 = arith.constant 0 : index
    %405 = vector.load %arg5[%c0_237, %c0_238] : memref<128x512xbf16, #tpu.memory_space<vmem>>, vector<128x512xbf16>
    %cst_239 = arith.constant dense<0.000000e+00> : vector<8x512xf32>
    %406 = tpu.matmul %402, %405, %cst_239 {dimension_numbers = #tpu.dot_dimension_numbers<[1], [0], [0], [1], [0, 0, 1, 1], [], []>} : vector<8x128xbf16>, vector<128x512xbf16>, vector<8x512xf32> -> vector<8x512xf32>
    %407 = arith.addf %404, %406 : vector<8x512xf32>
    %408 = vector.extract_strided_slice %407 {offsets = [0, 0], sizes = [8, 384], strides = [1, 1]} : vector<8x512xf32> to vector<8x384xf32>
    %cst_240 = arith.constant 5.000000e-01 : f32
    %409 = vector.broadcast %cst_240 : f32 to vector<8x384xf32>
    %410 = arith.mulf %409, %408 : vector<8x384xf32>
    %411 = math.tanh %410 : vector<8x384xf32>
    %cst_241 = arith.constant 5.000000e-01 : f32
    %412 = vector.broadcast %cst_241 : f32 to vector<8x384xf32>
    %413 = arith.mulf %412, %411 : vector<8x384xf32>
    %cst_242 = arith.constant 5.000000e-01 : f32
    %414 = vector.broadcast %cst_242 : f32 to vector<8x384xf32>
    %415 = arith.addf %413, %414 : vector<8x384xf32>
    %416 = vector.extract_strided_slice %407 {offsets = [0, 384], sizes = [8, 128], strides = [1, 1]} : vector<8x512xf32> to vector<8x128xf32>
    %417 = math.tanh %416 : vector<8x128xf32>
    %418 = vector.extract_strided_slice %415 {offsets = [0, 0], sizes = [8, 128], strides = [1, 1]} : vector<8x384xf32> to vector<8x128xf32>
    %419 = vector.extract_strided_slice %415 {offsets = [0, 128], sizes = [8, 128], strides = [1, 1]} : vector<8x384xf32> to vector<8x128xf32>
    %420 = vector.extract_strided_slice %415 {offsets = [0, 256], sizes = [8, 128], strides = [1, 1]} : vector<8x384xf32> to vector<8x128xf32>
    %c0_243 = arith.constant 0 : index
    %c0_244 = arith.constant 0 : index
    %421 = vector.load %arg13[%c0_243, %c0_244] : memref<8x128xf32, #tpu.memory_space<vmem>>, vector<8x128xf32>
    %422 = arith.mulf %419, %421 : vector<8x128xf32>
    %423 = arith.mulf %418, %417 : vector<8x128xf32>
    %424 = arith.addf %422, %423 : vector<8x128xf32>
    %425 = math.tanh %424 : vector<8x128xf32>
    %426 = arith.mulf %420, %425 : vector<8x128xf32>
    %c0_245 = arith.constant 0 : index
    %c0_246 = arith.constant 0 : index
    %427 = vector.load %arg13[%c0_245, %c0_246] : memref<8x128xf32, #tpu.memory_space<vmem>>, vector<8x128xf32>
    tpu.vector_store %arg13[%c0_245, %c0_246], %424 {strides = array<i32>} : memref<8x128xf32, #tpu.memory_space<vmem>>, vector<8x128xf32>,
    %c0_247 = arith.constant 0 : index
    %c0_248 = arith.constant 0 : index
    %428 = vector.load %arg12[%c0_247, %c0_248] : memref<8x128xf32, #tpu.memory_space<vmem>>, vector<8x128xf32>
    tpu.vector_store %arg12[%c0_247, %c0_248], %426 {strides = array<i32>} : memref<8x128xf32, #tpu.memory_space<vmem>>, vector<8x128xf32>,
    %c5_i32_249 = arith.constant 5 : i32
    %c8_i32_250 = arith.constant 8 : i32
    %429 = arith.muli %c5_i32_249, %c8_i32_250 : i32
    %430 = tpu.assume_multiple %429, 8 : i32
    %c0_251 = arith.constant 0 : index
    %c0_252 = arith.constant 0 : index
    %431 = vector.load %arg12[%c0_251, %c0_252] : memref<8x128xf32, #tpu.memory_space<vmem>>, vector<8x128xf32>
    %432 = arith.truncf %431 : vector<8x128xf32> to vector<8x128xbf16>
    %433 = arith.index_cast %430 : i32 to index
    %c0_253 = arith.constant 0 : index
    %434 = vector.load %arg10[%433, %c0_253] : memref<64x512xf32, #tpu.memory_space<vmem>>, vector<8x512xf32>
    %c0_254 = arith.constant 0 : index
    %c0_255 = arith.constant 0 : index
    %435 = vector.load %arg5[%c0_254, %c0_255] : memref<128x512xbf16, #tpu.memory_space<vmem>>, vector<128x512xbf16>
    %cst_256 = arith.constant dense<0.000000e+00> : vector<8x512xf32>
    %436 = tpu.matmul %432, %435, %cst_256 {dimension_numbers = #tpu.dot_dimension_numbers<[1], [0], [0], [1], [0, 0, 1, 1], [], []>} : vector<8x128xbf16>, vector<128x512xbf16>, vector<8x512xf32> -> vector<8x512xf32>
    %437 = arith.addf %434, %436 : vector<8x512xf32>
    %438 = vector.extract_strided_slice %437 {offsets = [0, 0], sizes = [8, 384], strides = [1, 1]} : vector<8x512xf32> to vector<8x384xf32>
    %cst_257 = arith.constant 5.000000e-01 : f32
    %439 = vector.broadcast %cst_257 : f32 to vector<8x384xf32>
    %440 = arith.mulf %439, %438 : vector<8x384xf32>
    %441 = math.tanh %440 : vector<8x384xf32>
    %cst_258 = arith.constant 5.000000e-01 : f32
    %442 = vector.broadcast %cst_258 : f32 to vector<8x384xf32>
    %443 = arith.mulf %442, %441 : vector<8x384xf32>
    %cst_259 = arith.constant 5.000000e-01 : f32
    %444 = vector.broadcast %cst_259 : f32 to vector<8x384xf32>
    %445 = arith.addf %443, %444 : vector<8x384xf32>
    %446 = vector.extract_strided_slice %437 {offsets = [0, 384], sizes = [8, 128], strides = [1, 1]} : vector<8x512xf32> to vector<8x128xf32>
    %447 = math.tanh %446 : vector<8x128xf32>
    %448 = vector.extract_strided_slice %445 {offsets = [0, 0], sizes = [8, 128], strides = [1, 1]} : vector<8x384xf32> to vector<8x128xf32>
    %449 = vector.extract_strided_slice %445 {offsets = [0, 128], sizes = [8, 128], strides = [1, 1]} : vector<8x384xf32> to vector<8x128xf32>
    %450 = vector.extract_strided_slice %445 {offsets = [0, 256], sizes = [8, 128], strides = [1, 1]} : vector<8x384xf32> to vector<8x128xf32>
    %c0_260 = arith.constant 0 : index
    %c0_261 = arith.constant 0 : index
    %451 = vector.load %arg13[%c0_260, %c0_261] : memref<8x128xf32, #tpu.memory_space<vmem>>, vector<8x128xf32>
    %452 = arith.mulf %449, %451 : vector<8x128xf32>
    %453 = arith.mulf %448, %447 : vector<8x128xf32>
    %454 = arith.addf %452, %453 : vector<8x128xf32>
    %455 = math.tanh %454 : vector<8x128xf32>
    %456 = arith.mulf %450, %455 : vector<8x128xf32>
    %c0_262 = arith.constant 0 : index
    %c0_263 = arith.constant 0 : index
    %457 = vector.load %arg13[%c0_262, %c0_263] : memref<8x128xf32, #tpu.memory_space<vmem>>, vector<8x128xf32>
    tpu.vector_store %arg13[%c0_262, %c0_263], %454 {strides = array<i32>} : memref<8x128xf32, #tpu.memory_space<vmem>>, vector<8x128xf32>,
    %c0_264 = arith.constant 0 : index
    %c0_265 = arith.constant 0 : index
    %458 = vector.load %arg12[%c0_264, %c0_265] : memref<8x128xf32, #tpu.memory_space<vmem>>, vector<8x128xf32>
    tpu.vector_store %arg12[%c0_264, %c0_265], %456 {strides = array<i32>} : memref<8x128xf32, #tpu.memory_space<vmem>>, vector<8x128xf32>,
    %c6_i32_266 = arith.constant 6 : i32
    %c8_i32_267 = arith.constant 8 : i32
    %459 = arith.muli %c6_i32_266, %c8_i32_267 : i32
    %460 = tpu.assume_multiple %459, 8 : i32
    %c0_268 = arith.constant 0 : index
    %c0_269 = arith.constant 0 : index
    %461 = vector.load %arg12[%c0_268, %c0_269] : memref<8x128xf32, #tpu.memory_space<vmem>>, vector<8x128xf32>
    %462 = arith.truncf %461 : vector<8x128xf32> to vector<8x128xbf16>
    %463 = arith.index_cast %460 : i32 to index
    %c0_270 = arith.constant 0 : index
    %464 = vector.load %arg10[%463, %c0_270] : memref<64x512xf32, #tpu.memory_space<vmem>>, vector<8x512xf32>
    %c0_271 = arith.constant 0 : index
    %c0_272 = arith.constant 0 : index
    %465 = vector.load %arg5[%c0_271, %c0_272] : memref<128x512xbf16, #tpu.memory_space<vmem>>, vector<128x512xbf16>
    %cst_273 = arith.constant dense<0.000000e+00> : vector<8x512xf32>
    %466 = tpu.matmul %462, %465, %cst_273 {dimension_numbers = #tpu.dot_dimension_numbers<[1], [0], [0], [1], [0, 0, 1, 1], [], []>} : vector<8x128xbf16>, vector<128x512xbf16>, vector<8x512xf32> -> vector<8x512xf32>
    %467 = arith.addf %464, %466 : vector<8x512xf32>
    %468 = vector.extract_strided_slice %467 {offsets = [0, 0], sizes = [8, 384], strides = [1, 1]} : vector<8x512xf32> to vector<8x384xf32>
    %cst_274 = arith.constant 5.000000e-01 : f32
    %469 = vector.broadcast %cst_274 : f32 to vector<8x384xf32>
    %470 = arith.mulf %469, %468 : vector<8x384xf32>
    %471 = math.tanh %470 : vector<8x384xf32>
    %cst_275 = arith.constant 5.000000e-01 : f32
    %472 = vector.broadcast %cst_275 : f32 to vector<8x384xf32>
    %473 = arith.mulf %472, %471 : vector<8x384xf32>
    %cst_276 = arith.constant 5.000000e-01 : f32
    %474 = vector.broadcast %cst_276 : f32 to vector<8x384xf32>
    %475 = arith.addf %473, %474 : vector<8x384xf32>
    %476 = vector.extract_strided_slice %467 {offsets = [0, 384], sizes = [8, 128], strides = [1, 1]} : vector<8x512xf32> to vector<8x128xf32>
    %477 = math.tanh %476 : vector<8x128xf32>
    %478 = vector.extract_strided_slice %475 {offsets = [0, 0], sizes = [8, 128], strides = [1, 1]} : vector<8x384xf32> to vector<8x128xf32>
    %479 = vector.extract_strided_slice %475 {offsets = [0, 128], sizes = [8, 128], strides = [1, 1]} : vector<8x384xf32> to vector<8x128xf32>
    %480 = vector.extract_strided_slice %475 {offsets = [0, 256], sizes = [8, 128], strides = [1, 1]} : vector<8x384xf32> to vector<8x128xf32>
    %c0_277 = arith.constant 0 : index
    %c0_278 = arith.constant 0 : index
    %481 = vector.load %arg13[%c0_277, %c0_278] : memref<8x128xf32, #tpu.memory_space<vmem>>, vector<8x128xf32>
    %482 = arith.mulf %479, %481 : vector<8x128xf32>
    %483 = arith.mulf %478, %477 : vector<8x128xf32>
    %484 = arith.addf %482, %483 : vector<8x128xf32>
    %485 = math.tanh %484 : vector<8x128xf32>
    %486 = arith.mulf %480, %485 : vector<8x128xf32>
    %c0_279 = arith.constant 0 : index
    %c0_280 = arith.constant 0 : index
    %487 = vector.load %arg13[%c0_279, %c0_280] : memref<8x128xf32, #tpu.memory_space<vmem>>, vector<8x128xf32>
    tpu.vector_store %arg13[%c0_279, %c0_280], %484 {strides = array<i32>} : memref<8x128xf32, #tpu.memory_space<vmem>>, vector<8x128xf32>,
    %c0_281 = arith.constant 0 : index
    %c0_282 = arith.constant 0 : index
    %488 = vector.load %arg12[%c0_281, %c0_282] : memref<8x128xf32, #tpu.memory_space<vmem>>, vector<8x128xf32>
    tpu.vector_store %arg12[%c0_281, %c0_282], %486 {strides = array<i32>} : memref<8x128xf32, #tpu.memory_space<vmem>>, vector<8x128xf32>,
    %c7_i32_283 = arith.constant 7 : i32
    %c8_i32_284 = arith.constant 8 : i32
    %489 = arith.muli %c7_i32_283, %c8_i32_284 : i32
    %490 = tpu.assume_multiple %489, 8 : i32
    %c0_285 = arith.constant 0 : index
    %c0_286 = arith.constant 0 : index
    %491 = vector.load %arg12[%c0_285, %c0_286] : memref<8x128xf32, #tpu.memory_space<vmem>>, vector<8x128xf32>
    %492 = arith.truncf %491 : vector<8x128xf32> to vector<8x128xbf16>
    %493 = arith.index_cast %490 : i32 to index
    %c0_287 = arith.constant 0 : index
    %494 = vector.load %arg10[%493, %c0_287] : memref<64x512xf32, #tpu.memory_space<vmem>>, vector<8x512xf32>
    %c0_288 = arith.constant 0 : index
    %c0_289 = arith.constant 0 : index
    %495 = vector.load %arg5[%c0_288, %c0_289] : memref<128x512xbf16, #tpu.memory_space<vmem>>, vector<128x512xbf16>
    %cst_290 = arith.constant dense<0.000000e+00> : vector<8x512xf32>
    %496 = tpu.matmul %492, %495, %cst_290 {dimension_numbers = #tpu.dot_dimension_numbers<[1], [0], [0], [1], [0, 0, 1, 1], [], []>} : vector<8x128xbf16>, vector<128x512xbf16>, vector<8x512xf32> -> vector<8x512xf32>
    %497 = arith.addf %494, %496 : vector<8x512xf32>
    %498 = vector.extract_strided_slice %497 {offsets = [0, 0], sizes = [8, 384], strides = [1, 1]} : vector<8x512xf32> to vector<8x384xf32>
    %cst_291 = arith.constant 5.000000e-01 : f32
    %499 = vector.broadcast %cst_291 : f32 to vector<8x384xf32>
    %500 = arith.mulf %499, %498 : vector<8x384xf32>
    %501 = math.tanh %500 : vector<8x384xf32>
    %cst_292 = arith.constant 5.000000e-01 : f32
    %502 = vector.broadcast %cst_292 : f32 to vector<8x384xf32>
    %503 = arith.mulf %502, %501 : vector<8x384xf32>
    %cst_293 = arith.constant 5.000000e-01 : f32
    %504 = vector.broadcast %cst_293 : f32 to vector<8x384xf32>
    %505 = arith.addf %503, %504 : vector<8x384xf32>
    %506 = vector.extract_strided_slice %497 {offsets = [0, 384], sizes = [8, 128], strides = [1, 1]} : vector<8x512xf32> to vector<8x128xf32>
    %507 = math.tanh %506 : vector<8x128xf32>
    %508 = vector.extract_strided_slice %505 {offsets = [0, 0], sizes = [8, 128], strides = [1, 1]} : vector<8x384xf32> to vector<8x128xf32>
    %509 = vector.extract_strided_slice %505 {offsets = [0, 128], sizes = [8, 128], strides = [1, 1]} : vector<8x384xf32> to vector<8x128xf32>
    %510 = vector.extract_strided_slice %505 {offsets = [0, 256], sizes = [8, 128], strides = [1, 1]} : vector<8x384xf32> to vector<8x128xf32>
    %c0_294 = arith.constant 0 : index
    %c0_295 = arith.constant 0 : index
    %511 = vector.load %arg13[%c0_294, %c0_295] : memref<8x128xf32, #tpu.memory_space<vmem>>, vector<8x128xf32>
    %512 = arith.mulf %509, %511 : vector<8x128xf32>
    %513 = arith.mulf %508, %507 : vector<8x128xf32>
    %514 = arith.addf %512, %513 : vector<8x128xf32>
    %515 = math.tanh %514 : vector<8x128xf32>
    %516 = arith.mulf %510, %515 : vector<8x128xf32>
    %c0_296 = arith.constant 0 : index
    %c0_297 = arith.constant 0 : index
    %517 = vector.load %arg13[%c0_296, %c0_297] : memref<8x128xf32, #tpu.memory_space<vmem>>, vector<8x128xf32>
    tpu.vector_store %arg13[%c0_296, %c0_297], %514 {strides = array<i32>} : memref<8x128xf32, #tpu.memory_space<vmem>>, vector<8x128xf32>,
    %c0_298 = arith.constant 0 : index
    %c0_299 = arith.constant 0 : index
    %518 = vector.load %arg12[%c0_298, %c0_299] : memref<8x128xf32, #tpu.memory_space<vmem>>, vector<8x128xf32>
    tpu.vector_store %arg12[%c0_298, %c0_299], %516 {strides = array<i32>} : memref<8x128xf32, #tpu.memory_space<vmem>>, vector<8x128xf32>,
    %c8_i32_300 = arith.constant 8 : i32
    %c0_301 = arith.constant 0 : index
    %c0_302 = arith.constant 0 : index
    %519 = vector.load %arg12[%c0_301, %c0_302] : memref<8x128xf32, #tpu.memory_space<vmem>>, vector<8x128xf32>
    %520 = arith.truncf %519 : vector<8x128xf32> to vector<8x128xbf16>
    %c0_303 = arith.constant 0 : index
    %c0_304 = arith.constant 0 : index
    %521 = vector.load %arg7[%c0_303, %c0_304] : memref<128x1xbf16, #tpu.memory_space<vmem>>, vector<128x1xbf16>
    %cst_305 = arith.constant dense<0.000000e+00> : vector<8x1xf32>
    %522 = tpu.matmul %520, %521, %cst_305 {dimension_numbers = #tpu.dot_dimension_numbers<[1], [0], [0], [1], [0, 0, 1, 1], [], []>} : vector<8x128xbf16>, vector<128x1xbf16>, vector<8x1xf32> -> vector<8x1xf32>
    %c0_306 = arith.constant 0 : index
    %c0_307 = arith.constant 0 : index
    %523 = vector.load %arg8[%c0_306, %c0_307] : memref<1x1xf32, #tpu.memory_space<vmem>>, vector<1x1xf32>
    %524 = vector.broadcast %523 : vector<1x1xf32> to vector<8x1xf32>
    %525 = arith.addf %522, %524 : vector<8x1xf32>
    %c0_308 = arith.constant 0 : index
    %c0_309 = arith.constant 0 : index
    %526 = vector.load %arg9[%c0_308, %c0_309] : memref<8x1xf32, #tpu.memory_space<vmem>>, vector<8x1xf32>
    tpu.vector_store %arg9[%c0_308, %c0_309], %525 {strides = array<i32>} : memref<8x1xf32, #tpu.memory_space<vmem>>, vector<8x1xf32>,
    return
  }
}

</mosaic_0001>

<llo_original>
// kernel: lstm_model_forward.1
$region0: #{lstm_model_forward.1}
  #allocation0 [shape = 'u32[]', space=smem, size = 0x4, offset = 0x4, fixed_abs, tag = 'smem constant byte address 0x4 - core index']
  #allocation1 [shape = 'u32[144,128]{1,0:T(1,128)}', space=vmem, size = 0x12000, scoped, tag = 'internal scratch']
  #allocation2 [shape = 'f32[64,512]{1,0:T(8,128)}', space=vmem, size = 0x20000, scoped, tag = 'scratch operand']
  #allocation3 [shape = 'f32[64,128]{1,0:T(8,128)}', space=vmem, size = 0x8000, scoped, tag = 'scratch operand']
  #allocation4 [shape = 'f32[8,128]{1,0:T(8,128)}', space=vmem, size = 0x1000, scoped, tag = 'scratch operand']
  #allocation5 [shape = 'f32[8,128]{1,0:T(8,128)}', space=vmem, size = 0x1000, scoped, tag = 'scratch operand']
  #allocation6 [shape = 'f32[1,1]{1,0:T(1,128)S(1)}', space=vmem, size = 0x200, scoped, tag = 'scoped memory for lstm_model_forward.1']
  %s0 = inlined_call_operand.vmem [shape: bf16[64,8], index: 0, kind: input, shape index: {}]
  %s1 = inlined_call_operand.vmem [shape: bf16[8,512], index: 1, kind: input, shape index: {}]
  %s2 = inlined_call_operand.vmem [shape: bf16[128,512], index: 2, kind: input, shape index: {}]
  %s3 = inlined_call_operand.vmem [shape: f32[1,512], index: 3, kind: input, shape index: {}]
  %s4 = inlined_call_operand.vmem [shape: bf16[128,512], index: 4, kind: input, shape index: {}]
  %s5 = inlined_call_operand.vmem [shape: bf16[128,512], index: 5, kind: input, shape index: {}]
  %s6 = inlined_call_operand.vmem [shape: f32[1,512], index: 6, kind: input, shape index: {}]
  %s7 = inlined_call_operand.vmem [shape: bf16[128,1], index: 7, kind: input, shape index: {}]
  %s8 = inlined_call_operand.<no memory space> [shape: f32[1,1], index: 8, kind: input, shape index: {}]
  %s9 = inlined_call_operand.vmem [shape: f32[8,1], index: 9, kind: output, shape index: {}]
  %s10 = sld [smem:[#allocation0]]
  $region46: #{lstm_model_forward.1} parent=0
    _
  %s12 = ssub.s32 1, %s10
  %s13 = scalar_select 0, %s12, %s10
  %v14 = vstv %s8
  %15 = vst [vmem:[#allocation6] sm:$0x1] %v14
  // Predicated region
  $region2: #{lstm_model_forward.1} parent=0 // pred_check
    _
  $region3: #{lstm_model_forward.1} parent=0 // pred_check_branch
    %17 = sbr.rel (0) target = $region5
  $region4: #{lstm_model_forward.1} parent=0 // pred_region
    _
  $region5: #{lstm_model_forward.1} parent=0 // pred_fallthru
    _
  // Predicated region
  $region6: #{lstm_model_forward.1} parent=0 // pred_check
    _
  $region7: #{lstm_model_forward.1} parent=0 // pred_check_branch
    %19 = sbr.rel (0) target = $region9
  $region8: #{lstm_model_forward.1} parent=0 // pred_region
    _
  $region9: #{lstm_model_forward.1} parent=0 // pred_fallthru
    _
  // Predicated region
  $region10: #{lstm_model_forward.1} parent=0 // pred_check
    _
  $region11: #{lstm_model_forward.1} parent=0 // pred_check_branch
    %21 = sbr.rel (0) target = $region13
  $region12: #{lstm_model_forward.1} parent=0 // pred_region
    _
  $region13: #{lstm_model_forward.1} parent=0 // pred_fallthru
    _
  // Predicated region
  $region14: #{lstm_model_forward.1} parent=0 // pred_check
    _
  $region15: #{lstm_model_forward.1} parent=0 // pred_check_branch
    %23 = sbr.rel (0) target = $region17
  $region16: #{lstm_model_forward.1} parent=0 // pred_region
    _
  $region17: #{lstm_model_forward.1} parent=0 // pred_fallthru
    _
  // Predicated region
  $region18: #{lstm_model_forward.1} parent=0 // pred_check
    _
  $region19: #{lstm_model_forward.1} parent=0 // pred_check_branch
    %25 = sbr.rel (0) target = $region21
  $region20: #{lstm_model_forward.1} parent=0 // pred_region
    _
  $region21: #{lstm_model_forward.1} parent=0 // pred_fallthru
    _
  // Predicated region
  $region22: #{lstm_model_forward.1} parent=0 // pred_check
    _
  $region23: #{lstm_model_forward.1} parent=0 // pred_check_branch
    %27 = sbr.rel (0) target = $region25
  $region24: #{lstm_model_forward.1} parent=0 // pred_region
    _
  $region25: #{lstm_model_forward.1} parent=0 // pred_fallthru
    _
  // Predicated region
  $region26: #{lstm_model_forward.1} parent=0 // pred_check
    _
  $region27: #{lstm_model_forward.1} parent=0 // pred_check_branch
    %29 = sbr.rel (0) target = $region29
  $region28: #{lstm_model_forward.1} parent=0 // pred_region
    _
  $region29: #{lstm_model_forward.1} parent=0 // pred_fallthru
    _
  // Predicated region
  $region30: #{lstm_model_forward.1} parent=0 // pred_check
    _
  $region31: #{lstm_model_forward.1} parent=0 // pred_check_branch
    %31 = sbr.rel (0) target = $region33
  $region32: #{lstm_model_forward.1} parent=0 // pred_region
    _
  $region33: #{lstm_model_forward.1} parent=0 // pred_fallthru
    _
  // Predicated region
  $region34: #{lstm_model_forward.1} parent=0 // pred_check
    _
  $region35: #{lstm_model_forward.1} parent=0 // pred_check_branch
    %33 = sbr.rel (0) target = $region37
  $region36: #{lstm_model_forward.1} parent=0 // pred_region
    _
  $region37: #{lstm_model_forward.1} parent=0 // pred_fallthru
    _
  %v35 = vld [vmem:[%s0] sm:$0xf]
  %v36 = vld [vmem:[%s0 + $0x4] sm:$0xf]
  %v37 = vld [vmem:[%s0 + $0x8] sm:$0xf]
  %v38 = vld [vmem:[%s0 + $0xc] sm:$0xf]
  %v39 = vld [vmem:[%s0 + $0x10] sm:$0xf]
  %v40 = vld [vmem:[%s0 + $0x14] sm:$0xf]
  %v41 = vld [vmem:[%s0 + $0x18] sm:$0xf]
  %v42 = vld [vmem:[%s0 + $0x1c] sm:$0xf]
  %v43 = vld [vmem:[%s1] sm:$0xff]
  %v44 = vld [vmem:[%s1 + $0x8] sm:$0xff]
  %v45 = vld [vmem:[%s3] sm:$0xf]
  %v47 = vlaneseq
  %v48 = vshrl.u32 %v47, 7
  %v49 = vsub.s32 0, %v48
  %v50 = vrot.slane %v45, %v49
  %v51 = vlaneseq
  %v52 = vshrl.u32 %v51, 7
  %v53 = vsub.s32 1, %v52
  %v54 = vrot.slane %v45, %v53
  %v55 = vlaneseq
  %v56 = vshrl.u32 %v55, 7
  %v57 = vsub.s32 2, %v56
  %v58 = vrot.slane %v45, %v57
  %v59 = vlaneseq
  %v60 = vshrl.u32 %v59, 7
  %v61 = vsub.s32 3, %v60
  %v62 = vrot.slane %v45, %v61
  %v75 = vunpack.c.l.b16 %v35
  %v76 = vunpack.c.l.b16 %v36
  %v77 = vunpack.c.l.b16 %v37
  %v78 = vunpack.c.l.b16 %v38
  %v79 = vunpack.c.l.b16 %v39
  %v80 = vunpack.c.l.b16 %v40
  %v81 = vunpack.c.l.b16 %v41
  %v82 = vunpack.c.l.b16 %v42
  %v83 = vpack.c.b16 %v76, %v75
  %v84 = vpack.c.b16 %v78, %v77
  %v85 = vpack.c.b16 %v80, %v79
  %v86 = vpack.c.b16 %v82, %v81
  %v89 = vunpack.c.l.b16 %v43
  %v90 = vunpack.c.h.b16 %v43
  %v91 = vunpack.c.l.b16 %v44
  %v92 = vunpack.c.h.b16 %v44
  %v93 = vpack.c.b16 %v89, %v89
  %v94 = vpack.c.b16 %v90, %v90
  %v95 = vpack.c.b16 %v91, %v91
  %v96 = vpack.c.b16 %v92, %v92
  %vm97 = vcmask 64512
  %v99 = vsel %vm97, %v83, 0
  %v102 = vsel %vm97, %v84, 0
  %v105 = vsel %vm97, %v85, 0
  %v108 = vsel %vm97, %v86, 0
  %vm110 = vcmask 1043456
  %v112 = vsel %vm110, %v93, 0
  %v115 = vsel %vm110, %v94, 0
  %v118 = vsel %vm110, %v95, 0
  %v121 = vsel %vm110, %v96, 0
  %123 = vmatprep.subr.bf16.mxu0 %v115
  %124 = vmatpush1.bf16.msra.mxu0 %v112
  %125 = vmatprep.subr.bf16.mxu0 0
  %126 = vmatpush1.bf16.msra.mxu0 0
  %127 = vmatprep.subr.bf16.mxu0 0
  %128 = vmatpush1.bf16.msra.mxu0 0
  %129 = vmatprep.subr.bf16.mxu0 0
  %130 = vmatpush1.bf16.msra.mxu0 0
  %131 = vmatprep.subr.bf16.mxu0 0
  %132 = vmatpush1.bf16.msra.mxu0 0
  %133 = vmatprep.subr.bf16.mxu0 0
  %134 = vmatpush1.bf16.msra.mxu0 0
  %135 = vmatprep.subr.bf16.mxu0 0
  %136 = vmatpush1.bf16.msra.mxu0 0
  %137 = vmatprep.subr.bf16.mxu0 0
  %138 = vmatpush1.bf16.msra.mxu0 0
  %139 = vmatprep.subr.bf16.mxu0 0
  %140 = vmatpush1.bf16.msra.mxu0 0
  %141 = vmatprep.subr.bf16.mxu0 0
  %142 = vmatpush1.bf16.msra.mxu0 0
  %143 = vmatprep.subr.bf16.mxu0 0
  %144 = vmatpush1.bf16.msra.mxu0 0
  %145 = vmatprep.subr.bf16.mxu0 0
  %146 = vmatpush1.bf16.msra.mxu0 0
  %147 = vmatprep.subr.bf16.mxu0 0
  %148 = vmatpush1.bf16.msra.mxu0 0
  %149 = vmatprep.subr.bf16.mxu0 0
  %150 = vmatpush1.bf16.msra.mxu0 0
  %151 = vmatprep.subr.bf16.mxu0 0
  %152 = vmatpush1.bf16.msra.mxu0 0
  %153 = vmatprep.subr.bf16.mxu0 0
  %154 = vmatpush1.bf16.msra.mxu0 0
  %155 = vmatprep.mubr.bf16.mxu0 0
  %156 = vmatmul.mubr.bf16.gmra.mrb[0].mxu0 %v99
  %v157 = vpop.f32.mrb[0].mxu0
  %v158 = vadd.f32 %v50, %v157
  %v159 = vpop.f32.mrb[0].mxu0
  %v160 = vadd.f32 %v54, %v159
  %v161 = vpop.f32.mrb[0].mxu0
  %v162 = vadd.f32 %v50, %v161
  %v163 = vpop.f32.mrb[0].mxu0
  %v164 = vadd.f32 %v54, %v163
  %165 = vmatprep.mubr.bf16.mxu0 0
  %166 = vmatmul.mubr.bf16.gmra.mrb[0].mxu0 %v102
  %v167 = vpop.f32.mrb[0].mxu0
  %v168 = vadd.f32 %v50, %v167
  %v169 = vpop.f32.mrb[0].mxu0
  %v170 = vadd.f32 %v54, %v169
  %v171 = vpop.f32.mrb[0].mxu0
  %v172 = vadd.f32 %v50, %v171
  %v173 = vpop.f32.mrb[0].mxu0
  %v174 = vadd.f32 %v54, %v173
  %175 = vmatprep.mubr.bf16.mxu0 0
  %176 = vmatmul.mubr.bf16.gmra.mrb[0].mxu0 %v105
  %v177 = vpop.f32.mrb[0].mxu0
  %v178 = vadd.f32 %v50, %v177
  %v179 = vpop.f32.mrb[0].mxu0
  %v180 = vadd.f32 %v54, %v179
  %v181 = vpop.f32.mrb[0].mxu0
  %v182 = vadd.f32 %v50, %v181
  %v183 = vpop.f32.mrb[0].mxu0
  %v184 = vadd.f32 %v54, %v183
  %185 = vmatprep.mubr.bf16.mxu0 0
  %186 = vmatmul.mubr.bf16.gmra.mrb[0].mxu0 %v108
  %v187 = vpop.f32.mrb[0].mxu0
  %v188 = vadd.f32 %v50, %v187
  %v189 = vpop.f32.mrb[0].mxu0
  %v190 = vadd.f32 %v54, %v189
  %v191 = vpop.f32.mrb[0].mxu0
  %v192 = vadd.f32 %v50, %v191
  %v193 = vpop.f32.mrb[0].mxu0
  %v194 = vadd.f32 %v54, %v193
  %195 = vdwg.mxu0
  %196 = vmatprep.subr.bf16.mxu0 %v121
  %197 = vmatpush1.bf16.msra.mxu0 %v118
  %198 = vmatprep.subr.bf16.mxu0 0
  %199 = vmatpush1.bf16.msra.mxu0 0
  %200 = vmatprep.subr.bf16.mxu0 0
  %201 = vmatpush1.bf16.msra.mxu0 0
  %202 = vmatprep.subr.bf16.mxu0 0
  %203 = vmatpush1.bf16.msra.mxu0 0
  %204 = vmatprep.subr.bf16.mxu0 0
  %205 = vmatpush1.bf16.msra.mxu0 0
  %206 = vmatprep.subr.bf16.mxu0 0
  %207 = vmatpush1.bf16.msra.mxu0 0
  %208 = vmatprep.subr.bf16.mxu0 0
  %209 = vmatpush1.bf16.msra.mxu0 0
  %210 = vmatprep.subr.bf16.mxu0 0
  %211 = vmatpush1.bf16.msra.mxu0 0
  %212 = vmatprep.subr.bf16.mxu0 0
  %213 = vmatpush1.bf16.msra.mxu0 0
  %214 = vmatprep.subr.bf16.mxu0 0
  %215 = vmatpush1.bf16.msra.mxu0 0
  %216 = vmatprep.subr.bf16.mxu0 0
  %217 = vmatpush1.bf16.msra.mxu0 0
  %218 = vmatprep.subr.bf16.mxu0 0
  %219 = vmatpush1.bf16.msra.mxu0 0
  %220 = vmatprep.subr.bf16.mxu0 0
  %221 = vmatpush1.bf16.msra.mxu0 0
  %222 = vmatprep.subr.bf16.mxu0 0
  %223 = vmatpush1.bf16.msra.mxu0 0
  %224 = vmatprep.subr.bf16.mxu0 0
  %225 = vmatpush1.bf16.msra.mxu0 0
  %226 = vmatprep.subr.bf16.mxu0 0
  %227 = vmatpush1.bf16.msra.mxu0 0
  %228 = vmatprep.mubr.bf16.mxu0 0
  %229 = vmatmul.mubr.bf16.gmra.mrb[0].mxu0 %v99
  %v230 = vpop.f32.mrb[0].mxu0
  %v231 = vadd.f32 %v58, %v230
  %v232 = vpop.f32.mrb[0].mxu0
  %v233 = vadd.f32 %v62, %v232
  %v234 = vpop.f32.mrb[0].mxu0
  %v235 = vadd.f32 %v58, %v234
  %v236 = vpop.f32.mrb[0].mxu0
  %v237 = vadd.f32 %v62, %v236
  %238 = vmatprep.mubr.bf16.mxu0 0
  %239 = vmatmul.mubr.bf16.gmra.mrb[0].mxu0 %v102
  %v240 = vpop.f32.mrb[0].mxu0
  %v241 = vadd.f32 %v58, %v240
  %v242 = vpop.f32.mrb[0].mxu0
  %v243 = vadd.f32 %v62, %v242
  %v244 = vpop.f32.mrb[0].mxu0
  %v245 = vadd.f32 %v58, %v244
  %v246 = vpop.f32.mrb[0].mxu0
  %v247 = vadd.f32 %v62, %v246
  %248 = vmatprep.mubr.bf16.mxu0 0
  %249 = vmatmul.mubr.bf16.gmra.mrb[0].mxu0 %v105
  %v250 = vpop.f32.mrb[0].mxu0
  %v251 = vadd.f32 %v58, %v250
  %v252 = vpop.f32.mrb[0].mxu0
  %v253 = vadd.f32 %v62, %v252
  %v254 = vpop.f32.mrb[0].mxu0
  %v255 = vadd.f32 %v58, %v254
  %v256 = vpop.f32.mrb[0].mxu0
  %v257 = vadd.f32 %v62, %v256
  %258 = vmatprep.mubr.bf16.mxu0 0
  %259 = vmatmul.mubr.bf16.gmra.mrb[0].mxu0 %v108
  %v260 = vpop.f32.mrb[0].mxu0
  %v261 = vadd.f32 %v58, %v260
  %v262 = vpop.f32.mrb[0].mxu0
  %v263 = vadd.f32 %v62, %v262
  %v264 = vpop.f32.mrb[0].mxu0
  %v265 = vadd.f32 %v58, %v264
  %v266 = vpop.f32.mrb[0].mxu0
  %v267 = vadd.f32 %v62, %v266
  %268 = vdwg.mxu0
  %269 = vst [vmem:[#allocation2] sm:$0xff] %v158
  %270 = vst [vmem:[#allocation2 + $0x8] sm:$0xff] %v160
  %271 = vst [vmem:[#allocation2 + $0x10] sm:$0xff] %v231
  %272 = vst [vmem:[#allocation2 + $0x18] sm:$0xff] %v233
  %273 = vst [vmem:[#allocation2 + $0x20] sm:$0xff] %v162
  %274 = vst [vmem:[#allocation2 + $0x28] sm:$0xff] %v164
  %275 = vst [vmem:[#allocation2 + $0x30] sm:$0xff] %v235
  %276 = vst [vmem:[#allocation2 + $0x38] sm:$0xff] %v237
  %277 = vst [vmem:[#allocation2 + $0x40] sm:$0xff] %v168
  %278 = vst [vmem:[#allocation2 + $0x48] sm:$0xff] %v170
  %279 = vst [vmem:[#allocation2 + $0x50] sm:$0xff] %v241
  %280 = vst [vmem:[#allocation2 + $0x58] sm:$0xff] %v243
  %281 = vst [vmem:[#allocation2 + $0x60] sm:$0xff] %v172
  %282 = vst [vmem:[#allocation2 + $0x68] sm:$0xff] %v174
  %283 = vst [vmem:[#allocation2 + $0x70] sm:$0xff] %v245
  %284 = vst [vmem:[#allocation2 + $0x78] sm:$0xff] %v247
  %285 = vst [vmem:[#allocation2 + $0x80] sm:$0xff] %v178
  %286 = vst [vmem:[#allocation2 + $0x88] sm:$0xff] %v180
  %287 = vst [vmem:[#allocation2 + $0x90] sm:$0xff] %v251
  %288 = vst [vmem:[#allocation2 + $0x98] sm:$0xff] %v253
  %289 = vst [vmem:[#allocation2 + $0xa0] sm:$0xff] %v182
  %290 = vst [vmem:[#allocation2 + $0xa8] sm:$0xff] %v184
  %291 = vst [vmem:[#allocation2 + $0xb0] sm:$0xff] %v255
  %292 = vst [vmem:[#allocation2 + $0xb8] sm:$0xff] %v257
  %293 = vst [vmem:[#allocation2 + $0xc0] sm:$0xff] %v188
  %294 = vst [vmem:[#allocation2 + $0xc8] sm:$0xff] %v190
  %295 = vst [vmem:[#allocation2 + $0xd0] sm:$0xff] %v261
  %296 = vst [vmem:[#allocation2 + $0xd8] sm:$0xff] %v263
  %297 = vst [vmem:[#allocation2 + $0xe0] sm:$0xff] %v192
  %298 = vst [vmem:[#allocation2 + $0xe8] sm:$0xff] %v194
  %299 = vst [vmem:[#allocation2 + $0xf0] sm:$0xff] %v265
  %300 = vst [vmem:[#allocation2 + $0xf8] sm:$0xff] %v267
  %301 = vst [vmem:[#allocation4] sm:$0xff] 0.0
  %302 = vst [vmem:[#allocation5] sm:$0xff] 0.0
  %v303 = vld [vmem:[#allocation4] sm:$0xff]
  %v304 = vpack.c.bf16 %v303, %v303
  %s305 = smul.u32 0, 4
  %s306 = smul.addr %s305, 8
  %s307 = scalar_lea.vmem [#allocation2], %s306
  %v308 = vld [vmem:[%s307] sm:$0xff]
  %v309 = vld [vmem:[%s307 + $0x8] sm:$0xff]
  %v310 = vld [vmem:[%s307 + $0x10] sm:$0xff]
  %v311 = vld [vmem:[%s307 + $0x18] sm:$0xff]
  %v312 = vld [vmem:[%s2] sm:$0xff]
  %v313 = vld [vmem:[%s2 + $0x8] sm:$0xff]
  %v314 = vld [vmem:[%s2 + $0x10] sm:$0xff]
  %v315 = vld [vmem:[%s2 + $0x18] sm:$0xff]
  %v316 = vld [vmem:[%s2 + $0x20] sm:$0xff]
  %v317 = vld [vmem:[%s2 + $0x28] sm:$0xff]
  %v318 = vld [vmem:[%s2 + $0x30] sm:$0xff]
  %v319 = vld [vmem:[%s2 + $0x38] sm:$0xff]
  %v320 = vld [vmem:[%s2 + $0x40] sm:$0xff]
  %v321 = vld [vmem:[%s2 + $0x48] sm:$0xff]
  %v322 = vld [vmem:[%s2 + $0x50] sm:$0xff]
  %v323 = vld [vmem:[%s2 + $0x58] sm:$0xff]
  %v324 = vld [vmem:[%s2 + $0x60] sm:$0xff]
  %v325 = vld [vmem:[%s2 + $0x68] sm:$0xff]
  %v326 = vld [vmem:[%s2 + $0x70] sm:$0xff]
  %v327 = vld [vmem:[%s2 + $0x78] sm:$0xff]
  %v328 = vld [vmem:[%s2 + $0x80] sm:$0xff]
  %v329 = vld [vmem:[%s2 + $0x88] sm:$0xff]
  %v330 = vld [vmem:[%s2 + $0x90] sm:$0xff]
  %v331 = vld [vmem:[%s2 + $0x98] sm:$0xff]
  %v332 = vld [vmem:[%s2 + $0xa0] sm:$0xff]
  %v333 = vld [vmem:[%s2 + $0xa8] sm:$0xff]
  %v334 = vld [vmem:[%s2 + $0xb0] sm:$0xff]
  %v335 = vld [vmem:[%s2 + $0xb8] sm:$0xff]
  %v336 = vld [vmem:[%s2 + $0xc0] sm:$0xff]
  %v337 = vld [vmem:[%s2 + $0xc8] sm:$0xff]
  %v338 = vld [vmem:[%s2 + $0xd0] sm:$0xff]
  %v339 = vld [vmem:[%s2 + $0xd8] sm:$0xff]
  %v340 = vld [vmem:[%s2 + $0xe0] sm:$0xff]
  %v341 = vld [vmem:[%s2 + $0xe8] sm:$0xff]
  %v342 = vld [vmem:[%s2 + $0xf0] sm:$0xff]
  %v343 = vld [vmem:[%s2 + $0xf8] sm:$0xff]
  %v376 = vunpack.c.l.b16 %v312
  %v377 = vunpack.c.h.b16 %v312
  %v378 = vunpack.c.l.b16 %v313
  %v379 = vunpack.c.h.b16 %v313
  %v380 = vunpack.c.l.b16 %v314
  %v381 = vunpack.c.h.b16 %v314
  %v382 = vunpack.c.l.b16 %v315
  %v383 = vunpack.c.h.b16 %v315
  %v384 = vunpack.c.l.b16 %v316
  %v385 = vunpack.c.h.b16 %v316
  %v386 = vunpack.c.l.b16 %v317
  %v387 = vunpack.c.h.b16 %v317
  %v388 = vunpack.c.l.b16 %v318
  %v389 = vunpack.c.h.b16 %v318
  %v390 = vunpack.c.l.b16 %v319
  %v391 = vunpack.c.h.b16 %v319
  %v392 = vunpack.c.l.b16 %v320
  %v393 = vunpack.c.h.b16 %v320
  %v394 = vunpack.c.l.b16 %v321
  %v395 = vunpack.c.h.b16 %v321
  %v396 = vunpack.c.l.b16 %v322
  %v397 = vunpack.c.h.b16 %v322
  %v398 = vunpack.c.l.b16 %v323
  %v399 = vunpack.c.h.b16 %v323
  %v400 = vunpack.c.l.b16 %v324
  %v401 = vunpack.c.h.b16 %v324
  %v402 = vunpack.c.l.b16 %v325
  %v403 = vunpack.c.h.b16 %v325
  %v404 = vunpack.c.l.b16 %v326
  %v405 = vunpack.c.h.b16 %v326
  %v406 = vunpack.c.l.b16 %v327
  %v407 = vunpack.c.h.b16 %v327
  %v408 = vunpack.c.l.b16 %v328
  %v409 = vunpack.c.h.b16 %v328
  %v410 = vunpack.c.l.b16 %v329
  %v411 = vunpack.c.h.b16 %v329
  %v412 = vunpack.c.l.b16 %v330
  %v413 = vunpack.c.h.b16 %v330
  %v414 = vunpack.c.l.b16 %v331
  %v415 = vunpack.c.h.b16 %v331
  %v416 = vunpack.c.l.b16 %v332
  %v417 = vunpack.c.h.b16 %v332
  %v418 = vunpack.c.l.b16 %v333
  %v419 = vunpack.c.h.b16 %v333
  %v420 = vunpack.c.l.b16 %v334
  %v421 = vunpack.c.h.b16 %v334
  %v422 = vunpack.c.l.b16 %v335
  %v423 = vunpack.c.h.b16 %v335
  %v424 = vunpack.c.l.b16 %v336
  %v425 = vunpack.c.h.b16 %v336
  %v426 = vunpack.c.l.b16 %v337
  %v427 = vunpack.c.h.b16 %v337
  %v428 = vunpack.c.l.b16 %v338
  %v429 = vunpack.c.h.b16 %v338
  %v430 = vunpack.c.l.b16 %v339
  %v431 = vunpack.c.h.b16 %v339
  %v432 = vunpack.c.l.b16 %v340
  %v433 = vunpack.c.h.b16 %v340
  %v434 = vunpack.c.l.b16 %v341
  %v435 = vunpack.c.h.b16 %v341
  %v436 = vunpack.c.l.b16 %v342
  %v437 = vunpack.c.h.b16 %v342
  %v438 = vunpack.c.l.b16 %v343
  %v439 = vunpack.c.h.b16 %v343
  %v440 = vpack.c.b16 %v380, %v376
  %v441 = vpack.c.b16 %v381, %v377
  %v442 = vpack.c.b16 %v382, %v378
  %v443 = vpack.c.b16 %v383, %v379
  %v444 = vpack.c.b16 %v388, %v384
  %v445 = vpack.c.b16 %v389, %v385
  %v446 = vpack.c.b16 %v390, %v386
  %v447 = vpack.c.b16 %v391, %v387
  %v448 = vpack.c.b16 %v396, %v392
  %v449 = vpack.c.b16 %v397, %v393
  %v450 = vpack.c.b16 %v398, %v394
  %v451 = vpack.c.b16 %v399, %v395
  %v452 = vpack.c.b16 %v404, %v400
  %v453 = vpack.c.b16 %v405, %v401
  %v454 = vpack.c.b16 %v406, %v402
  %v455 = vpack.c.b16 %v407, %v403
  %v456 = vpack.c.b16 %v412, %v408
  %v457 = vpack.c.b16 %v413, %v409
  %v458 = vpack.c.b16 %v414, %v410
  %v459 = vpack.c.b16 %v415, %v411
  %v460 = vpack.c.b16 %v420, %v416
  %v461 = vpack.c.b16 %v421, %v417
  %v462 = vpack.c.b16 %v422, %v418
  %v463 = vpack.c.b16 %v423, %v419
  %v464 = vpack.c.b16 %v428, %v424
  %v465 = vpack.c.b16 %v429, %v425
  %v466 = vpack.c.b16 %v430, %v426
  %v467 = vpack.c.b16 %v431, %v427
  %v468 = vpack.c.b16 %v436, %v432
  %v469 = vpack.c.b16 %v437, %v433
  %v470 = vpack.c.b16 %v438, %v434
  %v471 = vpack.c.b16 %v439, %v435
  %504 = vmatprep.subr.bf16.mxu0 %v441
  %505 = vmatpush1.bf16.msra.mxu0 %v440
  %506 = vmatprep.subr.bf16.mxu0 %v445
  %507 = vmatpush1.bf16.msra.mxu0 %v444
  %508 = vmatprep.subr.bf16.mxu0 %v449
  %509 = vmatpush1.bf16.msra.mxu0 %v448
  %510 = vmatprep.subr.bf16.mxu0 %v453
  %511 = vmatpush1.bf16.msra.mxu0 %v452
  %512 = vmatprep.subr.bf16.mxu0 %v457
  %513 = vmatpush1.bf16.msra.mxu0 %v456
  %514 = vmatprep.subr.bf16.mxu0 %v461
  %515 = vmatpush1.bf16.msra.mxu0 %v460
  %516 = vmatprep.subr.bf16.mxu0 %v465
  %517 = vmatpush1.bf16.msra.mxu0 %v464
  %518 = vmatprep.subr.bf16.mxu0 %v469
  %519 = vmatpush1.bf16.msra.mxu0 %v468
  %520 = vmatprep.subr.bf16.mxu0 0
  %521 = vmatpush1.bf16.msra.mxu0 0
  %522 = vmatprep.subr.bf16.mxu0 0
  %523 = vmatpush1.bf16.msra.mxu0 0
  %524 = vmatprep.subr.bf16.mxu0 0
  %525 = vmatpush1.bf16.msra.mxu0 0
  %526 = vmatprep.subr.bf16.mxu0 0
  %527 = vmatpush1.bf16.msra.mxu0 0
  %528 = vmatprep.subr.bf16.mxu0 0
  %529 = vmatpush1.bf16.msra.mxu0 0
  %530 = vmatprep.subr.bf16.mxu0 0
  %531 = vmatpush1.bf16.msra.mxu0 0
  %532 = vmatprep.subr.bf16.mxu0 0
  %533 = vmatpush1.bf16.msra.mxu0 0
  %534 = vmatprep.subr.bf16.mxu0 0
  %535 = vmatpush1.bf16.msra.mxu0 0
  %536 = vmatprep.mubr.bf16.mxu0 0
  %537 = vmatmul.mubr.bf16.gmra.mrb[0].mxu0 %v304
  %v538 = vpop.f32.mrb[0].mxu0
  %v539 = vadd.f32 0.0, %v538
  %v540 = vpop.f32.mrb[0].mxu0
  %v541 = vadd.f32 0.0, %v540
  %v542 = vpop.f32.mrb[0].mxu0
  %v543 = vpop.f32.mrb[0].mxu0
  %544 = vdwg.mxu0
  %545 = vmatprep.subr.bf16.mxu0 %v443
  %546 = vmatpush1.bf16.msra.mxu0 %v442
  %547 = vmatprep.subr.bf16.mxu0 %v447
  %548 = vmatpush1.bf16.msra.mxu0 %v446
  %549 = vmatprep.subr.bf16.mxu0 %v451
  %550 = vmatpush1.bf16.msra.mxu0 %v450
  %551 = vmatprep.subr.bf16.mxu0 %v455
  %552 = vmatpush1.bf16.msra.mxu0 %v454
  %553 = vmatprep.subr.bf16.mxu0 %v459
  %554 = vmatpush1.bf16.msra.mxu0 %v458
  %555 = vmatprep.subr.bf16.mxu0 %v463
  %556 = vmatpush1.bf16.msra.mxu0 %v462
  %557 = vmatprep.subr.bf16.mxu0 %v467
  %558 = vmatpush1.bf16.msra.mxu0 %v466
  %559 = vmatprep.subr.bf16.mxu0 %v471
  %560 = vmatpush1.bf16.msra.mxu0 %v470
  %561 = vmatprep.subr.bf16.mxu0 0
  %562 = vmatpush1.bf16.msra.mxu0 0
  %563 = vmatprep.subr.bf16.mxu0 0
  %564 = vmatpush1.bf16.msra.mxu0 0
  %565 = vmatprep.subr.bf16.mxu0 0
  %566 = vmatpush1.bf16.msra.mxu0 0
  %567 = vmatprep.subr.bf16.mxu0 0
  %568 = vmatpush1.bf16.msra.mxu0 0
  %569 = vmatprep.subr.bf16.mxu0 0
  %570 = vmatpush1.bf16.msra.mxu0 0
  %571 = vmatprep.subr.bf16.mxu0 0
  %572 = vmatpush1.bf16.msra.mxu0 0
  %573 = vmatprep.subr.bf16.mxu0 0
  %574 = vmatpush1.bf16.msra.mxu0 0
  %575 = vmatprep.subr.bf16.mxu0 0
  %576 = vmatpush1.bf16.msra.mxu0 0
  %577 = vmatprep.mubr.bf16.mxu0 0
  %578 = vmatmul.mubr.bf16.gmra.mrb[0].mxu0 %v304
  %v579 = vpop.f32.mrb[0].mxu0
  %v580 = vadd.f32 0.0, %v579
  %v581 = vpop.f32.mrb[0].mxu0
  %v582 = vadd.f32 0.0, %v581
  %v583 = vpop.f32.mrb[0].mxu0
  %v584 = vpop.f32.mrb[0].mxu0
  %585 = vdwg.mxu0
  %v586 = vadd.f32 %v308, %v539
  %v587 = vadd.f32 %v309, %v541
  %v588 = vadd.f32 %v310, %v580
  %v589 = vadd.f32 %v311, %v582
  %v590 = vmul.f32 %v586, 0.5
  %v591 = vmul.f32 %v587, 0.5
  %v592 = vmul.f32 %v588, 0.5
  %v593 = vtanh.pop %v590
  %v594 = vtanh.pop %v591
  %v595 = vtanh.pop %v592
  %v596 = vmul.f32 %v593, 0.5
  %v597 = vmul.f32 %v594, 0.5
  %v598 = vmul.f32 %v595, 0.5
  %v599 = vadd.f32 %v596, 0.5
  %v600 = vadd.f32 %v597, 0.5
  %v601 = vadd.f32 %v598, 0.5
  %v602 = vtanh.pop %v589
  %v603 = vld [vmem:[#allocation5] sm:$0xff]
  %v604 = vmul.f32 %v600, %v603
  %v605 = vmul.f32 %v599, %v602
  %v606 = vadd.f32 %v604, %v605
  %v607 = vtanh.pop %v606
  %v608 = vmul.f32 %v601, %v607
  %609 = vst [vmem:[#allocation5] sm:$0xff] %v606
  %610 = vst [vmem:[#allocation4] sm:$0xff] %v608
  %611 = vst [vmem:[#allocation3] sm:$0xff] %v608
  %v612 = vld [vmem:[#allocation4] sm:$0xff]
  %v613 = vpack.c.bf16 %v612, %v612
  %s614 = smul.u32 1, 4
  %s615 = smul.addr %s614, 8
  %s616 = scalar_lea.vmem [#allocation2], %s615
  %v617 = vld [vmem:[%s616] sm:$0xff]
  %v618 = vld [vmem:[%s616 + $0x8] sm:$0xff]
  %v619 = vld [vmem:[%s616 + $0x10] sm:$0xff]
  %v620 = vld [vmem:[%s616 + $0x18] sm:$0xff]
  %v621 = vld [vmem:[%s2] sm:$0xff]
  %v622 = vld [vmem:[%s2 + $0x8] sm:$0xff]
  %v623 = vld [vmem:[%s2 + $0x10] sm:$0xff]
  %v624 = vld [vmem:[%s2 + $0x18] sm:$0xff]
  %v625 = vld [vmem:[%s2 + $0x20] sm:$0xff]
  %v626 = vld [vmem:[%s2 + $0x28] sm:$0xff]
  %v627 = vld [vmem:[%s2 + $0x30] sm:$0xff]
  %v628 = vld [vmem:[%s2 + $0x38] sm:$0xff]
  %v629 = vld [vmem:[%s2 + $0x40] sm:$0xff]
  %v630 = vld [vmem:[%s2 + $0x48] sm:$0xff]
  %v631 = vld [vmem:[%s2 + $0x50] sm:$0xff]
  %v632 = vld [vmem:[%s2 + $0x58] sm:$0xff]
  %v633 = vld [vmem:[%s2 + $0x60] sm:$0xff]
  %v634 = vld [vmem:[%s2 + $0x68] sm:$0xff]
  %v635 = vld [vmem:[%s2 + $0x70] sm:$0xff]
  %v636 = vld [vmem:[%s2 + $0x78] sm:$0xff]
  %v637 = vld [vmem:[%s2 + $0x80] sm:$0xff]
  %v638 = vld [vmem:[%s2 + $0x88] sm:$0xff]
  %v639 = vld [vmem:[%s2 + $0x90] sm:$0xff]
  %v640 = vld [vmem:[%s2 + $0x98] sm:$0xff]
  %v641 = vld [vmem:[%s2 + $0xa0] sm:$0xff]
  %v642 = vld [vmem:[%s2 + $0xa8] sm:$0xff]
  %v643 = vld [vmem:[%s2 + $0xb0] sm:$0xff]
  %v644 = vld [vmem:[%s2 + $0xb8] sm:$0xff]
  %v645 = vld [vmem:[%s2 + $0xc0] sm:$0xff]
  %v646 = vld [vmem:[%s2 + $0xc8] sm:$0xff]
  %v647 = vld [vmem:[%s2 + $0xd0] sm:$0xff]
  %v648 = vld [vmem:[%s2 + $0xd8] sm:$0xff]
  %v649 = vld [vmem:[%s2 + $0xe0] sm:$0xff]
  %v650 = vld [vmem:[%s2 + $0xe8] sm:$0xff]
  %v651 = vld [vmem:[%s2 + $0xf0] sm:$0xff]
  %v652 = vld [vmem:[%s2 + $0xf8] sm:$0xff]
  %v685 = vunpack.c.l.b16 %v621
  %v686 = vunpack.c.h.b16 %v621
  %v687 = vunpack.c.l.b16 %v622
  %v688 = vunpack.c.h.b16 %v622
  %v689 = vunpack.c.l.b16 %v623
  %v690 = vunpack.c.h.b16 %v623
  %v691 = vunpack.c.l.b16 %v624
  %v692 = vunpack.c.h.b16 %v624
  %v693 = vunpack.c.l.b16 %v625
  %v694 = vunpack.c.h.b16 %v625
  %v695 = vunpack.c.l.b16 %v626
  %v696 = vunpack.c.h.b16 %v626
  %v697 = vunpack.c.l.b16 %v627
  %v698 = vunpack.c.h.b16 %v627
  %v699 = vunpack.c.l.b16 %v628
  %v700 = vunpack.c.h.b16 %v628
  %v701 = vunpack.c.l.b16 %v629
  %v702 = vunpack.c.h.b16 %v629
  %v703 = vunpack.c.l.b16 %v630
  %v704 = vunpack.c.h.b16 %v630
  %v705 = vunpack.c.l.b16 %v631
  %v706 = vunpack.c.h.b16 %v631
  %v707 = vunpack.c.l.b16 %v632
  %v708 = vunpack.c.h.b16 %v632
  %v709 = vunpack.c.l.b16 %v633
  %v710 = vunpack.c.h.b16 %v633
  %v711 = vunpack.c.l.b16 %v634
  %v712 = vunpack.c.h.b16 %v634
  %v713 = vunpack.c.l.b16 %v635
  %v714 = vunpack.c.h.b16 %v635
  %v715 = vunpack.c.l.b16 %v636
  %v716 = vunpack.c.h.b16 %v636
  %v717 = vunpack.c.l.b16 %v637
  %v718 = vunpack.c.h.b16 %v637
  %v719 = vunpack.c.l.b16 %v638
  %v720 = vunpack.c.h.b16 %v638
  %v721 = vunpack.c.l.b16 %v639
  %v722 = vunpack.c.h.b16 %v639
  %v723 = vunpack.c.l.b16 %v640
  %v724 = vunpack.c.h.b16 %v640
  %v725 = vunpack.c.l.b16 %v641
  %v726 = vunpack.c.h.b16 %v641
  %v727 = vunpack.c.l.b16 %v642
  %v728 = vunpack.c.h.b16 %v642
  %v729 = vunpack.c.l.b16 %v643
  %v730 = vunpack.c.h.b16 %v643
  %v731 = vunpack.c.l.b16 %v644
  %v732 = vunpack.c.h.b16 %v644
  %v733 = vunpack.c.l.b16 %v645
  %v734 = vunpack.c.h.b16 %v645
  %v735 = vunpack.c.l.b16 %v646
  %v736 = vunpack.c.h.b16 %v646
  %v737 = vunpack.c.l.b16 %v647
  %v738 = vunpack.c.h.b16 %v647
  %v739 = vunpack.c.l.b16 %v648
  %v740 = vunpack.c.h.b16 %v648
  %v741 = vunpack.c.l.b16 %v649
  %v742 = vunpack.c.h.b16 %v649
  %v743 = vunpack.c.l.b16 %v650
  %v744 = vunpack.c.h.b16 %v650
  %v745 = vunpack.c.l.b16 %v651
  %v746 = vunpack.c.h.b16 %v651
  %v747 = vunpack.c.l.b16 %v652
  %v748 = vunpack.c.h.b16 %v652
  %v749 = vpack.c.b16 %v689, %v685
  %v750 = vpack.c.b16 %v690, %v686
  %v751 = vpack.c.b16 %v691, %v687
  %v752 = vpack.c.b16 %v692, %v688
  %v753 = vpack.c.b16 %v697, %v693
  %v754 = vpack.c.b16 %v698, %v694
  %v755 = vpack.c.b16 %v699, %v695
  %v756 = vpack.c.b16 %v700, %v696
  %v757 = vpack.c.b16 %v705, %v701
  %v758 = vpack.c.b16 %v706, %v702
  %v759 = vpack.c.b16 %v707, %v703
  %v760 = vpack.c.b16 %v708, %v704
  %v761 = vpack.c.b16 %v713, %v709
  %v762 = vpack.c.b16 %v714, %v710
  %v763 = vpack.c.b16 %v715, %v711
  %v764 = vpack.c.b16 %v716, %v712
  %v765 = vpack.c.b16 %v721, %v717
  %v766 = vpack.c.b16 %v722, %v718
  %v767 = vpack.c.b16 %v723, %v719
  %v768 = vpack.c.b16 %v724, %v720
  %v769 = vpack.c.b16 %v729, %v725
  %v770 = vpack.c.b16 %v730, %v726
  %v771 = vpack.c.b16 %v731, %v727
  %v772 = vpack.c.b16 %v732, %v728
  %v773 = vpack.c.b16 %v737, %v733
  %v774 = vpack.c.b16 %v738, %v734
  %v775 = vpack.c.b16 %v739, %v735
  %v776 = vpack.c.b16 %v740, %v736
  %v777 = vpack.c.b16 %v745, %v741
  %v778 = vpack.c.b16 %v746, %v742
  %v779 = vpack.c.b16 %v747, %v743
  %v780 = vpack.c.b16 %v748, %v744
  %813 = vmatprep.subr.bf16.mxu0 %v750
  %814 = vmatpush1.bf16.msra.mxu0 %v749
  %815 = vmatprep.subr.bf16.mxu0 %v754
  %816 = vmatpush1.bf16.msra.mxu0 %v753
  %817 = vmatprep.subr.bf16.mxu0 %v758
  %818 = vmatpush1.bf16.msra.mxu0 %v757
  %819 = vmatprep.subr.bf16.mxu0 %v762
  %820 = vmatpush1.bf16.msra.mxu0 %v761
  %821 = vmatprep.subr.bf16.mxu0 %v766
  %822 = vmatpush1.bf16.msra.mxu0 %v765
  %823 = vmatprep.subr.bf16.mxu0 %v770
  %824 = vmatpush1.bf16.msra.mxu0 %v769
  %825 = vmatprep.subr.bf16.mxu0 %v774
  %826 = vmatpush1.bf16.msra.mxu0 %v773
  %827 = vmatprep.subr.bf16.mxu0 %v778
  %828 = vmatpush1.bf16.msra.mxu0 %v777
  %829 = vmatprep.subr.bf16.mxu0 0
  %830 = vmatpush1.bf16.msra.mxu0 0
  %831 = vmatprep.subr.bf16.mxu0 0
  %832 = vmatpush1.bf16.msra.mxu0 0
  %833 = vmatprep.subr.bf16.mxu0 0
  %834 = vmatpush1.bf16.msra.mxu0 0
  %835 = vmatprep.subr.bf16.mxu0 0
  %836 = vmatpush1.bf16.msra.mxu0 0
  %837 = vmatprep.subr.bf16.mxu0 0
  %838 = vmatpush1.bf16.msra.mxu0 0
  %839 = vmatprep.subr.bf16.mxu0 0
  %840 = vmatpush1.bf16.msra.mxu0 0
  %841 = vmatprep.subr.bf16.mxu0 0
  %842 = vmatpush1.bf16.msra.mxu0 0
  %843 = vmatprep.subr.bf16.mxu0 0
  %844 = vmatpush1.bf16.msra.mxu0 0
  %845 = vmatprep.mubr.bf16.mxu0 0
  %846 = vmatmul.mubr.bf16.gmra.mrb[0].mxu0 %v613
  %v847 = vpop.f32.mrb[0].mxu0
  %v848 = vadd.f32 0.0, %v847
  %v849 = vpop.f32.mrb[0].mxu0
  %v850 = vadd.f32 0.0, %v849
  %v851 = vpop.f32.mrb[0].mxu0
  %v852 = vpop.f32.mrb[0].mxu0
  %853 = vdwg.mxu0
  %854 = vmatprep.subr.bf16.mxu0 %v752
  %855 = vmatpush1.bf16.msra.mxu0 %v751
  %856 = vmatprep.subr.bf16.mxu0 %v756
  %857 = vmatpush1.bf16.msra.mxu0 %v755
  %858 = vmatprep.subr.bf16.mxu0 %v760
  %859 = vmatpush1.bf16.msra.mxu0 %v759
  %860 = vmatprep.subr.bf16.mxu0 %v764
  %861 = vmatpush1.bf16.msra.mxu0 %v763
  %862 = vmatprep.subr.bf16.mxu0 %v768
  %863 = vmatpush1.bf16.msra.mxu0 %v767
  %864 = vmatprep.subr.bf16.mxu0 %v772
  %865 = vmatpush1.bf16.msra.mxu0 %v771
  %866 = vmatprep.subr.bf16.mxu0 %v776
  %867 = vmatpush1.bf16.msra.mxu0 %v775
  %868 = vmatprep.subr.bf16.mxu0 %v780
  %869 = vmatpush1.bf16.msra.mxu0 %v779
  %870 = vmatprep.subr.bf16.mxu0 0
  %871 = vmatpush1.bf16.msra.mxu0 0
  %872 = vmatprep.subr.bf16.mxu0 0
  %873 = vmatpush1.bf16.msra.mxu0 0
  %874 = vmatprep.subr.bf16.mxu0 0
  %875 = vmatpush1.bf16.msra.mxu0 0
  %876 = vmatprep.subr.bf16.mxu0 0
  %877 = vmatpush1.bf16.msra.mxu0 0
  %878 = vmatprep.subr.bf16.mxu0 0
  %879 = vmatpush1.bf16.msra.mxu0 0
  %880 = vmatprep.subr.bf16.mxu0 0
  %881 = vmatpush1.bf16.msra.mxu0 0
  %882 = vmatprep.subr.bf16.mxu0 0
  %883 = vmatpush1.bf16.msra.mxu0 0
  %884 = vmatprep.subr.bf16.mxu0 0
  %885 = vmatpush1.bf16.msra.mxu0 0
  %886 = vmatprep.mubr.bf16.mxu0 0
  %887 = vmatmul.mubr.bf16.gmra.mrb[0].mxu0 %v613
  %v888 = vpop.f32.mrb[0].mxu0
  %v889 = vadd.f32 0.0, %v888
  %v890 = vpop.f32.mrb[0].mxu0
  %v891 = vadd.f32 0.0, %v890
  %v892 = vpop.f32.mrb[0].mxu0
  %v893 = vpop.f32.mrb[0].mxu0
  %894 = vdwg.mxu0
  %v895 = vadd.f32 %v617, %v848
  %v896 = vadd.f32 %v618, %v850
  %v897 = vadd.f32 %v619, %v889
  %v898 = vadd.f32 %v620, %v891
  %v899 = vmul.f32 %v895, 0.5
  %v900 = vmul.f32 %v896, 0.5
  %v901 = vmul.f32 %v897, 0.5
  %v902 = vtanh.pop %v899
  %v903 = vtanh.pop %v900
  %v904 = vtanh.pop %v901
  %v905 = vmul.f32 %v902, 0.5
  %v906 = vmul.f32 %v903, 0.5
  %v907 = vmul.f32 %v904, 0.5
  %v908 = vadd.f32 %v905, 0.5
  %v909 = vadd.f32 %v906, 0.5
  %v910 = vadd.f32 %v907, 0.5
  %v911 = vtanh.pop %v898
  %v912 = vld [vmem:[#allocation5] sm:$0xff]
  %v913 = vmul.f32 %v909, %v912
  %v914 = vmul.f32 %v908, %v911
  %v915 = vadd.f32 %v913, %v914
  %v916 = vtanh.pop %v915
  %v917 = vmul.f32 %v910, %v916
  %918 = vst [vmem:[#allocation5] sm:$0xff] %v915
  %919 = vst [vmem:[#allocation4] sm:$0xff] %v917
  %s920 = scalar_lea.vmem [#allocation3], 8
  %921 = vst [vmem:[%s920] sm:$0xff] %v917
  %v922 = vld [vmem:[#allocation4] sm:$0xff]
  %v923 = vpack.c.bf16 %v922, %v922
  %s924 = smul.u32 2, 4
  %s925 = smul.addr %s924, 8
  %s926 = scalar_lea.vmem [#allocation2], %s925
  %v927 = vld [vmem:[%s926] sm:$0xff]
  %v928 = vld [vmem:[%s926 + $0x8] sm:$0xff]
  %v929 = vld [vmem:[%s926 + $0x10] sm:$0xff]
  %v930 = vld [vmem:[%s926 + $0x18] sm:$0xff]
  %v931 = vld [vmem:[%s2] sm:$0xff]
  %v932 = vld [vmem:[%s2 + $0x8] sm:$0xff]
  %v933 = vld [vmem:[%s2 + $0x10] sm:$0xff]
  %v934 = vld [vmem:[%s2 + $0x18] sm:$0xff]
  %v935 = vld [vmem:[%s2 + $0x20] sm:$0xff]
  %v936 = vld [vmem:[%s2 + $0x28] sm:$0xff]
  %v937 = vld [vmem:[%s2 + $0x30] sm:$0xff]
  %v938 = vld [vmem:[%s2 + $0x38] sm:$0xff]
  %v939 = vld [vmem:[%s2 + $0x40] sm:$0xff]
  %v940 = vld [vmem:[%s2 + $0x48] sm:$0xff]
  %v941 = vld [vmem:[%s2 + $0x50] sm:$0xff]
  %v942 = vld [vmem:[%s2 + $0x58] sm:$0xff]
  %v943 = vld [vmem:[%s2 + $0x60] sm:$0xff]
  %v944 = vld [vmem:[%s2 + $0x68] sm:$0xff]
  %v945 = vld [vmem:[%s2 + $0x70] sm:$0xff]
  %v946 = vld [vmem:[%s2 + $0x78] sm:$0xff]
  %v947 = vld [vmem:[%s2 + $0x80] sm:$0xff]
  %v948 = vld [vmem:[%s2 + $0x88] sm:$0xff]
  %v949 = vld [vmem:[%s2 + $0x90] sm:$0xff]
  %v950 = vld [vmem:[%s2 + $0x98] sm:$0xff]
  %v951 = vld [vmem:[%s2 + $0xa0] sm:$0xff]
  %v952 = vld [vmem:[%s2 + $0xa8] sm:$0xff]
  %v953 = vld [vmem:[%s2 + $0xb0] sm:$0xff]
  %v954 = vld [vmem:[%s2 + $0xb8] sm:$0xff]
  %v955 = vld [vmem:[%s2 + $0xc0] sm:$0xff]
  %v956 = vld [vmem:[%s2 + $0xc8] sm:$0xff]
  %v957 = vld [vmem:[%s2 + $0xd0] sm:$0xff]
  %v958 = vld [vmem:[%s2 + $0xd8] sm:$0xff]
  %v959 = vld [vmem:[%s2 + $0xe0] sm:$0xff]
  %v960 = vld [vmem:[%s2 + $0xe8] sm:$0xff]
  %v961 = vld [vmem:[%s2 + $0xf0] sm:$0xff]
  %v962 = vld [vmem:[%s2 + $0xf8] sm:$0xff]
  %v995 = vunpack.c.l.b16 %v931
  %v996 = vunpack.c.h.b16 %v931
  %v997 = vunpack.c.l.b16 %v932
  %v998 = vunpack.c.h.b16 %v932
  %v999 = vunpack.c.l.b16 %v933
  %v1000 = vunpack.c.h.b16 %v933
  %v1001 = vunpack.c.l.b16 %v934
  %v1002 = vunpack.c.h.b16 %v934
  %v1003 = vunpack.c.l.b16 %v935
  %v1004 = vunpack.c.h.b16 %v935
  %v1005 = vunpack.c.l.b16 %v936
  %v1006 = vunpack.c.h.b16 %v936
  %v1007 = vunpack.c.l.b16 %v937
  %v1008 = vunpack.c.h.b16 %v937
  %v1009 = vunpack.c.l.b16 %v938
  %v1010 = vunpack.c.h.b16 %v938
  %v1011 = vunpack.c.l.b16 %v939
  %v1012 = vunpack.c.h.b16 %v939
  %v1013 = vunpack.c.l.b16 %v940
  %v1014 = vunpack.c.h.b16 %v940
  %v1015 = vunpack.c.l.b16 %v941
  %v1016 = vunpack.c.h.b16 %v941
  %v1017 = vunpack.c.l.b16 %v942
  %v1018 = vunpack.c.h.b16 %v942
  %v1019 = vunpack.c.l.b16 %v943
  %v1020 = vunpack.c.h.b16 %v943
  %v1021 = vunpack.c.l.b16 %v944
  %v1022 = vunpack.c.h.b16 %v944
  %v1023 = vunpack.c.l.b16 %v945
  %v1024 = vunpack.c.h.b16 %v945
  %v1025 = vunpack.c.l.b16 %v946
  %v1026 = vunpack.c.h.b16 %v946
  %v1027 = vunpack.c.l.b16 %v947
  %v1028 = vunpack.c.h.b16 %v947
  %v1029 = vunpack.c.l.b16 %v948
  %v1030 = vunpack.c.h.b16 %v948
  %v1031 = vunpack.c.l.b16 %v949
  %v1032 = vunpack.c.h.b16 %v949
  %v1033 = vunpack.c.l.b16 %v950
  %v1034 = vunpack.c.h.b16 %v950
  %v1035 = vunpack.c.l.b16 %v951
  %v1036 = vunpack.c.h.b16 %v951
  %v1037 = vunpack.c.l.b16 %v952
  %v1038 = vunpack.c.h.b16 %v952
  %v1039 = vunpack.c.l.b16 %v953
  %v1040 = vunpack.c.h.b16 %v953
  %v1041 = vunpack.c.l.b16 %v954
  %v1042 = vunpack.c.h.b16 %v954
  %v1043 = vunpack.c.l.b16 %v955
  %v1044 = vunpack.c.h.b16 %v955
  %v1045 = vunpack.c.l.b16 %v956
  %v1046 = vunpack.c.h.b16 %v956
  %v1047 = vunpack.c.l.b16 %v957
  %v1048 = vunpack.c.h.b16 %v957
  %v1049 = vunpack.c.l.b16 %v958
  %v1050 = vunpack.c.h.b16 %v958
  %v1051 = vunpack.c.l.b16 %v959
  %v1052 = vunpack.c.h.b16 %v959
  %v1053 = vunpack.c.l.b16 %v960
  %v1054 = vunpack.c.h.b16 %v960
  %v1055 = vunpack.c.l.b16 %v961
  %v1056 = vunpack.c.h.b16 %v961
  %v1057 = vunpack.c.l.b16 %v962
  %v1058 = vunpack.c.h.b16 %v962
  %v1059 = vpack.c.b16 %v999, %v995
  %v1060 = vpack.c.b16 %v1000, %v996
  %v1061 = vpack.c.b16 %v1001, %v997
  %v1062 = vpack.c.b16 %v1002, %v998
  %v1063 = vpack.c.b16 %v1007, %v1003
  %v1064 = vpack.c.b16 %v1008, %v1004
  %v1065 = vpack.c.b16 %v1009, %v1005
  %v1066 = vpack.c.b16 %v1010, %v1006
  %v1067 = vpack.c.b16 %v1015, %v1011
  %v1068 = vpack.c.b16 %v1016, %v1012
  %v1069 = vpack.c.b16 %v1017, %v1013
  %v1070 = vpack.c.b16 %v1018, %v1014
  %v1071 = vpack.c.b16 %v1023, %v1019
  %v1072 = vpack.c.b16 %v1024, %v1020
  %v1073 = vpack.c.b16 %v1025, %v1021
  %v1074 = vpack.c.b16 %v1026, %v1022
  %v1075 = vpack.c.b16 %v1031, %v1027
  %v1076 = vpack.c.b16 %v1032, %v1028
  %v1077 = vpack.c.b16 %v1033, %v1029
  %v1078 = vpack.c.b16 %v1034, %v1030
  %v1079 = vpack.c.b16 %v1039, %v1035
  %v1080 = vpack.c.b16 %v1040, %v1036
  %v1081 = vpack.c.b16 %v1041, %v1037
  %v1082 = vpack.c.b16 %v1042, %v1038
  %v1083 = vpack.c.b16 %v1047, %v1043
  %v1084 = vpack.c.b16 %v1048, %v1044
  %v1085 = vpack.c.b16 %v1049, %v1045
  %v1086 = vpack.c.b16 %v1050, %v1046
  %v1087 = vpack.c.b16 %v1055, %v1051
  %v1088 = vpack.c.b16 %v1056, %v1052
  %v1089 = vpack.c.b16 %v1057, %v1053
  %v1090 = vpack.c.b16 %v1058, %v1054
  %1123 = vmatprep.subr.bf16.mxu0 %v1060
  %1124 = vmatpush1.bf16.msra.mxu0 %v1059
  %1125 = vmatprep.subr.bf16.mxu0 %v1064
  %1126 = vmatpush1.bf16.msra.mxu0 %v1063
  %1127 = vmatprep.subr.bf16.mxu0 %v1068
  %1128 = vmatpush1.bf16.msra.mxu0 %v1067
  %1129 = vmatprep.subr.bf16.mxu0 %v1072
  %1130 = vmatpush1.bf16.msra.mxu0 %v1071
  %1131 = vmatprep.subr.bf16.mxu0 %v1076
  %1132 = vmatpush1.bf16.msra.mxu0 %v1075
  %1133 = vmatprep.subr.bf16.mxu0 %v1080
  %1134 = vmatpush1.bf16.msra.mxu0 %v1079
  %1135 = vmatprep.subr.bf16.mxu0 %v1084
  %1136 = vmatpush1.bf16.msra.mxu0 %v1083
  %1137 = vmatprep.subr.bf16.mxu0 %v1088
  %1138 = vmatpush1.bf16.msra.mxu0 %v1087
  %1139 = vmatprep.subr.bf16.mxu0 0
  %1140 = vmatpush1.bf16.msra.mxu0 0
  %1141 = vmatprep.subr.bf16.mxu0 0
  %1142 = vmatpush1.bf16.msra.mxu0 0
  %1143 = vmatprep.subr.bf16.mxu0 0
  %1144 = vmatpush1.bf16.msra.mxu0 0
  %1145 = vmatprep.subr.bf16.mxu0 0
  %1146 = vmatpush1.bf16.msra.mxu0 0
  %1147 = vmatprep.subr.bf16.mxu0 0
  %1148 = vmatpush1.bf16.msra.mxu0 0
  %1149 = vmatprep.subr.bf16.mxu0 0
  %1150 = vmatpush1.bf16.msra.mxu0 0
  %1151 = vmatprep.subr.bf16.mxu0 0
  %1152 = vmatpush1.bf16.msra.mxu0 0
  %1153 = vmatprep.subr.bf16.mxu0 0
  %1154 = vmatpush1.bf16.msra.mxu0 0
  %1155 = vmatprep.mubr.bf16.mxu0 0
  %1156 = vmatmul.mubr.bf16.gmra.mrb[0].mxu0 %v923
  %v1157 = vpop.f32.mrb[0].mxu0
  %v1158 = vadd.f32 0.0, %v1157
  %v1159 = vpop.f32.mrb[0].mxu0
  %v1160 = vadd.f32 0.0, %v1159
  %v1161 = vpop.f32.mrb[0].mxu0
  %v1162 = vpop.f32.mrb[0].mxu0
  %1163 = vdwg.mxu0
  %1164 = vmatprep.subr.bf16.mxu0 %v1062
  %1165 = vmatpush1.bf16.msra.mxu0 %v1061
  %1166 = vmatprep.subr.bf16.mxu0 %v1066
  %1167 = vmatpush1.bf16.msra.mxu0 %v1065
  %1168 = vmatprep.subr.bf16.mxu0 %v1070
  %1169 = vmatpush1.bf16.msra.mxu0 %v1069
  %1170 = vmatprep.subr.bf16.mxu0 %v1074
  %1171 = vmatpush1.bf16.msra.mxu0 %v1073
  %1172 = vmatprep.subr.bf16.mxu0 %v1078
  %1173 = vmatpush1.bf16.msra.mxu0 %v1077
  %1174 = vmatprep.subr.bf16.mxu0 %v1082
  %1175 = vmatpush1.bf16.msra.mxu0 %v1081
  %1176 = vmatprep.subr.bf16.mxu0 %v1086
  %1177 = vmatpush1.bf16.msra.mxu0 %v1085
  %1178 = vmatprep.subr.bf16.mxu0 %v1090
  %1179 = vmatpush1.bf16.msra.mxu0 %v1089
  %1180 = vmatprep.subr.bf16.mxu0 0
  %1181 = vmatpush1.bf16.msra.mxu0 0
  %1182 = vmatprep.subr.bf16.mxu0 0
  %1183 = vmatpush1.bf16.msra.mxu0 0
  %1184 = vmatprep.subr.bf16.mxu0 0
  %1185 = vmatpush1.bf16.msra.mxu0 0
  %1186 = vmatprep.subr.bf16.mxu0 0
  %1187 = vmatpush1.bf16.msra.mxu0 0
  %1188 = vmatprep.subr.bf16.mxu0 0
  %1189 = vmatpush1.bf16.msra.mxu0 0
  %1190 = vmatprep.subr.bf16.mxu0 0
  %1191 = vmatpush1.bf16.msra.mxu0 0
  %1192 = vmatprep.subr.bf16.mxu0 0
  %1193 = vmatpush1.bf16.msra.mxu0 0
  %1194 = vmatprep.subr.bf16.mxu0 0
  %1195 = vmatpush1.bf16.msra.mxu0 0
  %1196 = vmatprep.mubr.bf16.mxu0 0
  %1197 = vmatmul.mubr.bf16.gmra.mrb[0].mxu0 %v923
  %v1198 = vpop.f32.mrb[0].mxu0
  %v1199 = vadd.f32 0.0, %v1198
  %v1200 = vpop.f32.mrb[0].mxu0
  %v1201 = vadd.f32 0.0, %v1200
  %v1202 = vpop.f32.mrb[0].mxu0
  %v1203 = vpop.f32.mrb[0].mxu0
  %1204 = vdwg.mxu0
  %v1205 = vadd.f32 %v927, %v1158
  %v1206 = vadd.f32 %v928, %v1160
  %v1207 = vadd.f32 %v929, %v1199
  %v1208 = vadd.f32 %v930, %v1201
  %v1209 = vmul.f32 %v1205, 0.5
  %v1210 = vmul.f32 %v1206, 0.5
  %v1211 = vmul.f32 %v1207, 0.5
  %v1212 = vtanh.pop %v1209
  %v1213 = vtanh.pop %v1210
  %v1214 = vtanh.pop %v1211
  %v1215 = vmul.f32 %v1212, 0.5
  %v1216 = vmul.f32 %v1213, 0.5
  %v1217 = vmul.f32 %v1214, 0.5
  %v1218 = vadd.f32 %v1215, 0.5
  %v1219 = vadd.f32 %v1216, 0.5
  %v1220 = vadd.f32 %v1217, 0.5
  %v1221 = vtanh.pop %v1208
  %v1222 = vld [vmem:[#allocation5] sm:$0xff]
  %v1223 = vmul.f32 %v1219, %v1222
  %v1224 = vmul.f32 %v1218, %v1221
  %v1225 = vadd.f32 %v1223, %v1224
  %v1226 = vtanh.pop %v1225
  %v1227 = vmul.f32 %v1220, %v1226
  %1228 = vst [vmem:[#allocation5] sm:$0xff] %v1225
  %1229 = vst [vmem:[#allocation4] sm:$0xff] %v1227
  %s1230 = scalar_lea.vmem [#allocation3], 16
  %1231 = vst [vmem:[%s1230] sm:$0xff] %v1227
  %v1232 = vld [vmem:[#allocation4] sm:$0xff]
  %v1233 = vpack.c.bf16 %v1232, %v1232
  %s1234 = smul.u32 3, 4
  %s1235 = smul.addr %s1234, 8
  %s1236 = scalar_lea.vmem [#allocation2], %s1235
  %v1237 = vld [vmem:[%s1236] sm:$0xff]
  %v1238 = vld [vmem:[%s1236 + $0x8] sm:$0xff]
  %v1239 = vld [vmem:[%s1236 + $0x10] sm:$0xff]
  %v1240 = vld [vmem:[%s1236 + $0x18] sm:$0xff]
  %v1241 = vld [vmem:[%s2] sm:$0xff]
  %v1242 = vld [vmem:[%s2 + $0x8] sm:$0xff]
  %v1243 = vld [vmem:[%s2 + $0x10] sm:$0xff]
  %v1244 = vld [vmem:[%s2 + $0x18] sm:$0xff]
  %v1245 = vld [vmem:[%s2 + $0x20] sm:$0xff]
  %v1246 = vld [vmem:[%s2 + $0x28] sm:$0xff]
  %v1247 = vld [vmem:[%s2 + $0x30] sm:$0xff]
  %v1248 = vld [vmem:[%s2 + $0x38] sm:$0xff]
  %v1249 = vld [vmem:[%s2 + $0x40] sm:$0xff]
  %v1250 = vld [vmem:[%s2 + $0x48] sm:$0xff]
  %v1251 = vld [vmem:[%s2 + $0x50] sm:$0xff]
  %v1252 = vld [vmem:[%s2 + $0x58] sm:$0xff]
  %v1253 = vld [vmem:[%s2 + $0x60] sm:$0xff]
  %v1254 = vld [vmem:[%s2 + $0x68] sm:$0xff]
  %v1255 = vld [vmem:[%s2 + $0x70] sm:$0xff]
  %v1256 = vld [vmem:[%s2 + $0x78] sm:$0xff]
  %v1257 = vld [vmem:[%s2 + $0x80] sm:$0xff]
  %v1258 = vld [vmem:[%s2 + $0x88] sm:$0xff]
  %v1259 = vld [vmem:[%s2 + $0x90] sm:$0xff]
  %v1260 = vld [vmem:[%s2 + $0x98] sm:$0xff]
  %v1261 = vld [vmem:[%s2 + $0xa0] sm:$0xff]
  %v1262 = vld [vmem:[%s2 + $0xa8] sm:$0xff]
  %v1263 = vld [vmem:[%s2 + $0xb0] sm:$0xff]
  %v1264 = vld [vmem:[%s2 + $0xb8] sm:$0xff]
  %v1265 = vld [vmem:[%s2 + $0xc0] sm:$0xff]
  %v1266 = vld [vmem:[%s2 + $0xc8] sm:$0xff]
  %v1267 = vld [vmem:[%s2 + $0xd0] sm:$0xff]
  %v1268 = vld [vmem:[%s2 + $0xd8] sm:$0xff]
  %v1269 = vld [vmem:[%s2 + $0xe0] sm:$0xff]
  %v1270 = vld [vmem:[%s2 + $0xe8] sm:$0xff]
  %v1271 = vld [vmem:[%s2 + $0xf0] sm:$0xff]
  %v1272 = vld [vmem:[%s2 + $0xf8] sm:$0xff]
  %v1305 = vunpack.c.l.b16 %v1241
  %v1306 = vunpack.c.h.b16 %v1241
  %v1307 = vunpack.c.l.b16 %v1242
  %v1308 = vunpack.c.h.b16 %v1242
  %v1309 = vunpack.c.l.b16 %v1243
  %v1310 = vunpack.c.h.b16 %v1243
  %v1311 = vunpack.c.l.b16 %v1244
  %v1312 = vunpack.c.h.b16 %v1244
  %v1313 = vunpack.c.l.b16 %v1245
  %v1314 = vunpack.c.h.b16 %v1245
  %v1315 = vunpack.c.l.b16 %v1246
  %v1316 = vunpack.c.h.b16 %v1246
  %v1317 = vunpack.c.l.b16 %v1247
  %v1318 = vunpack.c.h.b16 %v1247
  %v1319 = vunpack.c.l.b16 %v1248
  %v1320 = vunpack.c.h.b16 %v1248
  %v1321 = vunpack.c.l.b16 %v1249
  %v1322 = vunpack.c.h.b16 %v1249
  %v1323 = vunpack.c.l.b16 %v1250
  %v1324 = vunpack.c.h.b16 %v1250
  %v1325 = vunpack.c.l.b16 %v1251
  %v1326 = vunpack.c.h.b16 %v1251
  %v1327 = vunpack.c.l.b16 %v1252
  %v1328 = vunpack.c.h.b16 %v1252
  %v1329 = vunpack.c.l.b16 %v1253
  %v1330 = vunpack.c.h.b16 %v1253
  %v1331 = vunpack.c.l.b16 %v1254
  %v1332 = vunpack.c.h.b16 %v1254
  %v1333 = vunpack.c.l.b16 %v1255
  %v1334 = vunpack.c.h.b16 %v1255
  %v1335 = vunpack.c.l.b16 %v1256
  %v1336 = vunpack.c.h.b16 %v1256
  %v1337 = vunpack.c.l.b16 %v1257
  %v1338 = vunpack.c.h.b16 %v1257
  %v1339 = vunpack.c.l.b16 %v1258
  %v1340 = vunpack.c.h.b16 %v1258
  %v1341 = vunpack.c.l.b16 %v1259
  %v1342 = vunpack.c.h.b16 %v1259
  %v1343 = vunpack.c.l.b16 %v1260
  %v1344 = vunpack.c.h.b16 %v1260
  %v1345 = vunpack.c.l.b16 %v1261
  %v1346 = vunpack.c.h.b16 %v1261
  %v1347 = vunpack.c.l.b16 %v1262
  %v1348 = vunpack.c.h.b16 %v1262
  %v1349 = vunpack.c.l.b16 %v1263
  %v1350 = vunpack.c.h.b16 %v1263
  %v1351 = vunpack.c.l.b16 %v1264
  %v1352 = vunpack.c.h.b16 %v1264
  %v1353 = vunpack.c.l.b16 %v1265
  %v1354 = vunpack.c.h.b16 %v1265
  %v1355 = vunpack.c.l.b16 %v1266
  %v1356 = vunpack.c.h.b16 %v1266
  %v1357 = vunpack.c.l.b16 %v1267
  %v1358 = vunpack.c.h.b16 %v1267
  %v1359 = vunpack.c.l.b16 %v1268
  %v1360 = vunpack.c.h.b16 %v1268
  %v1361 = vunpack.c.l.b16 %v1269
  %v1362 = vunpack.c.h.b16 %v1269
  %v1363 = vunpack.c.l.b16 %v1270
  %v1364 = vunpack.c.h.b16 %v1270
  %v1365 = vunpack.c.l.b16 %v1271
  %v1366 = vunpack.c.h.b16 %v1271
  %v1367 = vunpack.c.l.b16 %v1272
  %v1368 = vunpack.c.h.b16 %v1272
  %v1369 = vpack.c.b16 %v1309, %v1305
  %v1370 = vpack.c.b16 %v1310, %v1306
  %v1371 = vpack.c.b16 %v1311, %v1307
  %v1372 = vpack.c.b16 %v1312, %v1308
  %v1373 = vpack.c.b16 %v1317, %v1313
  %v1374 = vpack.c.b16 %v1318, %v1314
  %v1375 = vpack.c.b16 %v1319, %v1315
  %v1376 = vpack.c.b16 %v1320, %v1316
  %v1377 = vpack.c.b16 %v1325, %v1321
  %v1378 = vpack.c.b16 %v1326, %v1322
  %v1379 = vpack.c.b16 %v1327, %v1323
  %v1380 = vpack.c.b16 %v1328, %v1324
  %v1381 = vpack.c.b16 %v1333, %v1329
  %v1382 = vpack.c.b16 %v1334, %v1330
  %v1383 = vpack.c.b16 %v1335, %v1331
  %v1384 = vpack.c.b16 %v1336, %v1332
  %v1385 = vpack.c.b16 %v1341, %v1337
  %v1386 = vpack.c.b16 %v1342, %v1338
  %v1387 = vpack.c.b16 %v1343, %v1339
  %v1388 = vpack.c.b16 %v1344, %v1340
  %v1389 = vpack.c.b16 %v1349, %v1345
  %v1390 = vpack.c.b16 %v1350, %v1346
  %v1391 = vpack.c.b16 %v1351, %v1347
  %v1392 = vpack.c.b16 %v1352, %v1348
  %v1393 = vpack.c.b16 %v1357, %v1353
  %v1394 = vpack.c.b16 %v1358, %v1354
  %v1395 = vpack.c.b16 %v1359, %v1355
  %v1396 = vpack.c.b16 %v1360, %v1356
  %v1397 = vpack.c.b16 %v1365, %v1361
  %v1398 = vpack.c.b16 %v1366, %v1362
  %v1399 = vpack.c.b16 %v1367, %v1363
  %v1400 = vpack.c.b16 %v1368, %v1364
  %1433 = vmatprep.subr.bf16.mxu0 %v1370
  %1434 = vmatpush1.bf16.msra.mxu0 %v1369
  %1435 = vmatprep.subr.bf16.mxu0 %v1374
  %1436 = vmatpush1.bf16.msra.mxu0 %v1373
  %1437 = vmatprep.subr.bf16.mxu0 %v1378
  %1438 = vmatpush1.bf16.msra.mxu0 %v1377
  %1439 = vmatprep.subr.bf16.mxu0 %v1382
  %1440 = vmatpush1.bf16.msra.mxu0 %v1381
  %1441 = vmatprep.subr.bf16.mxu0 %v1386
  %1442 = vmatpush1.bf16.msra.mxu0 %v1385
  %1443 = vmatprep.subr.bf16.mxu0 %v1390
  %1444 = vmatpush1.bf16.msra.mxu0 %v1389
  %1445 = vmatprep.subr.bf16.mxu0 %v1394
  %1446 = vmatpush1.bf16.msra.mxu0 %v1393
  %1447 = vmatprep.subr.bf16.mxu0 %v1398
  %1448 = vmatpush1.bf16.msra.mxu0 %v1397
  %1449 = vmatprep.subr.bf16.mxu0 0
  %1450 = vmatpush1.bf16.msra.mxu0 0
  %1451 = vmatprep.subr.bf16.mxu0 0
  %1452 = vmatpush1.bf16.msra.mxu0 0
  %1453 = vmatprep.subr.bf16.mxu0 0
  %1454 = vmatpush1.bf16.msra.mxu0 0
  %1455 = vmatprep.subr.bf16.mxu0 0
  %1456 = vmatpush1.bf16.msra.mxu0 0
  %1457 = vmatprep.subr.bf16.mxu0 0
  %1458 = vmatpush1.bf16.msra.mxu0 0
  %1459 = vmatprep.subr.bf16.mxu0 0
  %1460 = vmatpush1.bf16.msra.mxu0 0
  %1461 = vmatprep.subr.bf16.mxu0 0
  %1462 = vmatpush1.bf16.msra.mxu0 0
  %1463 = vmatprep.subr.bf16.mxu0 0
  %1464 = vmatpush1.bf16.msra.mxu0 0
  %1465 = vmatprep.mubr.bf16.mxu0 0
  %1466 = vmatmul.mubr.bf16.gmra.mrb[0].mxu0 %v1233
  %v1467 = vpop.f32.mrb[0].mxu0
  %v1468 = vadd.f32 0.0, %v1467
  %v1469 = vpop.f32.mrb[0].mxu0
  %v1470 = vadd.f32 0.0, %v1469
  %v1471 = vpop.f32.mrb[0].mxu0
  %v1472 = vpop.f32.mrb[0].mxu0
  %1473 = vdwg.mxu0
  %1474 = vmatprep.subr.bf16.mxu0 %v1372
  %1475 = vmatpush1.bf16.msra.mxu0 %v1371
  %1476 = vmatprep.subr.bf16.mxu0 %v1376
  %1477 = vmatpush1.bf16.msra.mxu0 %v1375
  %1478 = vmatprep.subr.bf16.mxu0 %v1380
  %1479 = vmatpush1.bf16.msra.mxu0 %v1379
  %1480 = vmatprep.subr.bf16.mxu0 %v1384
  %1481 = vmatpush1.bf16.msra.mxu0 %v1383
  %1482 = vmatprep.subr.bf16.mxu0 %v1388
  %1483 = vmatpush1.bf16.msra.mxu0 %v1387
  %1484 = vmatprep.subr.bf16.mxu0 %v1392
  %1485 = vmatpush1.bf16.msra.mxu0 %v1391
  %1486 = vmatprep.subr.bf16.mxu0 %v1396
  %1487 = vmatpush1.bf16.msra.mxu0 %v1395
  %1488 = vmatprep.subr.bf16.mxu0 %v1400
  %1489 = vmatpush1.bf16.msra.mxu0 %v1399
  %1490 = vmatprep.subr.bf16.mxu0 0
  %1491 = vmatpush1.bf16.msra.mxu0 0
  %1492 = vmatprep.subr.bf16.mxu0 0
  %1493 = vmatpush1.bf16.msra.mxu0 0
  %1494 = vmatprep.subr.bf16.mxu0 0
  %1495 = vmatpush1.bf16.msra.mxu0 0
  %1496 = vmatprep.subr.bf16.mxu0 0
  %1497 = vmatpush1.bf16.msra.mxu0 0
  %1498 = vmatprep.subr.bf16.mxu0 0
  %1499 = vmatpush1.bf16.msra.mxu0 0
  %1500 = vmatprep.subr.bf16.mxu0 0
  %1501 = vmatpush1.bf16.msra.mxu0 0
  %1502 = vmatprep.subr.bf16.mxu0 0
  %1503 = vmatpush1.bf16.msra.mxu0 0
  %1504 = vmatprep.subr.bf16.mxu0 0
  %1505 = vmatpush1.bf16.msra.mxu0 0
  %1506 = vmatprep.mubr.bf16.mxu0 0
  %1507 = vmatmul.mubr.bf16.gmra.mrb[0].mxu0 %v1233
  %v1508 = vpop.f32.mrb[0].mxu0
  %v1509 = vadd.f32 0.0, %v1508
  %v1510 = vpop.f32.mrb[0].mxu0
  %v1511 = vadd.f32 0.0, %v1510
  %v1512 = vpop.f32.mrb[0].mxu0
  %v1513 = vpop.f32.mrb[0].mxu0
  %1514 = vdwg.mxu0
  %v1515 = vadd.f32 %v1237, %v1468
  %v1516 = vadd.f32 %v1238, %v1470
  %v1517 = vadd.f32 %v1239, %v1509
  %v1518 = vadd.f32 %v1240, %v1511
  %v1519 = vmul.f32 %v1515, 0.5
  %v1520 = vmul.f32 %v1516, 0.5
  %v1521 = vmul.f32 %v1517, 0.5
  %v1522 = vtanh.pop %v1519
  %v1523 = vtanh.pop %v1520
  %v1524 = vtanh.pop %v1521
  %v1525 = vmul.f32 %v1522, 0.5
  %v1526 = vmul.f32 %v1523, 0.5
  %v1527 = vmul.f32 %v1524, 0.5
  %v1528 = vadd.f32 %v1525, 0.5
  %v1529 = vadd.f32 %v1526, 0.5
  %v1530 = vadd.f32 %v1527, 0.5
  %v1531 = vtanh.pop %v1518
  %v1532 = vld [vmem:[#allocation5] sm:$0xff]
  %v1533 = vmul.f32 %v1529, %v1532
  %v1534 = vmul.f32 %v1528, %v1531
  %v1535 = vadd.f32 %v1533, %v1534
  %v1536 = vtanh.pop %v1535
  %v1537 = vmul.f32 %v1530, %v1536
  %1538 = vst [vmem:[#allocation5] sm:$0xff] %v1535
  %1539 = vst [vmem:[#allocation4] sm:$0xff] %v1537
  %s1540 = scalar_lea.vmem [#allocation3], 24
  %1541 = vst [vmem:[%s1540] sm:$0xff] %v1537
  %v1542 = vld [vmem:[#allocation4] sm:$0xff]
  %v1543 = vpack.c.bf16 %v1542, %v1542
  %s1544 = smul.u32 4, 4
  %s1545 = smul.addr %s1544, 8
  %s1546 = scalar_lea.vmem [#allocation2], %s1545
  %v1547 = vld [vmem:[%s1546] sm:$0xff]
  %v1548 = vld [vmem:[%s1546 + $0x8] sm:$0xff]
  %v1549 = vld [vmem:[%s1546 + $0x10] sm:$0xff]
  %v1550 = vld [vmem:[%s1546 + $0x18] sm:$0xff]
  %v1551 = vld [vmem:[%s2] sm:$0xff]
  %v1552 = vld [vmem:[%s2 + $0x8] sm:$0xff]
  %v1553 = vld [vmem:[%s2 + $0x10] sm:$0xff]
  %v1554 = vld [vmem:[%s2 + $0x18] sm:$0xff]
  %v1555 = vld [vmem:[%s2 + $0x20] sm:$0xff]
  %v1556 = vld [vmem:[%s2 + $0x28] sm:$0xff]
  %v1557 = vld [vmem:[%s2 + $0x30] sm:$0xff]
  %v1558 = vld [vmem:[%s2 + $0x38] sm:$0xff]
  %v1559 = vld [vmem:[%s2 + $0x40] sm:$0xff]
  %v1560 = vld [vmem:[%s2 + $0x48] sm:$0xff]
  %v1561 = vld [vmem:[%s2 + $0x50] sm:$0xff]
  %v1562 = vld [vmem:[%s2 + $0x58] sm:$0xff]
  %v1563 = vld [vmem:[%s2 + $0x60] sm:$0xff]
  %v1564 = vld [vmem:[%s2 + $0x68] sm:$0xff]
  %v1565 = vld [vmem:[%s2 + $0x70] sm:$0xff]
  %v1566 = vld [vmem:[%s2 + $0x78] sm:$0xff]
  %v1567 = vld [vmem:[%s2 + $0x80] sm:$0xff]
  %v1568 = vld [vmem:[%s2 + $0x88] sm:$0xff]
  %v1569 = vld [vmem:[%s2 + $0x90] sm:$0xff]
  %v1570 = vld [vmem:[%s2 + $0x98] sm:$0xff]
  %v1571 = vld [vmem:[%s2 + $0xa0] sm:$0xff]
  %v1572 = vld [vmem:[%s2 + $0xa8] sm:$0xff]
  %v1573 = vld [vmem:[%s2 + $0xb0] sm:$0xff]
  %v1574 = vld [vmem:[%s2 + $0xb8] sm:$0xff]
  %v1575 = vld [vmem:[%s2 + $0xc0] sm:$0xff]
  %v1576 = vld [vmem:[%s2 + $0xc8] sm:$0xff]
  %v1577 = vld [vmem:[%s2 + $0xd0] sm:$0xff]
  %v1578 = vld [vmem:[%s2 + $0xd8] sm:$0xff]
  %v1579 = vld [vmem:[%s2 + $0xe0] sm:$0xff]
  %v1580 = vld [vmem:[%s2 + $0xe8] sm:$0xff]
  %v1581 = vld [vmem:[%s2 + $0xf0] sm:$0xff]
  %v1582 = vld [vmem:[%s2 + $0xf8] sm:$0xff]
  %v1615 = vunpack.c.l.b16 %v1551
  %v1616 = vunpack.c.h.b16 %v1551
  %v1617 = vunpack.c.l.b16 %v1552
  %v1618 = vunpack.c.h.b16 %v1552
  %v1619 = vunpack.c.l.b16 %v1553
  %v1620 = vunpack.c.h.b16 %v1553
  %v1621 = vunpack.c.l.b16 %v1554
  %v1622 = vunpack.c.h.b16 %v1554
  %v1623 = vunpack.c.l.b16 %v1555
  %v1624 = vunpack.c.h.b16 %v1555
  %v1625 = vunpack.c.l.b16 %v1556
  %v1626 = vunpack.c.h.b16 %v1556
  %v1627 = vunpack.c.l.b16 %v1557
  %v1628 = vunpack.c.h.b16 %v1557
  %v1629 = vunpack.c.l.b16 %v1558
  %v1630 = vunpack.c.h.b16 %v1558
  %v1631 = vunpack.c.l.b16 %v1559
  %v1632 = vunpack.c.h.b16 %v1559
  %v1633 = vunpack.c.l.b16 %v1560
  %v1634 = vunpack.c.h.b16 %v1560
  %v1635 = vunpack.c.l.b16 %v1561
  %v1636 = vunpack.c.h.b16 %v1561
  %v1637 = vunpack.c.l.b16 %v1562
  %v1638 = vunpack.c.h.b16 %v1562
  %v1639 = vunpack.c.l.b16 %v1563
  %v1640 = vunpack.c.h.b16 %v1563
  %v1641 = vunpack.c.l.b16 %v1564
  %v1642 = vunpack.c.h.b16 %v1564
  %v1643 = vunpack.c.l.b16 %v1565
  %v1644 = vunpack.c.h.b16 %v1565
  %v1645 = vunpack.c.l.b16 %v1566
  %v1646 = vunpack.c.h.b16 %v1566
  %v1647 = vunpack.c.l.b16 %v1567
  %v1648 = vunpack.c.h.b16 %v1567
  %v1649 = vunpack.c.l.b16 %v1568
  %v1650 = vunpack.c.h.b16 %v1568
  %v1651 = vunpack.c.l.b16 %v1569
  %v1652 = vunpack.c.h.b16 %v1569
  %v1653 = vunpack.c.l.b16 %v1570
  %v1654 = vunpack.c.h.b16 %v1570
  %v1655 = vunpack.c.l.b16 %v1571
  %v1656 = vunpack.c.h.b16 %v1571
  %v1657 = vunpack.c.l.b16 %v1572
  %v1658 = vunpack.c.h.b16 %v1572
  %v1659 = vunpack.c.l.b16 %v1573
  %v1660 = vunpack.c.h.b16 %v1573
  %v1661 = vunpack.c.l.b16 %v1574
  %v1662 = vunpack.c.h.b16 %v1574
  %v1663 = vunpack.c.l.b16 %v1575
  %v1664 = vunpack.c.h.b16 %v1575
  %v1665 = vunpack.c.l.b16 %v1576
  %v1666 = vunpack.c.h.b16 %v1576
  %v1667 = vunpack.c.l.b16 %v1577
  %v1668 = vunpack.c.h.b16 %v1577
  %v1669 = vunpack.c.l.b16 %v1578
  %v1670 = vunpack.c.h.b16 %v1578
  %v1671 = vunpack.c.l.b16 %v1579
  %v1672 = vunpack.c.h.b16 %v1579
  %v1673 = vunpack.c.l.b16 %v1580
  %v1674 = vunpack.c.h.b16 %v1580
  %v1675 = vunpack.c.l.b16 %v1581
  %v1676 = vunpack.c.h.b16 %v1581
  %v1677 = vunpack.c.l.b16 %v1582
  %v1678 = vunpack.c.h.b16 %v1582
  %v1679 = vpack.c.b16 %v1619, %v1615
  %v1680 = vpack.c.b16 %v1620, %v1616
  %v1681 = vpack.c.b16 %v1621, %v1617
  %v1682 = vpack.c.b16 %v1622, %v1618
  %v1683 = vpack.c.b16 %v1627, %v1623
  %v1684 = vpack.c.b16 %v1628, %v1624
  %v1685 = vpack.c.b16 %v1629, %v1625
  %v1686 = vpack.c.b16 %v1630, %v1626
  %v1687 = vpack.c.b16 %v1635, %v1631
  %v1688 = vpack.c.b16 %v1636, %v1632
  %v1689 = vpack.c.b16 %v1637, %v1633
  %v1690 = vpack.c.b16 %v1638, %v1634
  %v1691 = vpack.c.b16 %v1643, %v1639
  %v1692 = vpack.c.b16 %v1644, %v1640
  %v1693 = vpack.c.b16 %v1645, %v1641
  %v1694 = vpack.c.b16 %v1646, %v1642
  %v1695 = vpack.c.b16 %v1651, %v1647
  %v1696 = vpack.c.b16 %v1652, %v1648
  %v1697 = vpack.c.b16 %v1653, %v1649
  %v1698 = vpack.c.b16 %v1654, %v1650
  %v1699 = vpack.c.b16 %v1659, %v1655
  %v1700 = vpack.c.b16 %v1660, %v1656
  %v1701 = vpack.c.b16 %v1661, %v1657
  %v1702 = vpack.c.b16 %v1662, %v1658
  %v1703 = vpack.c.b16 %v1667, %v1663
  %v1704 = vpack.c.b16 %v1668, %v1664
  %v1705 = vpack.c.b16 %v1669, %v1665
  %v1706 = vpack.c.b16 %v1670, %v1666
  %v1707 = vpack.c.b16 %v1675, %v1671
  %v1708 = vpack.c.b16 %v1676, %v1672
  %v1709 = vpack.c.b16 %v1677, %v1673
  %v1710 = vpack.c.b16 %v1678, %v1674
  %1743 = vmatprep.subr.bf16.mxu0 %v1680
  %1744 = vmatpush1.bf16.msra.mxu0 %v1679
  %1745 = vmatprep.subr.bf16.mxu0 %v1684
  %1746 = vmatpush1.bf16.msra.mxu0 %v1683
  %1747 = vmatprep.subr.bf16.mxu0 %v1688
  %1748 = vmatpush1.bf16.msra.mxu0 %v1687
  %1749 = vmatprep.subr.bf16.mxu0 %v1692
  %1750 = vmatpush1.bf16.msra.mxu0 %v1691
  %1751 = vmatprep.subr.bf16.mxu0 %v1696
  %1752 = vmatpush1.bf16.msra.mxu0 %v1695
  %1753 = vmatprep.subr.bf16.mxu0 %v1700
  %1754 = vmatpush1.bf16.msra.mxu0 %v1699
  %1755 = vmatprep.subr.bf16.mxu0 %v1704
  %1756 = vmatpush1.bf16.msra.mxu0 %v1703
  %1757 = vmatprep.subr.bf16.mxu0 %v1708
  %1758 = vmatpush1.bf16.msra.mxu0 %v1707
  %1759 = vmatprep.subr.bf16.mxu0 0
  %1760 = vmatpush1.bf16.msra.mxu0 0
  %1761 = vmatprep.subr.bf16.mxu0 0
  %1762 = vmatpush1.bf16.msra.mxu0 0
  %1763 = vmatprep.subr.bf16.mxu0 0
  %1764 = vmatpush1.bf16.msra.mxu0 0
  %1765 = vmatprep.subr.bf16.mxu0 0
  %1766 = vmatpush1.bf16.msra.mxu0 0
  %1767 = vmatprep.subr.bf16.mxu0 0
  %1768 = vmatpush1.bf16.msra.mxu0 0
  %1769 = vmatprep.subr.bf16.mxu0 0
  %1770 = vmatpush1.bf16.msra.mxu0 0
  %1771 = vmatprep.subr.bf16.mxu0 0
  %1772 = vmatpush1.bf16.msra.mxu0 0
  %1773 = vmatprep.subr.bf16.mxu0 0
  %1774 = vmatpush1.bf16.msra.mxu0 0
  %1775 = vmatprep.mubr.bf16.mxu0 0
  %1776 = vmatmul.mubr.bf16.gmra.mrb[0].mxu0 %v1543
  %v1777 = vpop.f32.mrb[0].mxu0
  %v1778 = vadd.f32 0.0, %v1777
  %v1779 = vpop.f32.mrb[0].mxu0
  %v1780 = vadd.f32 0.0, %v1779
  %v1781 = vpop.f32.mrb[0].mxu0
  %v1782 = vpop.f32.mrb[0].mxu0
  %1783 = vdwg.mxu0
  %1784 = vmatprep.subr.bf16.mxu0 %v1682
  %1785 = vmatpush1.bf16.msra.mxu0 %v1681
  %1786 = vmatprep.subr.bf16.mxu0 %v1686
  %1787 = vmatpush1.bf16.msra.mxu0 %v1685
  %1788 = vmatprep.subr.bf16.mxu0 %v1690
  %1789 = vmatpush1.bf16.msra.mxu0 %v1689
  %1790 = vmatprep.subr.bf16.mxu0 %v1694
  %1791 = vmatpush1.bf16.msra.mxu0 %v1693
  %1792 = vmatprep.subr.bf16.mxu0 %v1698
  %1793 = vmatpush1.bf16.msra.mxu0 %v1697
  %1794 = vmatprep.subr.bf16.mxu0 %v1702
  %1795 = vmatpush1.bf16.msra.mxu0 %v1701
  %1796 = vmatprep.subr.bf16.mxu0 %v1706
  %1797 = vmatpush1.bf16.msra.mxu0 %v1705
  %1798 = vmatprep.subr.bf16.mxu0 %v1710
  %1799 = vmatpush1.bf16.msra.mxu0 %v1709
  %1800 = vmatprep.subr.bf16.mxu0 0
  %1801 = vmatpush1.bf16.msra.mxu0 0
  %1802 = vmatprep.subr.bf16.mxu0 0
  %1803 = vmatpush1.bf16.msra.mxu0 0
  %1804 = vmatprep.subr.bf16.mxu0 0
  %1805 = vmatpush1.bf16.msra.mxu0 0
  %1806 = vmatprep.subr.bf16.mxu0 0
  %1807 = vmatpush1.bf16.msra.mxu0 0
  %1808 = vmatprep.subr.bf16.mxu0 0
  %1809 = vmatpush1.bf16.msra.mxu0 0
  %1810 = vmatprep.subr.bf16.mxu0 0
  %1811 = vmatpush1.bf16.msra.mxu0 0
  %1812 = vmatprep.subr.bf16.mxu0 0
  %1813 = vmatpush1.bf16.msra.mxu0 0
  %1814 = vmatprep.subr.bf16.mxu0 0
  %1815 = vmatpush1.bf16.msra.mxu0 0
  %1816 = vmatprep.mubr.bf16.mxu0 0
  %1817 = vmatmul.mubr.bf16.gmra.mrb[0].mxu0 %v1543
  %v1818 = vpop.f32.mrb[0].mxu0
  %v1819 = vadd.f32 0.0, %v1818
  %v1820 = vpop.f32.mrb[0].mxu0
  %v1821 = vadd.f32 0.0, %v1820
  %v1822 = vpop.f32.mrb[0].mxu0
  %v1823 = vpop.f32.mrb[0].mxu0
  %1824 = vdwg.mxu0
  %v1825 = vadd.f32 %v1547, %v1778
  %v1826 = vadd.f32 %v1548, %v1780
  %v1827 = vadd.f32 %v1549, %v1819
  %v1828 = vadd.f32 %v1550, %v1821
  %v1829 = vmul.f32 %v1825, 0.5
  %v1830 = vmul.f32 %v1826, 0.5
  %v1831 = vmul.f32 %v1827, 0.5
  %v1832 = vtanh.pop %v1829
  %v1833 = vtanh.pop %v1830
  %v1834 = vtanh.pop %v1831
  %v1835 = vmul.f32 %v1832, 0.5
  %v1836 = vmul.f32 %v1833, 0.5
  %v1837 = vmul.f32 %v1834, 0.5
  %v1838 = vadd.f32 %v1835, 0.5
  %v1839 = vadd.f32 %v1836, 0.5
  %v1840 = vadd.f32 %v1837, 0.5
  %v1841 = vtanh.pop %v1828
  %v1842 = vld [vmem:[#allocation5] sm:$0xff]
  %v1843 = vmul.f32 %v1839, %v1842
  %v1844 = vmul.f32 %v1838, %v1841
  %v1845 = vadd.f32 %v1843, %v1844
  %v1846 = vtanh.pop %v1845
  %v1847 = vmul.f32 %v1840, %v1846
  %1848 = vst [vmem:[#allocation5] sm:$0xff] %v1845
  %1849 = vst [vmem:[#allocation4] sm:$0xff] %v1847
  %s1850 = scalar_lea.vmem [#allocation3], 32
  %1851 = vst [vmem:[%s1850] sm:$0xff] %v1847
  %v1852 = vld [vmem:[#allocation4] sm:$0xff]
  %v1853 = vpack.c.bf16 %v1852, %v1852
  %s1854 = smul.u32 5, 4
  %s1855 = smul.addr %s1854, 8
  %s1856 = scalar_lea.vmem [#allocation2], %s1855
  %v1857 = vld [vmem:[%s1856] sm:$0xff]
  %v1858 = vld [vmem:[%s1856 + $0x8] sm:$0xff]
  %v1859 = vld [vmem:[%s1856 + $0x10] sm:$0xff]
  %v1860 = vld [vmem:[%s1856 + $0x18] sm:$0xff]
  %v1861 = vld [vmem:[%s2] sm:$0xff]
  %v1862 = vld [vmem:[%s2 + $0x8] sm:$0xff]
  %v1863 = vld [vmem:[%s2 + $0x10] sm:$0xff]
  %v1864 = vld [vmem:[%s2 + $0x18] sm:$0xff]
  %v1865 = vld [vmem:[%s2 + $0x20] sm:$0xff]
  %v1866 = vld [vmem:[%s2 + $0x28] sm:$0xff]
  %v1867 = vld [vmem:[%s2 + $0x30] sm:$0xff]
  %v1868 = vld [vmem:[%s2 + $0x38] sm:$0xff]
  %v1869 = vld [vmem:[%s2 + $0x40] sm:$0xff]
  %v1870 = vld [vmem:[%s2 + $0x48] sm:$0xff]
  %v1871 = vld [vmem:[%s2 + $0x50] sm:$0xff]
  %v1872 = vld [vmem:[%s2 + $0x58] sm:$0xff]
  %v1873 = vld [vmem:[%s2 + $0x60] sm:$0xff]
  %v1874 = vld [vmem:[%s2 + $0x68] sm:$0xff]
  %v1875 = vld [vmem:[%s2 + $0x70] sm:$0xff]
  %v1876 = vld [vmem:[%s2 + $0x78] sm:$0xff]
  %v1877 = vld [vmem:[%s2 + $0x80] sm:$0xff]
  %v1878 = vld [vmem:[%s2 + $0x88] sm:$0xff]
  %v1879 = vld [vmem:[%s2 + $0x90] sm:$0xff]
  %v1880 = vld [vmem:[%s2 + $0x98] sm:$0xff]
  %v1881 = vld [vmem:[%s2 + $0xa0] sm:$0xff]
  %v1882 = vld [vmem:[%s2 + $0xa8] sm:$0xff]
  %v1883 = vld [vmem:[%s2 + $0xb0] sm:$0xff]
  %v1884 = vld [vmem:[%s2 + $0xb8] sm:$0xff]
  %v1885 = vld [vmem:[%s2 + $0xc0] sm:$0xff]
  %v1886 = vld [vmem:[%s2 + $0xc8] sm:$0xff]
  %v1887 = vld [vmem:[%s2 + $0xd0] sm:$0xff]
  %v1888 = vld [vmem:[%s2 + $0xd8] sm:$0xff]
  %v1889 = vld [vmem:[%s2 + $0xe0] sm:$0xff]
  %v1890 = vld [vmem:[%s2 + $0xe8] sm:$0xff]
  %v1891 = vld [vmem:[%s2 + $0xf0] sm:$0xff]
  %v1892 = vld [vmem:[%s2 + $0xf8] sm:$0xff]
  %v1925 = vunpack.c.l.b16 %v1861
  %v1926 = vunpack.c.h.b16 %v1861
  %v1927 = vunpack.c.l.b16 %v1862
  %v1928 = vunpack.c.h.b16 %v1862
  %v1929 = vunpack.c.l.b16 %v1863
  %v1930 = vunpack.c.h.b16 %v1863
  %v1931 = vunpack.c.l.b16 %v1864
  %v1932 = vunpack.c.h.b16 %v1864
  %v1933 = vunpack.c.l.b16 %v1865
  %v1934 = vunpack.c.h.b16 %v1865
  %v1935 = vunpack.c.l.b16 %v1866
  %v1936 = vunpack.c.h.b16 %v1866
  %v1937 = vunpack.c.l.b16 %v1867
  %v1938 = vunpack.c.h.b16 %v1867
  %v1939 = vunpack.c.l.b16 %v1868
  %v1940 = vunpack.c.h.b16 %v1868
  %v1941 = vunpack.c.l.b16 %v1869
  %v1942 = vunpack.c.h.b16 %v1869
  %v1943 = vunpack.c.l.b16 %v1870
  %v1944 = vunpack.c.h.b16 %v1870
  %v1945 = vunpack.c.l.b16 %v1871
  %v1946 = vunpack.c.h.b16 %v1871
  %v1947 = vunpack.c.l.b16 %v1872
  %v1948 = vunpack.c.h.b16 %v1872
  %v1949 = vunpack.c.l.b16 %v1873
  %v1950 = vunpack.c.h.b16 %v1873
  %v1951 = vunpack.c.l.b16 %v1874
  %v1952 = vunpack.c.h.b16 %v1874
  %v1953 = vunpack.c.l.b16 %v1875
  %v1954 = vunpack.c.h.b16 %v1875
  %v1955 = vunpack.c.l.b16 %v1876
  %v1956 = vunpack.c.h.b16 %v1876
  %v1957 = vunpack.c.l.b16 %v1877
  %v1958 = vunpack.c.h.b16 %v1877
  %v1959 = vunpack.c.l.b16 %v1878
  %v1960 = vunpack.c.h.b16 %v1878
  %v1961 = vunpack.c.l.b16 %v1879
  %v1962 = vunpack.c.h.b16 %v1879
  %v1963 = vunpack.c.l.b16 %v1880
  %v1964 = vunpack.c.h.b16 %v1880
  %v1965 = vunpack.c.l.b16 %v1881
  %v1966 = vunpack.c.h.b16 %v1881
  %v1967 = vunpack.c.l.b16 %v1882
  %v1968 = vunpack.c.h.b16 %v1882
  %v1969 = vunpack.c.l.b16 %v1883
  %v1970 = vunpack.c.h.b16 %v1883
  %v1971 = vunpack.c.l.b16 %v1884
  %v1972 = vunpack.c.h.b16 %v1884
  %v1973 = vunpack.c.l.b16 %v1885
  %v1974 = vunpack.c.h.b16 %v1885
  %v1975 = vunpack.c.l.b16 %v1886
  %v1976 = vunpack.c.h.b16 %v1886
  %v1977 = vunpack.c.l.b16 %v1887
  %v1978 = vunpack.c.h.b16 %v1887
  %v1979 = vunpack.c.l.b16 %v1888
  %v1980 = vunpack.c.h.b16 %v1888
  %v1981 = vunpack.c.l.b16 %v1889
  %v1982 = vunpack.c.h.b16 %v1889
  %v1983 = vunpack.c.l.b16 %v1890
  %v1984 = vunpack.c.h.b16 %v1890
  %v1985 = vunpack.c.l.b16 %v1891
  %v1986 = vunpack.c.h.b16 %v1891
  %v1987 = vunpack.c.l.b16 %v1892
  %v1988 = vunpack.c.h.b16 %v1892
  %v1989 = vpack.c.b16 %v1929, %v1925
  %v1990 = vpack.c.b16 %v1930, %v1926
  %v1991 = vpack.c.b16 %v1931, %v1927
  %v1992 = vpack.c.b16 %v1932, %v1928
  %v1993 = vpack.c.b16 %v1937, %v1933
  %v1994 = vpack.c.b16 %v1938, %v1934
  %v1995 = vpack.c.b16 %v1939, %v1935
  %v1996 = vpack.c.b16 %v1940, %v1936
  %v1997 = vpack.c.b16 %v1945, %v1941
  %v1998 = vpack.c.b16 %v1946, %v1942
  %v1999 = vpack.c.b16 %v1947, %v1943
  %v2000 = vpack.c.b16 %v1948, %v1944
  %v2001 = vpack.c.b16 %v1953, %v1949
  %v2002 = vpack.c.b16 %v1954, %v1950
  %v2003 = vpack.c.b16 %v1955, %v1951
  %v2004 = vpack.c.b16 %v1956, %v1952
  %v2005 = vpack.c.b16 %v1961, %v1957
  %v2006 = vpack.c.b16 %v1962, %v1958
  %v2007 = vpack.c.b16 %v1963, %v1959
  %v2008 = vpack.c.b16 %v1964, %v1960
  %v2009 = vpack.c.b16 %v1969, %v1965
  %v2010 = vpack.c.b16 %v1970, %v1966
  %v2011 = vpack.c.b16 %v1971, %v1967
  %v2012 = vpack.c.b16 %v1972, %v1968
  %v2013 = vpack.c.b16 %v1977, %v1973
  %v2014 = vpack.c.b16 %v1978, %v1974
  %v2015 = vpack.c.b16 %v1979, %v1975
  %v2016 = vpack.c.b16 %v1980, %v1976
  %v2017 = vpack.c.b16 %v1985, %v1981
  %v2018 = vpack.c.b16 %v1986, %v1982
  %v2019 = vpack.c.b16 %v1987, %v1983
  %v2020 = vpack.c.b16 %v1988, %v1984
  %2053 = vmatprep.subr.bf16.mxu0 %v1990
  %2054 = vmatpush1.bf16.msra.mxu0 %v1989
  %2055 = vmatprep.subr.bf16.mxu0 %v1994
  %2056 = vmatpush1.bf16.msra.mxu0 %v1993
  %2057 = vmatprep.subr.bf16.mxu0 %v1998
  %2058 = vmatpush1.bf16.msra.mxu0 %v1997
  %2059 = vmatprep.subr.bf16.mxu0 %v2002
  %2060 = vmatpush1.bf16.msra.mxu0 %v2001
  %2061 = vmatprep.subr.bf16.mxu0 %v2006
  %2062 = vmatpush1.bf16.msra.mxu0 %v2005
  %2063 = vmatprep.subr.bf16.mxu0 %v2010
  %2064 = vmatpush1.bf16.msra.mxu0 %v2009
  %2065 = vmatprep.subr.bf16.mxu0 %v2014
  %2066 = vmatpush1.bf16.msra.mxu0 %v2013
  %2067 = vmatprep.subr.bf16.mxu0 %v2018
  %2068 = vmatpush1.bf16.msra.mxu0 %v2017
  %2069 = vmatprep.subr.bf16.mxu0 0
  %2070 = vmatpush1.bf16.msra.mxu0 0
  %2071 = vmatprep.subr.bf16.mxu0 0
  %2072 = vmatpush1.bf16.msra.mxu0 0
  %2073 = vmatprep.subr.bf16.mxu0 0
  %2074 = vmatpush1.bf16.msra.mxu0 0
  %2075 = vmatprep.subr.bf16.mxu0 0
  %2076 = vmatpush1.bf16.msra.mxu0 0
  %2077 = vmatprep.subr.bf16.mxu0 0
  %2078 = vmatpush1.bf16.msra.mxu0 0
  %2079 = vmatprep.subr.bf16.mxu0 0
  %2080 = vmatpush1.bf16.msra.mxu0 0
  %2081 = vmatprep.subr.bf16.mxu0 0
  %2082 = vmatpush1.bf16.msra.mxu0 0
  %2083 = vmatprep.subr.bf16.mxu0 0
  %2084 = vmatpush1.bf16.msra.mxu0 0
  %2085 = vmatprep.mubr.bf16.mxu0 0
  %2086 = vmatmul.mubr.bf16.gmra.mrb[0].mxu0 %v1853
  %v2087 = vpop.f32.mrb[0].mxu0
  %v2088 = vadd.f32 0.0, %v2087
  %v2089 = vpop.f32.mrb[0].mxu0
  %v2090 = vadd.f32 0.0, %v2089
  %v2091 = vpop.f32.mrb[0].mxu0
  %v2092 = vpop.f32.mrb[0].mxu0
  %2093 = vdwg.mxu0
  %2094 = vmatprep.subr.bf16.mxu0 %v1992
  %2095 = vmatpush1.bf16.msra.mxu0 %v1991
  %2096 = vmatprep.subr.bf16.mxu0 %v1996
  %2097 = vmatpush1.bf16.msra.mxu0 %v1995
  %2098 = vmatprep.subr.bf16.mxu0 %v2000
  %2099 = vmatpush1.bf16.msra.mxu0 %v1999
  %2100 = vmatprep.subr.bf16.mxu0 %v2004
  %2101 = vmatpush1.bf16.msra.mxu0 %v2003
  %2102 = vmatprep.subr.bf16.mxu0 %v2008
  %2103 = vmatpush1.bf16.msra.mxu0 %v2007
  %2104 = vmatprep.subr.bf16.mxu0 %v2012
  %2105 = vmatpush1.bf16.msra.mxu0 %v2011
  %2106 = vmatprep.subr.bf16.mxu0 %v2016
  %2107 = vmatpush1.bf16.msra.mxu0 %v2015
  %2108 = vmatprep.subr.bf16.mxu0 %v2020
  %2109 = vmatpush1.bf16.msra.mxu0 %v2019
  %2110 = vmatprep.subr.bf16.mxu0 0
  %2111 = vmatpush1.bf16.msra.mxu0 0
  %2112 = vmatprep.subr.bf16.mxu0 0
  %2113 = vmatpush1.bf16.msra.mxu0 0
  %2114 = vmatprep.subr.bf16.mxu0 0
  %2115 = vmatpush1.bf16.msra.mxu0 0
  %2116 = vmatprep.subr.bf16.mxu0 0
  %2117 = vmatpush1.bf16.msra.mxu0 0
  %2118 = vmatprep.subr.bf16.mxu0 0
  %2119 = vmatpush1.bf16.msra.mxu0 0
  %2120 = vmatprep.subr.bf16.mxu0 0
  %2121 = vmatpush1.bf16.msra.mxu0 0
  %2122 = vmatprep.subr.bf16.mxu0 0
  %2123 = vmatpush1.bf16.msra.mxu0 0
  %2124 = vmatprep.subr.bf16.mxu0 0
  %2125 = vmatpush1.bf16.msra.mxu0 0
  %2126 = vmatprep.mubr.bf16.mxu0 0
  %2127 = vmatmul.mubr.bf16.gmra.mrb[0].mxu0 %v1853
  %v2128 = vpop.f32.mrb[0].mxu0
  %v2129 = vadd.f32 0.0, %v2128
  %v2130 = vpop.f32.mrb[0].mxu0
  %v2131 = vadd.f32 0.0, %v2130
  %v2132 = vpop.f32.mrb[0].mxu0
  %v2133 = vpop.f32.mrb[0].mxu0
  %2134 = vdwg.mxu0
  %v2135 = vadd.f32 %v1857, %v2088
  %v2136 = vadd.f32 %v1858, %v2090
  %v2137 = vadd.f32 %v1859, %v2129
  %v2138 = vadd.f32 %v1860, %v2131
  %v2139 = vmul.f32 %v2135, 0.5
  %v2140 = vmul.f32 %v2136, 0.5
  %v2141 = vmul.f32 %v2137, 0.5
  %v2142 = vtanh.pop %v2139
  %v2143 = vtanh.pop %v2140
  %v2144 = vtanh.pop %v2141
  %v2145 = vmul.f32 %v2142, 0.5
  %v2146 = vmul.f32 %v2143, 0.5
  %v2147 = vmul.f32 %v2144, 0.5
  %v2148 = vadd.f32 %v2145, 0.5
  %v2149 = vadd.f32 %v2146, 0.5
  %v2150 = vadd.f32 %v2147, 0.5
  %v2151 = vtanh.pop %v2138
  %v2152 = vld [vmem:[#allocation5] sm:$0xff]
  %v2153 = vmul.f32 %v2149, %v2152
  %v2154 = vmul.f32 %v2148, %v2151
  %v2155 = vadd.f32 %v2153, %v2154
  %v2156 = vtanh.pop %v2155
  %v2157 = vmul.f32 %v2150, %v2156
  %2158 = vst [vmem:[#allocation5] sm:$0xff] %v2155
  %2159 = vst [vmem:[#allocation4] sm:$0xff] %v2157
  %s2160 = scalar_lea.vmem [#allocation3], 40
  %2161 = vst [vmem:[%s2160] sm:$0xff] %v2157
  %v2162 = vld [vmem:[#allocation4] sm:$0xff]
  %v2163 = vpack.c.bf16 %v2162, %v2162
  %s2164 = smul.u32 6, 4
  %s2165 = smul.addr %s2164, 8
  %s2166 = scalar_lea.vmem [#allocation2], %s2165
  %v2167 = vld [vmem:[%s2166] sm:$0xff]
  %v2168 = vld [vmem:[%s2166 + $0x8] sm:$0xff]
  %v2169 = vld [vmem:[%s2166 + $0x10] sm:$0xff]
  %v2170 = vld [vmem:[%s2166 + $0x18] sm:$0xff]
  %v2171 = vld [vmem:[%s2] sm:$0xff]
  %v2172 = vld [vmem:[%s2 + $0x8] sm:$0xff]
  %v2173 = vld [vmem:[%s2 + $0x10] sm:$0xff]
  %v2174 = vld [vmem:[%s2 + $0x18] sm:$0xff]
  %v2175 = vld [vmem:[%s2 + $0x20] sm:$0xff]
  %v2176 = vld [vmem:[%s2 + $0x28] sm:$0xff]
  %v2177 = vld [vmem:[%s2 + $0x30] sm:$0xff]
  %v2178 = vld [vmem:[%s2 + $0x38] sm:$0xff]
  %v2179 = vld [vmem:[%s2 + $0x40] sm:$0xff]
  %v2180 = vld [vmem:[%s2 + $0x48] sm:$0xff]
  %v2181 = vld [vmem:[%s2 + $0x50] sm:$0xff]
  %v2182 = vld [vmem:[%s2 + $0x58] sm:$0xff]
  %v2183 = vld [vmem:[%s2 + $0x60] sm:$0xff]
  %v2184 = vld [vmem:[%s2 + $0x68] sm:$0xff]
  %v2185 = vld [vmem:[%s2 + $0x70] sm:$0xff]
  %v2186 = vld [vmem:[%s2 + $0x78] sm:$0xff]
  %v2187 = vld [vmem:[%s2 + $0x80] sm:$0xff]
  %v2188 = vld [vmem:[%s2 + $0x88] sm:$0xff]
  %v2189 = vld [vmem:[%s2 + $0x90] sm:$0xff]
  %v2190 = vld [vmem:[%s2 + $0x98] sm:$0xff]
  %v2191 = vld [vmem:[%s2 + $0xa0] sm:$0xff]
  %v2192 = vld [vmem:[%s2 + $0xa8] sm:$0xff]
  %v2193 = vld [vmem:[%s2 + $0xb0] sm:$0xff]
  %v2194 = vld [vmem:[%s2 + $0xb8] sm:$0xff]
  %v2195 = vld [vmem:[%s2 + $0xc0] sm:$0xff]
  %v2196 = vld [vmem:[%s2 + $0xc8] sm:$0xff]
  %v2197 = vld [vmem:[%s2 + $0xd0] sm:$0xff]
  %v2198 = vld [vmem:[%s2 + $0xd8] sm:$0xff]
  %v2199 = vld [vmem:[%s2 + $0xe0] sm:$0xff]
  %v2200 = vld [vmem:[%s2 + $0xe8] sm:$0xff]
  %v2201 = vld [vmem:[%s2 + $0xf0] sm:$0xff]
  %v2202 = vld [vmem:[%s2 + $0xf8] sm:$0xff]
  %v2235 = vunpack.c.l.b16 %v2171
  %v2236 = vunpack.c.h.b16 %v2171
  %v2237 = vunpack.c.l.b16 %v2172
  %v2238 = vunpack.c.h.b16 %v2172
  %v2239 = vunpack.c.l.b16 %v2173
  %v2240 = vunpack.c.h.b16 %v2173
  %v2241 = vunpack.c.l.b16 %v2174
  %v2242 = vunpack.c.h.b16 %v2174
  %v2243 = vunpack.c.l.b16 %v2175
  %v2244 = vunpack.c.h.b16 %v2175
  %v2245 = vunpack.c.l.b16 %v2176
  %v2246 = vunpack.c.h.b16 %v2176
  %v2247 = vunpack.c.l.b16 %v2177
  %v2248 = vunpack.c.h.b16 %v2177
  %v2249 = vunpack.c.l.b16 %v2178
  %v2250 = vunpack.c.h.b16 %v2178
  %v2251 = vunpack.c.l.b16 %v2179
  %v2252 = vunpack.c.h.b16 %v2179
  %v2253 = vunpack.c.l.b16 %v2180
  %v2254 = vunpack.c.h.b16 %v2180
  %v2255 = vunpack.c.l.b16 %v2181
  %v2256 = vunpack.c.h.b16 %v2181
  %v2257 = vunpack.c.l.b16 %v2182
  %v2258 = vunpack.c.h.b16 %v2182
  %v2259 = vunpack.c.l.b16 %v2183
  %v2260 = vunpack.c.h.b16 %v2183
  %v2261 = vunpack.c.l.b16 %v2184
  %v2262 = vunpack.c.h.b16 %v2184
  %v2263 = vunpack.c.l.b16 %v2185
  %v2264 = vunpack.c.h.b16 %v2185
  %v2265 = vunpack.c.l.b16 %v2186
  %v2266 = vunpack.c.h.b16 %v2186
  %v2267 = vunpack.c.l.b16 %v2187
  %v2268 = vunpack.c.h.b16 %v2187
  %v2269 = vunpack.c.l.b16 %v2188
  %v2270 = vunpack.c.h.b16 %v2188
  %v2271 = vunpack.c.l.b16 %v2189
  %v2272 = vunpack.c.h.b16 %v2189
  %v2273 = vunpack.c.l.b16 %v2190
  %v2274 = vunpack.c.h.b16 %v2190
  %v2275 = vunpack.c.l.b16 %v2191
  %v2276 = vunpack.c.h.b16 %v2191
  %v2277 = vunpack.c.l.b16 %v2192
  %v2278 = vunpack.c.h.b16 %v2192
  %v2279 = vunpack.c.l.b16 %v2193
  %v2280 = vunpack.c.h.b16 %v2193
  %v2281 = vunpack.c.l.b16 %v2194
  %v2282 = vunpack.c.h.b16 %v2194
  %v2283 = vunpack.c.l.b16 %v2195
  %v2284 = vunpack.c.h.b16 %v2195
  %v2285 = vunpack.c.l.b16 %v2196
  %v2286 = vunpack.c.h.b16 %v2196
  %v2287 = vunpack.c.l.b16 %v2197
  %v2288 = vunpack.c.h.b16 %v2197
  %v2289 = vunpack.c.l.b16 %v2198
  %v2290 = vunpack.c.h.b16 %v2198
  %v2291 = vunpack.c.l.b16 %v2199
  %v2292 = vunpack.c.h.b16 %v2199
  %v2293 = vunpack.c.l.b16 %v2200
  %v2294 = vunpack.c.h.b16 %v2200
  %v2295 = vunpack.c.l.b16 %v2201
  %v2296 = vunpack.c.h.b16 %v2201
  %v2297 = vunpack.c.l.b16 %v2202
  %v2298 = vunpack.c.h.b16 %v2202
  %v2299 = vpack.c.b16 %v2239, %v2235
  %v2300 = vpack.c.b16 %v2240, %v2236
  %v2301 = vpack.c.b16 %v2241, %v2237
  %v2302 = vpack.c.b16 %v2242, %v2238
  %v2303 = vpack.c.b16 %v2247, %v2243
  %v2304 = vpack.c.b16 %v2248, %v2244
  %v2305 = vpack.c.b16 %v2249, %v2245
  %v2306 = vpack.c.b16 %v2250, %v2246
  %v2307 = vpack.c.b16 %v2255, %v2251
  %v2308 = vpack.c.b16 %v2256, %v2252
  %v2309 = vpack.c.b16 %v2257, %v2253
  %v2310 = vpack.c.b16 %v2258, %v2254
  %v2311 = vpack.c.b16 %v2263, %v2259
  %v2312 = vpack.c.b16 %v2264, %v2260
  %v2313 = vpack.c.b16 %v2265, %v2261
  %v2314 = vpack.c.b16 %v2266, %v2262
  %v2315 = vpack.c.b16 %v2271, %v2267
  %v2316 = vpack.c.b16 %v2272, %v2268
  %v2317 = vpack.c.b16 %v2273, %v2269
  %v2318 = vpack.c.b16 %v2274, %v2270
  %v2319 = vpack.c.b16 %v2279, %v2275
  %v2320 = vpack.c.b16 %v2280, %v2276
  %v2321 = vpack.c.b16 %v2281, %v2277
  %v2322 = vpack.c.b16 %v2282, %v2278
  %v2323 = vpack.c.b16 %v2287, %v2283
  %v2324 = vpack.c.b16 %v2288, %v2284
  %v2325 = vpack.c.b16 %v2289, %v2285
  %v2326 = vpack.c.b16 %v2290, %v2286
  %v2327 = vpack.c.b16 %v2295, %v2291
  %v2328 = vpack.c.b16 %v2296, %v2292
  %v2329 = vpack.c.b16 %v2297, %v2293
  %v2330 = vpack.c.b16 %v2298, %v2294
  %2363 = vmatprep.subr.bf16.mxu0 %v2300
  %2364 = vmatpush1.bf16.msra.mxu0 %v2299
  %2365 = vmatprep.subr.bf16.mxu0 %v2304
  %2366 = vmatpush1.bf16.msra.mxu0 %v2303
  %2367 = vmatprep.subr.bf16.mxu0 %v2308
  %2368 = vmatpush1.bf16.msra.mxu0 %v2307
  %2369 = vmatprep.subr.bf16.mxu0 %v2312
  %2370 = vmatpush1.bf16.msra.mxu0 %v2311
  %2371 = vmatprep.subr.bf16.mxu0 %v2316
  %2372 = vmatpush1.bf16.msra.mxu0 %v2315
  %2373 = vmatprep.subr.bf16.mxu0 %v2320
  %2374 = vmatpush1.bf16.msra.mxu0 %v2319
  %2375 = vmatprep.subr.bf16.mxu0 %v2324
  %2376 = vmatpush1.bf16.msra.mxu0 %v2323
  %2377 = vmatprep.subr.bf16.mxu0 %v2328
  %2378 = vmatpush1.bf16.msra.mxu0 %v2327
  %2379 = vmatprep.subr.bf16.mxu0 0
  %2380 = vmatpush1.bf16.msra.mxu0 0
  %2381 = vmatprep.subr.bf16.mxu0 0
  %2382 = vmatpush1.bf16.msra.mxu0 0
  %2383 = vmatprep.subr.bf16.mxu0 0
  %2384 = vmatpush1.bf16.msra.mxu0 0
  %2385 = vmatprep.subr.bf16.mxu0 0
  %2386 = vmatpush1.bf16.msra.mxu0 0
  %2387 = vmatprep.subr.bf16.mxu0 0
  %2388 = vmatpush1.bf16.msra.mxu0 0
  %2389 = vmatprep.subr.bf16.mxu0 0
  %2390 = vmatpush1.bf16.msra.mxu0 0
  %2391 = vmatprep.subr.bf16.mxu0 0
  %2392 = vmatpush1.bf16.msra.mxu0 0
  %2393 = vmatprep.subr.bf16.mxu0 0
  %2394 = vmatpush1.bf16.msra.mxu0 0
  %2395 = vmatprep.mubr.bf16.mxu0 0
  %2396 = vmatmul.mubr.bf16.gmra.mrb[0].mxu0 %v2163
  %v2397 = vpop.f32.mrb[0].mxu0
  %v2398 = vadd.f32 0.0, %v2397
  %v2399 = vpop.f32.mrb[0].mxu0
  %v2400 = vadd.f32 0.0, %v2399
  %v2401 = vpop.f32.mrb[0].mxu0
  %v2402 = vpop.f32.mrb[0].mxu0
  %2403 = vdwg.mxu0
  %2404 = vmatprep.subr.bf16.mxu0 %v2302
  %2405 = vmatpush1.bf16.msra.mxu0 %v2301
  %2406 = vmatprep.subr.bf16.mxu0 %v2306
  %2407 = vmatpush1.bf16.msra.mxu0 %v2305
  %2408 = vmatprep.subr.bf16.mxu0 %v2310
  %2409 = vmatpush1.bf16.msra.mxu0 %v2309
  %2410 = vmatprep.subr.bf16.mxu0 %v2314
  %2411 = vmatpush1.bf16.msra.mxu0 %v2313
  %2412 = vmatprep.subr.bf16.mxu0 %v2318
  %2413 = vmatpush1.bf16.msra.mxu0 %v2317
  %2414 = vmatprep.subr.bf16.mxu0 %v2322
  %2415 = vmatpush1.bf16.msra.mxu0 %v2321
  %2416 = vmatprep.subr.bf16.mxu0 %v2326
  %2417 = vmatpush1.bf16.msra.mxu0 %v2325
  %2418 = vmatprep.subr.bf16.mxu0 %v2330
  %2419 = vmatpush1.bf16.msra.mxu0 %v2329
  %2420 = vmatprep.subr.bf16.mxu0 0
  %2421 = vmatpush1.bf16.msra.mxu0 0
  %2422 = vmatprep.subr.bf16.mxu0 0
  %2423 = vmatpush1.bf16.msra.mxu0 0
  %2424 = vmatprep.subr.bf16.mxu0 0
  %2425 = vmatpush1.bf16.msra.mxu0 0
  %2426 = vmatprep.subr.bf16.mxu0 0
  %2427 = vmatpush1.bf16.msra.mxu0 0
  %2428 = vmatprep.subr.bf16.mxu0 0
  %2429 = vmatpush1.bf16.msra.mxu0 0
  %2430 = vmatprep.subr.bf16.mxu0 0
  %2431 = vmatpush1.bf16.msra.mxu0 0
  %2432 = vmatprep.subr.bf16.mxu0 0
  %2433 = vmatpush1.bf16.msra.mxu0 0
  %2434 = vmatprep.subr.bf16.mxu0 0
  %2435 = vmatpush1.bf16.msra.mxu0 0
  %2436 = vmatprep.mubr.bf16.mxu0 0
  %2437 = vmatmul.mubr.bf16.gmra.mrb[0].mxu0 %v2163
  %v2438 = vpop.f32.mrb[0].mxu0
  %v2439 = vadd.f32 0.0, %v2438
  %v2440 = vpop.f32.mrb[0].mxu0
  %v2441 = vadd.f32 0.0, %v2440
  %v2442 = vpop.f32.mrb[0].mxu0
  %v2443 = vpop.f32.mrb[0].mxu0
  %2444 = vdwg.mxu0
  %v2445 = vadd.f32 %v2167, %v2398
  %v2446 = vadd.f32 %v2168, %v2400
  %v2447 = vadd.f32 %v2169, %v2439
  %v2448 = vadd.f32 %v2170, %v2441
  %v2449 = vmul.f32 %v2445, 0.5
  %v2450 = vmul.f32 %v2446, 0.5
  %v2451 = vmul.f32 %v2447, 0.5
  %v2452 = vtanh.pop %v2449
  %v2453 = vtanh.pop %v2450
  %v2454 = vtanh.pop %v2451
  %v2455 = vmul.f32 %v2452, 0.5
  %v2456 = vmul.f32 %v2453, 0.5
  %v2457 = vmul.f32 %v2454, 0.5
  %v2458 = vadd.f32 %v2455, 0.5
  %v2459 = vadd.f32 %v2456, 0.5
  %v2460 = vadd.f32 %v2457, 0.5
  %v2461 = vtanh.pop %v2448
  %v2462 = vld [vmem:[#allocation5] sm:$0xff]
  %v2463 = vmul.f32 %v2459, %v2462
  %v2464 = vmul.f32 %v2458, %v2461
  %v2465 = vadd.f32 %v2463, %v2464
  %v2466 = vtanh.pop %v2465
  %v2467 = vmul.f32 %v2460, %v2466
  %2468 = vst [vmem:[#allocation5] sm:$0xff] %v2465
  %2469 = vst [vmem:[#allocation4] sm:$0xff] %v2467
  %s2470 = scalar_lea.vmem [#allocation3], 48
  %2471 = vst [vmem:[%s2470] sm:$0xff] %v2467
  %v2472 = vld [vmem:[#allocation4] sm:$0xff]
  %v2473 = vpack.c.bf16 %v2472, %v2472
  %s2474 = smul.u32 7, 4
  %s2475 = smul.addr %s2474, 8
  %s2476 = scalar_lea.vmem [#allocation2], %s2475
  %v2477 = vld [vmem:[%s2476] sm:$0xff]
  %v2478 = vld [vmem:[%s2476 + $0x8] sm:$0xff]
  %v2479 = vld [vmem:[%s2476 + $0x10] sm:$0xff]
  %v2480 = vld [vmem:[%s2476 + $0x18] sm:$0xff]
  %v2481 = vld [vmem:[%s2] sm:$0xff]
  %v2482 = vld [vmem:[%s2 + $0x8] sm:$0xff]
  %v2483 = vld [vmem:[%s2 + $0x10] sm:$0xff]
  %v2484 = vld [vmem:[%s2 + $0x18] sm:$0xff]
  %v2485 = vld [vmem:[%s2 + $0x20] sm:$0xff]
  %v2486 = vld [vmem:[%s2 + $0x28] sm:$0xff]
  %v2487 = vld [vmem:[%s2 + $0x30] sm:$0xff]
  %v2488 = vld [vmem:[%s2 + $0x38] sm:$0xff]
  %v2489 = vld [vmem:[%s2 + $0x40] sm:$0xff]
  %v2490 = vld [vmem:[%s2 + $0x48] sm:$0xff]
  %v2491 = vld [vmem:[%s2 + $0x50] sm:$0xff]
  %v2492 = vld [vmem:[%s2 + $0x58] sm:$0xff]
  %v2493 = vld [vmem:[%s2 + $0x60] sm:$0xff]
  %v2494 = vld [vmem:[%s2 + $0x68] sm:$0xff]
  %v2495 = vld [vmem:[%s2 + $0x70] sm:$0xff]
  %v2496 = vld [vmem:[%s2 + $0x78] sm:$0xff]
  %v2497 = vld [vmem:[%s2 + $0x80] sm:$0xff]
  %v2498 = vld [vmem:[%s2 + $0x88] sm:$0xff]
  %v2499 = vld [vmem:[%s2 + $0x90] sm:$0xff]
  %v2500 = vld [vmem:[%s2 + $0x98] sm:$0xff]
  %v2501 = vld [vmem:[%s2 + $0xa0] sm:$0xff]
  %v2502 = vld [vmem:[%s2 + $0xa8] sm:$0xff]
  %v2503 = vld [vmem:[%s2 + $0xb0] sm:$0xff]
  %v2504 = vld [vmem:[%s2 + $0xb8] sm:$0xff]
  %v2505 = vld [vmem:[%s2 + $0xc0] sm:$0xff]
  %v2506 = vld [vmem:[%s2 + $0xc8] sm:$0xff]
  %v2507 = vld [vmem:[%s2 + $0xd0] sm:$0xff]
  %v2508 = vld [vmem:[%s2 + $0xd8] sm:$0xff]
  %v2509 = vld [vmem:[%s2 + $0xe0] sm:$0xff]
  %v2510 = vld [vmem:[%s2 + $0xe8] sm:$0xff]
  %v2511 = vld [vmem:[%s2 + $0xf0] sm:$0xff]
  %v2512 = vld [vmem:[%s2 + $0xf8] sm:$0xff]
  %v2545 = vunpack.c.l.b16 %v2481
  %v2546 = vunpack.c.h.b16 %v2481
  %v2547 = vunpack.c.l.b16 %v2482
  %v2548 = vunpack.c.h.b16 %v2482
  %v2549 = vunpack.c.l.b16 %v2483
  %v2550 = vunpack.c.h.b16 %v2483
  %v2551 = vunpack.c.l.b16 %v2484
  %v2552 = vunpack.c.h.b16 %v2484
  %v2553 = vunpack.c.l.b16 %v2485
  %v2554 = vunpack.c.h.b16 %v2485
  %v2555 = vunpack.c.l.b16 %v2486
  %v2556 = vunpack.c.h.b16 %v2486
  %v2557 = vunpack.c.l.b16 %v2487
  %v2558 = vunpack.c.h.b16 %v2487
  %v2559 = vunpack.c.l.b16 %v2488
  %v2560 = vunpack.c.h.b16 %v2488
  %v2561 = vunpack.c.l.b16 %v2489
  %v2562 = vunpack.c.h.b16 %v2489
  %v2563 = vunpack.c.l.b16 %v2490
  %v2564 = vunpack.c.h.b16 %v2490
  %v2565 = vunpack.c.l.b16 %v2491
  %v2566 = vunpack.c.h.b16 %v2491
  %v2567 = vunpack.c.l.b16 %v2492
  %v2568 = vunpack.c.h.b16 %v2492
  %v2569 = vunpack.c.l.b16 %v2493
  %v2570 = vunpack.c.h.b16 %v2493
  %v2571 = vunpack.c.l.b16 %v2494
  %v2572 = vunpack.c.h.b16 %v2494
  %v2573 = vunpack.c.l.b16 %v2495
  %v2574 = vunpack.c.h.b16 %v2495
  %v2575 = vunpack.c.l.b16 %v2496
  %v2576 = vunpack.c.h.b16 %v2496
  %v2577 = vunpack.c.l.b16 %v2497
  %v2578 = vunpack.c.h.b16 %v2497
  %v2579 = vunpack.c.l.b16 %v2498
  %v2580 = vunpack.c.h.b16 %v2498
  %v2581 = vunpack.c.l.b16 %v2499
  %v2582 = vunpack.c.h.b16 %v2499
  %v2583 = vunpack.c.l.b16 %v2500
  %v2584 = vunpack.c.h.b16 %v2500
  %v2585 = vunpack.c.l.b16 %v2501
  %v2586 = vunpack.c.h.b16 %v2501
  %v2587 = vunpack.c.l.b16 %v2502
  %v2588 = vunpack.c.h.b16 %v2502
  %v2589 = vunpack.c.l.b16 %v2503
  %v2590 = vunpack.c.h.b16 %v2503
  %v2591 = vunpack.c.l.b16 %v2504
  %v2592 = vunpack.c.h.b16 %v2504
  %v2593 = vunpack.c.l.b16 %v2505
  %v2594 = vunpack.c.h.b16 %v2505
  %v2595 = vunpack.c.l.b16 %v2506
  %v2596 = vunpack.c.h.b16 %v2506
  %v2597 = vunpack.c.l.b16 %v2507
  %v2598 = vunpack.c.h.b16 %v2507
  %v2599 = vunpack.c.l.b16 %v2508
  %v2600 = vunpack.c.h.b16 %v2508
  %v2601 = vunpack.c.l.b16 %v2509
  %v2602 = vunpack.c.h.b16 %v2509
  %v2603 = vunpack.c.l.b16 %v2510
  %v2604 = vunpack.c.h.b16 %v2510
  %v2605 = vunpack.c.l.b16 %v2511
  %v2606 = vunpack.c.h.b16 %v2511
  %v2607 = vunpack.c.l.b16 %v2512
  %v2608 = vunpack.c.h.b16 %v2512
  %v2609 = vpack.c.b16 %v2549, %v2545
  %v2610 = vpack.c.b16 %v2550, %v2546
  %v2611 = vpack.c.b16 %v2551, %v2547
  %v2612 = vpack.c.b16 %v2552, %v2548
  %v2613 = vpack.c.b16 %v2557, %v2553
  %v2614 = vpack.c.b16 %v2558, %v2554
  %v2615 = vpack.c.b16 %v2559, %v2555
  %v2616 = vpack.c.b16 %v2560, %v2556
  %v2617 = vpack.c.b16 %v2565, %v2561
  %v2618 = vpack.c.b16 %v2566, %v2562
  %v2619 = vpack.c.b16 %v2567, %v2563
  %v2620 = vpack.c.b16 %v2568, %v2564
  %v2621 = vpack.c.b16 %v2573, %v2569
  %v2622 = vpack.c.b16 %v2574, %v2570
  %v2623 = vpack.c.b16 %v2575, %v2571
  %v2624 = vpack.c.b16 %v2576, %v2572
  %v2625 = vpack.c.b16 %v2581, %v2577
  %v2626 = vpack.c.b16 %v2582, %v2578
  %v2627 = vpack.c.b16 %v2583, %v2579
  %v2628 = vpack.c.b16 %v2584, %v2580
  %v2629 = vpack.c.b16 %v2589, %v2585
  %v2630 = vpack.c.b16 %v2590, %v2586
  %v2631 = vpack.c.b16 %v2591, %v2587
  %v2632 = vpack.c.b16 %v2592, %v2588
  %v2633 = vpack.c.b16 %v2597, %v2593
  %v2634 = vpack.c.b16 %v2598, %v2594
  %v2635 = vpack.c.b16 %v2599, %v2595
  %v2636 = vpack.c.b16 %v2600, %v2596
  %v2637 = vpack.c.b16 %v2605, %v2601
  %v2638 = vpack.c.b16 %v2606, %v2602
  %v2639 = vpack.c.b16 %v2607, %v2603
  %v2640 = vpack.c.b16 %v2608, %v2604
  %2673 = vmatprep.subr.bf16.mxu0 %v2610
  %2674 = vmatpush1.bf16.msra.mxu0 %v2609
  %2675 = vmatprep.subr.bf16.mxu0 %v2614
  %2676 = vmatpush1.bf16.msra.mxu0 %v2613
  %2677 = vmatprep.subr.bf16.mxu0 %v2618
  %2678 = vmatpush1.bf16.msra.mxu0 %v2617
  %2679 = vmatprep.subr.bf16.mxu0 %v2622
  %2680 = vmatpush1.bf16.msra.mxu0 %v2621
  %2681 = vmatprep.subr.bf16.mxu0 %v2626
  %2682 = vmatpush1.bf16.msra.mxu0 %v2625
  %2683 = vmatprep.subr.bf16.mxu0 %v2630
  %2684 = vmatpush1.bf16.msra.mxu0 %v2629
  %2685 = vmatprep.subr.bf16.mxu0 %v2634
  %2686 = vmatpush1.bf16.msra.mxu0 %v2633
  %2687 = vmatprep.subr.bf16.mxu0 %v2638
  %2688 = vmatpush1.bf16.msra.mxu0 %v2637
  %2689 = vmatprep.subr.bf16.mxu0 0
  %2690 = vmatpush1.bf16.msra.mxu0 0
  %2691 = vmatprep.subr.bf16.mxu0 0
  %2692 = vmatpush1.bf16.msra.mxu0 0
  %2693 = vmatprep.subr.bf16.mxu0 0
  %2694 = vmatpush1.bf16.msra.mxu0 0
  %2695 = vmatprep.subr.bf16.mxu0 0
  %2696 = vmatpush1.bf16.msra.mxu0 0
  %2697 = vmatprep.subr.bf16.mxu0 0
  %2698 = vmatpush1.bf16.msra.mxu0 0
  %2699 = vmatprep.subr.bf16.mxu0 0
  %2700 = vmatpush1.bf16.msra.mxu0 0
  %2701 = vmatprep.subr.bf16.mxu0 0
  %2702 = vmatpush1.bf16.msra.mxu0 0
  %2703 = vmatprep.subr.bf16.mxu0 0
  %2704 = vmatpush1.bf16.msra.mxu0 0
  %2705 = vmatprep.mubr.bf16.mxu0 0
  %2706 = vmatmul.mubr.bf16.gmra.mrb[0].mxu0 %v2473
  %v2707 = vpop.f32.mrb[0].mxu0
  %v2708 = vadd.f32 0.0, %v2707
  %v2709 = vpop.f32.mrb[0].mxu0
  %v2710 = vadd.f32 0.0, %v2709
  %v2711 = vpop.f32.mrb[0].mxu0
  %v2712 = vpop.f32.mrb[0].mxu0
  %2713 = vdwg.mxu0
  %2714 = vmatprep.subr.bf16.mxu0 %v2612
  %2715 = vmatpush1.bf16.msra.mxu0 %v2611
  %2716 = vmatprep.subr.bf16.mxu0 %v2616
  %2717 = vmatpush1.bf16.msra.mxu0 %v2615
  %2718 = vmatprep.subr.bf16.mxu0 %v2620
  %2719 = vmatpush1.bf16.msra.mxu0 %v2619
  %2720 = vmatprep.subr.bf16.mxu0 %v2624
  %2721 = vmatpush1.bf16.msra.mxu0 %v2623
  %2722 = vmatprep.subr.bf16.mxu0 %v2628
  %2723 = vmatpush1.bf16.msra.mxu0 %v2627
  %2724 = vmatprep.subr.bf16.mxu0 %v2632
  %2725 = vmatpush1.bf16.msra.mxu0 %v2631
  %2726 = vmatprep.subr.bf16.mxu0 %v2636
  %2727 = vmatpush1.bf16.msra.mxu0 %v2635
  %2728 = vmatprep.subr.bf16.mxu0 %v2640
  %2729 = vmatpush1.bf16.msra.mxu0 %v2639
  %2730 = vmatprep.subr.bf16.mxu0 0
  %2731 = vmatpush1.bf16.msra.mxu0 0
  %2732 = vmatprep.subr.bf16.mxu0 0
  %2733 = vmatpush1.bf16.msra.mxu0 0
  %2734 = vmatprep.subr.bf16.mxu0 0
  %2735 = vmatpush1.bf16.msra.mxu0 0
  %2736 = vmatprep.subr.bf16.mxu0 0
  %2737 = vmatpush1.bf16.msra.mxu0 0
  %2738 = vmatprep.subr.bf16.mxu0 0
  %2739 = vmatpush1.bf16.msra.mxu0 0
  %2740 = vmatprep.subr.bf16.mxu0 0
  %2741 = vmatpush1.bf16.msra.mxu0 0
  %2742 = vmatprep.subr.bf16.mxu0 0
  %2743 = vmatpush1.bf16.msra.mxu0 0
  %2744 = vmatprep.subr.bf16.mxu0 0
  %2745 = vmatpush1.bf16.msra.mxu0 0
  %2746 = vmatprep.mubr.bf16.mxu0 0
  %2747 = vmatmul.mubr.bf16.gmra.mrb[0].mxu0 %v2473
  %v2748 = vpop.f32.mrb[0].mxu0
  %v2749 = vadd.f32 0.0, %v2748
  %v2750 = vpop.f32.mrb[0].mxu0
  %v2751 = vadd.f32 0.0, %v2750
  %v2752 = vpop.f32.mrb[0].mxu0
  %v2753 = vpop.f32.mrb[0].mxu0
  %2754 = vdwg.mxu0
  %v2755 = vadd.f32 %v2477, %v2708
  %v2756 = vadd.f32 %v2478, %v2710
  %v2757 = vadd.f32 %v2479, %v2749
  %v2758 = vadd.f32 %v2480, %v2751
  %v2759 = vmul.f32 %v2755, 0.5
  %v2760 = vmul.f32 %v2756, 0.5
  %v2761 = vmul.f32 %v2757, 0.5
  %v2762 = vtanh.pop %v2759
  %v2763 = vtanh.pop %v2760
  %v2764 = vtanh.pop %v2761
  %v2765 = vmul.f32 %v2762, 0.5
  %v2766 = vmul.f32 %v2763, 0.5
  %v2767 = vmul.f32 %v2764, 0.5
  %v2768 = vadd.f32 %v2765, 0.5
  %v2769 = vadd.f32 %v2766, 0.5
  %v2770 = vadd.f32 %v2767, 0.5
  %v2771 = vtanh.pop %v2758
  %v2772 = vld [vmem:[#allocation5] sm:$0xff]
  %v2773 = vmul.f32 %v2769, %v2772
  %v2774 = vmul.f32 %v2768, %v2771
  %v2775 = vadd.f32 %v2773, %v2774
  %v2776 = vtanh.pop %v2775
  %v2777 = vmul.f32 %v2770, %v2776
  %2778 = vst [vmem:[#allocation5] sm:$0xff] %v2775
  %2779 = vst [vmem:[#allocation4] sm:$0xff] %v2777
  %s2780 = scalar_lea.vmem [#allocation3], 56
  %2781 = vst [vmem:[%s2780] sm:$0xff] %v2777
  %v2782 = vld [vmem:[#allocation3] sm:$0xff]
  %v2783 = vld [vmem:[#allocation3 + $0x8] sm:$0xff]
  %v2784 = vld [vmem:[#allocation3 + $0x10] sm:$0xff]
  %v2785 = vld [vmem:[#allocation3 + $0x18] sm:$0xff]
  %v2786 = vld [vmem:[#allocation3 + $0x20] sm:$0xff]
  %v2787 = vld [vmem:[#allocation3 + $0x28] sm:$0xff]
  %v2788 = vld [vmem:[#allocation3 + $0x30] sm:$0xff]
  %v2789 = vld [vmem:[#allocation3 + $0x38] sm:$0xff]
  %v2790 = vpack.c.bf16 %v2783, %v2782
  %v2791 = vpack.c.bf16 %v2785, %v2784
  %v2792 = vpack.c.bf16 %v2787, %v2786
  %v2793 = vpack.c.bf16 %v2789, %v2788
  %v2794 = vld [vmem:[%s4] sm:$0xff]
  %v2795 = vld [vmem:[%s4 + $0x8] sm:$0xff]
  %v2796 = vld [vmem:[%s4 + $0x10] sm:$0xff]
  %v2797 = vld [vmem:[%s4 + $0x18] sm:$0xff]
  %v2798 = vld [vmem:[%s4 + $0x20] sm:$0xff]
  %v2799 = vld [vmem:[%s4 + $0x28] sm:$0xff]
  %v2800 = vld [vmem:[%s4 + $0x30] sm:$0xff]
  %v2801 = vld [vmem:[%s4 + $0x38] sm:$0xff]
  %v2802 = vld [vmem:[%s4 + $0x40] sm:$0xff]
  %v2803 = vld [vmem:[%s4 + $0x48] sm:$0xff]
  %v2804 = vld [vmem:[%s4 + $0x50] sm:$0xff]
  %v2805 = vld [vmem:[%s4 + $0x58] sm:$0xff]
  %v2806 = vld [vmem:[%s4 + $0x60] sm:$0xff]
  %v2807 = vld [vmem:[%s4 + $0x68] sm:$0xff]
  %v2808 = vld [vmem:[%s4 + $0x70] sm:$0xff]
  %v2809 = vld [vmem:[%s4 + $0x78] sm:$0xff]
  %v2810 = vld [vmem:[%s4 + $0x80] sm:$0xff]
  %v2811 = vld [vmem:[%s4 + $0x88] sm:$0xff]
  %v2812 = vld [vmem:[%s4 + $0x90] sm:$0xff]
  %v2813 = vld [vmem:[%s4 + $0x98] sm:$0xff]
  %v2814 = vld [vmem:[%s4 + $0xa0] sm:$0xff]
  %v2815 = vld [vmem:[%s4 + $0xa8] sm:$0xff]
  %v2816 = vld [vmem:[%s4 + $0xb0] sm:$0xff]
  %v2817 = vld [vmem:[%s4 + $0xb8] sm:$0xff]
  %v2818 = vld [vmem:[%s4 + $0xc0] sm:$0xff]
  %v2819 = vld [vmem:[%s4 + $0xc8] sm:$0xff]
  %v2820 = vld [vmem:[%s4 + $0xd0] sm:$0xff]
  %v2821 = vld [vmem:[%s4 + $0xd8] sm:$0xff]
  %v2822 = vld [vmem:[%s4 + $0xe0] sm:$0xff]
  %v2823 = vld [vmem:[%s4 + $0xe8] sm:$0xff]
  %v2824 = vld [vmem:[%s4 + $0xf0] sm:$0xff]
  %v2825 = vld [vmem:[%s4 + $0xf8] sm:$0xff]
  %v2826 = vld [vmem:[%s6] sm:$0xf]
  %v2828 = vlaneseq
  %v2829 = vshrl.u32 %v2828, 7
  %v2830 = vsub.s32 0, %v2829
  %v2831 = vrot.slane %v2826, %v2830
  %v2832 = vlaneseq
  %v2833 = vshrl.u32 %v2832, 7
  %v2834 = vsub.s32 1, %v2833
  %v2835 = vrot.slane %v2826, %v2834
  %v2836 = vlaneseq
  %v2837 = vshrl.u32 %v2836, 7
  %v2838 = vsub.s32 2, %v2837
  %v2839 = vrot.slane %v2826, %v2838
  %v2840 = vlaneseq
  %v2841 = vshrl.u32 %v2840, 7
  %v2842 = vsub.s32 3, %v2841
  %v2843 = vrot.slane %v2826, %v2842
  %v2880 = vunpack.c.l.b16 %v2794
  %v2881 = vunpack.c.h.b16 %v2794
  %v2882 = vunpack.c.l.b16 %v2795
  %v2883 = vunpack.c.h.b16 %v2795
  %v2884 = vunpack.c.l.b16 %v2796
  %v2885 = vunpack.c.h.b16 %v2796
  %v2886 = vunpack.c.l.b16 %v2797
  %v2887 = vunpack.c.h.b16 %v2797
  %v2888 = vunpack.c.l.b16 %v2798
  %v2889 = vunpack.c.h.b16 %v2798
  %v2890 = vunpack.c.l.b16 %v2799
  %v2891 = vunpack.c.h.b16 %v2799
  %v2892 = vunpack.c.l.b16 %v2800
  %v2893 = vunpack.c.h.b16 %v2800
  %v2894 = vunpack.c.l.b16 %v2801
  %v2895 = vunpack.c.h.b16 %v2801
  %v2896 = vunpack.c.l.b16 %v2802
  %v2897 = vunpack.c.h.b16 %v2802
  %v2898 = vunpack.c.l.b16 %v2803
  %v2899 = vunpack.c.h.b16 %v2803
  %v2900 = vunpack.c.l.b16 %v2804
  %v2901 = vunpack.c.h.b16 %v2804
  %v2902 = vunpack.c.l.b16 %v2805
  %v2903 = vunpack.c.h.b16 %v2805
  %v2904 = vunpack.c.l.b16 %v2806
  %v2905 = vunpack.c.h.b16 %v2806
  %v2906 = vunpack.c.l.b16 %v2807
  %v2907 = vunpack.c.h.b16 %v2807
  %v2908 = vunpack.c.l.b16 %v2808
  %v2909 = vunpack.c.h.b16 %v2808
  %v2910 = vunpack.c.l.b16 %v2809
  %v2911 = vunpack.c.h.b16 %v2809
  %v2912 = vunpack.c.l.b16 %v2810
  %v2913 = vunpack.c.h.b16 %v2810
  %v2914 = vunpack.c.l.b16 %v2811
  %v2915 = vunpack.c.h.b16 %v2811
  %v2916 = vunpack.c.l.b16 %v2812
  %v2917 = vunpack.c.h.b16 %v2812
  %v2918 = vunpack.c.l.b16 %v2813
  %v2919 = vunpack.c.h.b16 %v2813
  %v2920 = vunpack.c.l.b16 %v2814
  %v2921 = vunpack.c.h.b16 %v2814
  %v2922 = vunpack.c.l.b16 %v2815
  %v2923 = vunpack.c.h.b16 %v2815
  %v2924 = vunpack.c.l.b16 %v2816
  %v2925 = vunpack.c.h.b16 %v2816
  %v2926 = vunpack.c.l.b16 %v2817
  %v2927 = vunpack.c.h.b16 %v2817
  %v2928 = vunpack.c.l.b16 %v2818
  %v2929 = vunpack.c.h.b16 %v2818
  %v2930 = vunpack.c.l.b16 %v2819
  %v2931 = vunpack.c.h.b16 %v2819
  %v2932 = vunpack.c.l.b16 %v2820
  %v2933 = vunpack.c.h.b16 %v2820
  %v2934 = vunpack.c.l.b16 %v2821
  %v2935 = vunpack.c.h.b16 %v2821
  %v2936 = vunpack.c.l.b16 %v2822
  %v2937 = vunpack.c.h.b16 %v2822
  %v2938 = vunpack.c.l.b16 %v2823
  %v2939 = vunpack.c.h.b16 %v2823
  %v2940 = vunpack.c.l.b16 %v2824
  %v2941 = vunpack.c.h.b16 %v2824
  %v2942 = vunpack.c.l.b16 %v2825
  %v2943 = vunpack.c.h.b16 %v2825
  %v2944 = vpack.c.b16 %v2884, %v2880
  %v2945 = vpack.c.b16 %v2885, %v2881
  %v2946 = vpack.c.b16 %v2886, %v2882
  %v2947 = vpack.c.b16 %v2887, %v2883
  %v2948 = vpack.c.b16 %v2892, %v2888
  %v2949 = vpack.c.b16 %v2893, %v2889
  %v2950 = vpack.c.b16 %v2894, %v2890
  %v2951 = vpack.c.b16 %v2895, %v2891
  %v2952 = vpack.c.b16 %v2900, %v2896
  %v2953 = vpack.c.b16 %v2901, %v2897
  %v2954 = vpack.c.b16 %v2902, %v2898
  %v2955 = vpack.c.b16 %v2903, %v2899
  %v2956 = vpack.c.b16 %v2908, %v2904
  %v2957 = vpack.c.b16 %v2909, %v2905
  %v2958 = vpack.c.b16 %v2910, %v2906
  %v2959 = vpack.c.b16 %v2911, %v2907
  %v2960 = vpack.c.b16 %v2916, %v2912
  %v2961 = vpack.c.b16 %v2917, %v2913
  %v2962 = vpack.c.b16 %v2918, %v2914
  %v2963 = vpack.c.b16 %v2919, %v2915
  %v2964 = vpack.c.b16 %v2924, %v2920
  %v2965 = vpack.c.b16 %v2925, %v2921
  %v2966 = vpack.c.b16 %v2926, %v2922
  %v2967 = vpack.c.b16 %v2927, %v2923
  %v2968 = vpack.c.b16 %v2932, %v2928
  %v2969 = vpack.c.b16 %v2933, %v2929
  %v2970 = vpack.c.b16 %v2934, %v2930
  %v2971 = vpack.c.b16 %v2935, %v2931
  %v2972 = vpack.c.b16 %v2940, %v2936
  %v2973 = vpack.c.b16 %v2941, %v2937
  %v2974 = vpack.c.b16 %v2942, %v2938
  %v2975 = vpack.c.b16 %v2943, %v2939
  %3008 = vmatprep.subr.bf16.mxu0 %v2945
  %3009 = vmatpush1.bf16.msra.mxu0 %v2944
  %3010 = vmatprep.subr.bf16.mxu0 %v2949
  %3011 = vmatpush1.bf16.msra.mxu0 %v2948
  %3012 = vmatprep.subr.bf16.mxu0 %v2953
  %3013 = vmatpush1.bf16.msra.mxu0 %v2952
  %3014 = vmatprep.subr.bf16.mxu0 %v2957
  %3015 = vmatpush1.bf16.msra.mxu0 %v2956
  %3016 = vmatprep.subr.bf16.mxu0 %v2961
  %3017 = vmatpush1.bf16.msra.mxu0 %v2960
  %3018 = vmatprep.subr.bf16.mxu0 %v2965
  %3019 = vmatpush1.bf16.msra.mxu0 %v2964
  %3020 = vmatprep.subr.bf16.mxu0 %v2969
  %3021 = vmatpush1.bf16.msra.mxu0 %v2968
  %3022 = vmatprep.subr.bf16.mxu0 %v2973
  %3023 = vmatpush1.bf16.msra.mxu0 %v2972
  %3024 = vmatprep.subr.bf16.mxu0 0
  %3025 = vmatpush1.bf16.msra.mxu0 0
  %3026 = vmatprep.subr.bf16.mxu0 0
  %3027 = vmatpush1.bf16.msra.mxu0 0
  %3028 = vmatprep.subr.bf16.mxu0 0
  %3029 = vmatpush1.bf16.msra.mxu0 0
  %3030 = vmatprep.subr.bf16.mxu0 0
  %3031 = vmatpush1.bf16.msra.mxu0 0
  %3032 = vmatprep.subr.bf16.mxu0 0
  %3033 = vmatpush1.bf16.msra.mxu0 0
  %3034 = vmatprep.subr.bf16.mxu0 0
  %3035 = vmatpush1.bf16.msra.mxu0 0
  %3036 = vmatprep.subr.bf16.mxu0 0
  %3037 = vmatpush1.bf16.msra.mxu0 0
  %3038 = vmatprep.subr.bf16.mxu0 0
  %3039 = vmatpush1.bf16.msra.mxu0 0
  %3040 = vmatprep.mubr.bf16.mxu0 0
  %3041 = vmatmul.mubr.bf16.gmra.mrb[0].mxu0 %v2790
  %v3042 = vpop.f32.mrb[0].mxu0
  %v3043 = vadd.f32 %v2831, %v3042
  %v3044 = vpop.f32.mrb[0].mxu0
  %v3045 = vadd.f32 %v2835, %v3044
  %v3046 = vpop.f32.mrb[0].mxu0
  %v3047 = vadd.f32 %v2831, %v3046
  %v3048 = vpop.f32.mrb[0].mxu0
  %v3049 = vadd.f32 %v2835, %v3048
  %3050 = vmatprep.mubr.bf16.mxu0 0
  %3051 = vmatmul.mubr.bf16.gmra.mrb[0].mxu0 %v2791
  %v3052 = vpop.f32.mrb[0].mxu0
  %v3053 = vadd.f32 %v2831, %v3052
  %v3054 = vpop.f32.mrb[0].mxu0
  %v3055 = vadd.f32 %v2835, %v3054
  %v3056 = vpop.f32.mrb[0].mxu0
  %v3057 = vadd.f32 %v2831, %v3056
  %v3058 = vpop.f32.mrb[0].mxu0
  %v3059 = vadd.f32 %v2835, %v3058
  %3060 = vmatprep.mubr.bf16.mxu0 0
  %3061 = vmatmul.mubr.bf16.gmra.mrb[0].mxu0 %v2792
  %v3062 = vpop.f32.mrb[0].mxu0
  %v3063 = vadd.f32 %v2831, %v3062
  %v3064 = vpop.f32.mrb[0].mxu0
  %v3065 = vadd.f32 %v2835, %v3064
  %v3066 = vpop.f32.mrb[0].mxu0
  %v3067 = vadd.f32 %v2831, %v3066
  %v3068 = vpop.f32.mrb[0].mxu0
  %v3069 = vadd.f32 %v2835, %v3068
  %3070 = vmatprep.mubr.bf16.mxu0 0
  %3071 = vmatmul.mubr.bf16.gmra.mrb[0].mxu0 %v2793
  %v3072 = vpop.f32.mrb[0].mxu0
  %v3073 = vadd.f32 %v2831, %v3072
  %v3074 = vpop.f32.mrb[0].mxu0
  %v3075 = vadd.f32 %v2835, %v3074
  %v3076 = vpop.f32.mrb[0].mxu0
  %v3077 = vadd.f32 %v2831, %v3076
  %v3078 = vpop.f32.mrb[0].mxu0
  %v3079 = vadd.f32 %v2835, %v3078
  %3080 = vdwg.mxu0
  %3081 = vmatprep.subr.bf16.mxu0 %v2947
  %3082 = vmatpush1.bf16.msra.mxu0 %v2946
  %3083 = vmatprep.subr.bf16.mxu0 %v2951
  %3084 = vmatpush1.bf16.msra.mxu0 %v2950
  %3085 = vmatprep.subr.bf16.mxu0 %v2955
  %3086 = vmatpush1.bf16.msra.mxu0 %v2954
  %3087 = vmatprep.subr.bf16.mxu0 %v2959
  %3088 = vmatpush1.bf16.msra.mxu0 %v2958
  %3089 = vmatprep.subr.bf16.mxu0 %v2963
  %3090 = vmatpush1.bf16.msra.mxu0 %v2962
  %3091 = vmatprep.subr.bf16.mxu0 %v2967
  %3092 = vmatpush1.bf16.msra.mxu0 %v2966
  %3093 = vmatprep.subr.bf16.mxu0 %v2971
  %3094 = vmatpush1.bf16.msra.mxu0 %v2970
  %3095 = vmatprep.subr.bf16.mxu0 %v2975
  %3096 = vmatpush1.bf16.msra.mxu0 %v2974
  %3097 = vmatprep.subr.bf16.mxu0 0
  %3098 = vmatpush1.bf16.msra.mxu0 0
  %3099 = vmatprep.subr.bf16.mxu0 0
  %3100 = vmatpush1.bf16.msra.mxu0 0
  %3101 = vmatprep.subr.bf16.mxu0 0
  %3102 = vmatpush1.bf16.msra.mxu0 0
  %3103 = vmatprep.subr.bf16.mxu0 0
  %3104 = vmatpush1.bf16.msra.mxu0 0
  %3105 = vmatprep.subr.bf16.mxu0 0
  %3106 = vmatpush1.bf16.msra.mxu0 0
  %3107 = vmatprep.subr.bf16.mxu0 0
  %3108 = vmatpush1.bf16.msra.mxu0 0
  %3109 = vmatprep.subr.bf16.mxu0 0
  %3110 = vmatpush1.bf16.msra.mxu0 0
  %3111 = vmatprep.subr.bf16.mxu0 0
  %3112 = vmatpush1.bf16.msra.mxu0 0
  %3113 = vmatprep.mubr.bf16.mxu0 0
  %3114 = vmatmul.mubr.bf16.gmra.mrb[0].mxu0 %v2790
  %v3115 = vpop.f32.mrb[0].mxu0
  %v3116 = vadd.f32 %v2839, %v3115
  %v3117 = vpop.f32.mrb[0].mxu0
  %v3118 = vadd.f32 %v2843, %v3117
  %v3119 = vpop.f32.mrb[0].mxu0
  %v3120 = vadd.f32 %v2839, %v3119
  %v3121 = vpop.f32.mrb[0].mxu0
  %v3122 = vadd.f32 %v2843, %v3121
  %3123 = vmatprep.mubr.bf16.mxu0 0
  %3124 = vmatmul.mubr.bf16.gmra.mrb[0].mxu0 %v2791
  %v3125 = vpop.f32.mrb[0].mxu0
  %v3126 = vadd.f32 %v2839, %v3125
  %v3127 = vpop.f32.mrb[0].mxu0
  %v3128 = vadd.f32 %v2843, %v3127
  %v3129 = vpop.f32.mrb[0].mxu0
  %v3130 = vadd.f32 %v2839, %v3129
  %v3131 = vpop.f32.mrb[0].mxu0
  %v3132 = vadd.f32 %v2843, %v3131
  %3133 = vmatprep.mubr.bf16.mxu0 0
  %3134 = vmatmul.mubr.bf16.gmra.mrb[0].mxu0 %v2792
  %v3135 = vpop.f32.mrb[0].mxu0
  %v3136 = vadd.f32 %v2839, %v3135
  %v3137 = vpop.f32.mrb[0].mxu0
  %v3138 = vadd.f32 %v2843, %v3137
  %v3139 = vpop.f32.mrb[0].mxu0
  %v3140 = vadd.f32 %v2839, %v3139
  %v3141 = vpop.f32.mrb[0].mxu0
  %v3142 = vadd.f32 %v2843, %v3141
  %3143 = vmatprep.mubr.bf16.mxu0 0
  %3144 = vmatmul.mubr.bf16.gmra.mrb[0].mxu0 %v2793
  %v3145 = vpop.f32.mrb[0].mxu0
  %v3146 = vadd.f32 %v2839, %v3145
  %v3147 = vpop.f32.mrb[0].mxu0
  %v3148 = vadd.f32 %v2843, %v3147
  %v3149 = vpop.f32.mrb[0].mxu0
  %v3150 = vadd.f32 %v2839, %v3149
  %v3151 = vpop.f32.mrb[0].mxu0
  %v3152 = vadd.f32 %v2843, %v3151
  %3153 = vdwg.mxu0
  %3154 = vst [vmem:[#allocation2] sm:$0xff] %v3043
  %3155 = vst [vmem:[#allocation2 + $0x8] sm:$0xff] %v3045
  %3156 = vst [vmem:[#allocation2 + $0x10] sm:$0xff] %v3116
  %3157 = vst [vmem:[#allocation2 + $0x18] sm:$0xff] %v3118
  %3158 = vst [vmem:[#allocation2 + $0x20] sm:$0xff] %v3047
  %3159 = vst [vmem:[#allocation2 + $0x28] sm:$0xff] %v3049
  %3160 = vst [vmem:[#allocation2 + $0x30] sm:$0xff] %v3120
  %3161 = vst [vmem:[#allocation2 + $0x38] sm:$0xff] %v3122
  %3162 = vst [vmem:[#allocation2 + $0x40] sm:$0xff] %v3053
  %3163 = vst [vmem:[#allocation2 + $0x48] sm:$0xff] %v3055
  %3164 = vst [vmem:[#allocation2 + $0x50] sm:$0xff] %v3126
  %3165 = vst [vmem:[#allocation2 + $0x58] sm:$0xff] %v3128
  %3166 = vst [vmem:[#allocation2 + $0x60] sm:$0xff] %v3057
  %3167 = vst [vmem:[#allocation2 + $0x68] sm:$0xff] %v3059
  %3168 = vst [vmem:[#allocation2 + $0x70] sm:$0xff] %v3130
  %3169 = vst [vmem:[#allocation2 + $0x78] sm:$0xff] %v3132
  %3170 = vst [vmem:[#allocation2 + $0x80] sm:$0xff] %v3063
  %3171 = vst [vmem:[#allocation2 + $0x88] sm:$0xff] %v3065
  %3172 = vst [vmem:[#allocation2 + $0x90] sm:$0xff] %v3136
  %3173 = vst [vmem:[#allocation2 + $0x98] sm:$0xff] %v3138
  %3174 = vst [vmem:[#allocation2 + $0xa0] sm:$0xff] %v3067
  %3175 = vst [vmem:[#allocation2 + $0xa8] sm:$0xff] %v3069
  %3176 = vst [vmem:[#allocation2 + $0xb0] sm:$0xff] %v3140
  %3177 = vst [vmem:[#allocation2 + $0xb8] sm:$0xff] %v3142
  %3178 = vst [vmem:[#allocation2 + $0xc0] sm:$0xff] %v3073
  %3179 = vst [vmem:[#allocation2 + $0xc8] sm:$0xff] %v3075
  %3180 = vst [vmem:[#allocation2 + $0xd0] sm:$0xff] %v3146
  %3181 = vst [vmem:[#allocation2 + $0xd8] sm:$0xff] %v3148
  %3182 = vst [vmem:[#allocation2 + $0xe0] sm:$0xff] %v3077
  %3183 = vst [vmem:[#allocation2 + $0xe8] sm:$0xff] %v3079
  %3184 = vst [vmem:[#allocation2 + $0xf0] sm:$0xff] %v3150
  %3185 = vst [vmem:[#allocation2 + $0xf8] sm:$0xff] %v3152
  %3186 = vst [vmem:[#allocation4] sm:$0xff] 0.0
  %3187 = vst [vmem:[#allocation5] sm:$0xff] 0.0
  %v3188 = vld [vmem:[#allocation4] sm:$0xff]
  %v3189 = vpack.c.bf16 %v3188, %v3188
  %v3190 = vld [vmem:[%s307] sm:$0xff]
  %v3191 = vld [vmem:[%s307 + $0x8] sm:$0xff]
  %v3192 = vld [vmem:[%s307 + $0x10] sm:$0xff]
  %v3193 = vld [vmem:[%s307 + $0x18] sm:$0xff]
  %v3194 = vld [vmem:[%s5] sm:$0xff]
  %v3195 = vld [vmem:[%s5 + $0x8] sm:$0xff]
  %v3196 = vld [vmem:[%s5 + $0x10] sm:$0xff]
  %v3197 = vld [vmem:[%s5 + $0x18] sm:$0xff]
  %v3198 = vld [vmem:[%s5 + $0x20] sm:$0xff]
  %v3199 = vld [vmem:[%s5 + $0x28] sm:$0xff]
  %v3200 = vld [vmem:[%s5 + $0x30] sm:$0xff]
  %v3201 = vld [vmem:[%s5 + $0x38] sm:$0xff]
  %v3202 = vld [vmem:[%s5 + $0x40] sm:$0xff]
  %v3203 = vld [vmem:[%s5 + $0x48] sm:$0xff]
  %v3204 = vld [vmem:[%s5 + $0x50] sm:$0xff]
  %v3205 = vld [vmem:[%s5 + $0x58] sm:$0xff]
  %v3206 = vld [vmem:[%s5 + $0x60] sm:$0xff]
  %v3207 = vld [vmem:[%s5 + $0x68] sm:$0xff]
  %v3208 = vld [vmem:[%s5 + $0x70] sm:$0xff]
  %v3209 = vld [vmem:[%s5 + $0x78] sm:$0xff]
  %v3210 = vld [vmem:[%s5 + $0x80] sm:$0xff]
  %v3211 = vld [vmem:[%s5 + $0x88] sm:$0xff]
  %v3212 = vld [vmem:[%s5 + $0x90] sm:$0xff]
  %v3213 = vld [vmem:[%s5 + $0x98] sm:$0xff]
  %v3214 = vld [vmem:[%s5 + $0xa0] sm:$0xff]
  %v3215 = vld [vmem:[%s5 + $0xa8] sm:$0xff]
  %v3216 = vld [vmem:[%s5 + $0xb0] sm:$0xff]
  %v3217 = vld [vmem:[%s5 + $0xb8] sm:$0xff]
  %v3218 = vld [vmem:[%s5 + $0xc0] sm:$0xff]
  %v3219 = vld [vmem:[%s5 + $0xc8] sm:$0xff]
  %v3220 = vld [vmem:[%s5 + $0xd0] sm:$0xff]
  %v3221 = vld [vmem:[%s5 + $0xd8] sm:$0xff]
  %v3222 = vld [vmem:[%s5 + $0xe0] sm:$0xff]
  %v3223 = vld [vmem:[%s5 + $0xe8] sm:$0xff]
  %v3224 = vld [vmem:[%s5 + $0xf0] sm:$0xff]
  %v3225 = vld [vmem:[%s5 + $0xf8] sm:$0xff]
  %v3258 = vunpack.c.l.b16 %v3194
  %v3259 = vunpack.c.h.b16 %v3194
  %v3260 = vunpack.c.l.b16 %v3195
  %v3261 = vunpack.c.h.b16 %v3195
  %v3262 = vunpack.c.l.b16 %v3196
  %v3263 = vunpack.c.h.b16 %v3196
  %v3264 = vunpack.c.l.b16 %v3197
  %v3265 = vunpack.c.h.b16 %v3197
  %v3266 = vunpack.c.l.b16 %v3198
  %v3267 = vunpack.c.h.b16 %v3198
  %v3268 = vunpack.c.l.b16 %v3199
  %v3269 = vunpack.c.h.b16 %v3199
  %v3270 = vunpack.c.l.b16 %v3200
  %v3271 = vunpack.c.h.b16 %v3200
  %v3272 = vunpack.c.l.b16 %v3201
  %v3273 = vunpack.c.h.b16 %v3201
  %v3274 = vunpack.c.l.b16 %v3202
  %v3275 = vunpack.c.h.b16 %v3202
  %v3276 = vunpack.c.l.b16 %v3203
  %v3277 = vunpack.c.h.b16 %v3203
  %v3278 = vunpack.c.l.b16 %v3204
  %v3279 = vunpack.c.h.b16 %v3204
  %v3280 = vunpack.c.l.b16 %v3205
  %v3281 = vunpack.c.h.b16 %v3205
  %v3282 = vunpack.c.l.b16 %v3206
  %v3283 = vunpack.c.h.b16 %v3206
  %v3284 = vunpack.c.l.b16 %v3207
  %v3285 = vunpack.c.h.b16 %v3207
  %v3286 = vunpack.c.l.b16 %v3208
  %v3287 = vunpack.c.h.b16 %v3208
  %v3288 = vunpack.c.l.b16 %v3209
  %v3289 = vunpack.c.h.b16 %v3209
  %v3290 = vunpack.c.l.b16 %v3210
  %v3291 = vunpack.c.h.b16 %v3210
  %v3292 = vunpack.c.l.b16 %v3211
  %v3293 = vunpack.c.h.b16 %v3211
  %v3294 = vunpack.c.l.b16 %v3212
  %v3295 = vunpack.c.h.b16 %v3212
  %v3296 = vunpack.c.l.b16 %v3213
  %v3297 = vunpack.c.h.b16 %v3213
  %v3298 = vunpack.c.l.b16 %v3214
  %v3299 = vunpack.c.h.b16 %v3214
  %v3300 = vunpack.c.l.b16 %v3215
  %v3301 = vunpack.c.h.b16 %v3215
  %v3302 = vunpack.c.l.b16 %v3216
  %v3303 = vunpack.c.h.b16 %v3216
  %v3304 = vunpack.c.l.b16 %v3217
  %v3305 = vunpack.c.h.b16 %v3217
  %v3306 = vunpack.c.l.b16 %v3218
  %v3307 = vunpack.c.h.b16 %v3218
  %v3308 = vunpack.c.l.b16 %v3219
  %v3309 = vunpack.c.h.b16 %v3219
  %v3310 = vunpack.c.l.b16 %v3220
  %v3311 = vunpack.c.h.b16 %v3220
  %v3312 = vunpack.c.l.b16 %v3221
  %v3313 = vunpack.c.h.b16 %v3221
  %v3314 = vunpack.c.l.b16 %v3222
  %v3315 = vunpack.c.h.b16 %v3222
  %v3316 = vunpack.c.l.b16 %v3223
  %v3317 = vunpack.c.h.b16 %v3223
  %v3318 = vunpack.c.l.b16 %v3224
  %v3319 = vunpack.c.h.b16 %v3224
  %v3320 = vunpack.c.l.b16 %v3225
  %v3321 = vunpack.c.h.b16 %v3225
  %v3322 = vpack.c.b16 %v3262, %v3258
  %v3323 = vpack.c.b16 %v3263, %v3259
  %v3324 = vpack.c.b16 %v3264, %v3260
  %v3325 = vpack.c.b16 %v3265, %v3261
  %v3326 = vpack.c.b16 %v3270, %v3266
  %v3327 = vpack.c.b16 %v3271, %v3267
  %v3328 = vpack.c.b16 %v3272, %v3268
  %v3329 = vpack.c.b16 %v3273, %v3269
  %v3330 = vpack.c.b16 %v3278, %v3274
  %v3331 = vpack.c.b16 %v3279, %v3275
  %v3332 = vpack.c.b16 %v3280, %v3276
  %v3333 = vpack.c.b16 %v3281, %v3277
  %v3334 = vpack.c.b16 %v3286, %v3282
  %v3335 = vpack.c.b16 %v3287, %v3283
  %v3336 = vpack.c.b16 %v3288, %v3284
  %v3337 = vpack.c.b16 %v3289, %v3285
  %v3338 = vpack.c.b16 %v3294, %v3290
  %v3339 = vpack.c.b16 %v3295, %v3291
  %v3340 = vpack.c.b16 %v3296, %v3292
  %v3341 = vpack.c.b16 %v3297, %v3293
  %v3342 = vpack.c.b16 %v3302, %v3298
  %v3343 = vpack.c.b16 %v3303, %v3299
  %v3344 = vpack.c.b16 %v3304, %v3300
  %v3345 = vpack.c.b16 %v3305, %v3301
  %v3346 = vpack.c.b16 %v3310, %v3306
  %v3347 = vpack.c.b16 %v3311, %v3307
  %v3348 = vpack.c.b16 %v3312, %v3308
  %v3349 = vpack.c.b16 %v3313, %v3309
  %v3350 = vpack.c.b16 %v3318, %v3314
  %v3351 = vpack.c.b16 %v3319, %v3315
  %v3352 = vpack.c.b16 %v3320, %v3316
  %v3353 = vpack.c.b16 %v3321, %v3317
  %3386 = vmatprep.subr.bf16.mxu0 %v3323
  %3387 = vmatpush1.bf16.msra.mxu0 %v3322
  %3388 = vmatprep.subr.bf16.mxu0 %v3327
  %3389 = vmatpush1.bf16.msra.mxu0 %v3326
  %3390 = vmatprep.subr.bf16.mxu0 %v3331
  %3391 = vmatpush1.bf16.msra.mxu0 %v3330
  %3392 = vmatprep.subr.bf16.mxu0 %v3335
  %3393 = vmatpush1.bf16.msra.mxu0 %v3334
  %3394 = vmatprep.subr.bf16.mxu0 %v3339
  %3395 = vmatpush1.bf16.msra.mxu0 %v3338
  %3396 = vmatprep.subr.bf16.mxu0 %v3343
  %3397 = vmatpush1.bf16.msra.mxu0 %v3342
  %3398 = vmatprep.subr.bf16.mxu0 %v3347
  %3399 = vmatpush1.bf16.msra.mxu0 %v3346
  %3400 = vmatprep.subr.bf16.mxu0 %v3351
  %3401 = vmatpush1.bf16.msra.mxu0 %v3350
  %3402 = vmatprep.subr.bf16.mxu0 0
  %3403 = vmatpush1.bf16.msra.mxu0 0
  %3404 = vmatprep.subr.bf16.mxu0 0
  %3405 = vmatpush1.bf16.msra.mxu0 0
  %3406 = vmatprep.subr.bf16.mxu0 0
  %3407 = vmatpush1.bf16.msra.mxu0 0
  %3408 = vmatprep.subr.bf16.mxu0 0
  %3409 = vmatpush1.bf16.msra.mxu0 0
  %3410 = vmatprep.subr.bf16.mxu0 0
  %3411 = vmatpush1.bf16.msra.mxu0 0
  %3412 = vmatprep.subr.bf16.mxu0 0
  %3413 = vmatpush1.bf16.msra.mxu0 0
  %3414 = vmatprep.subr.bf16.mxu0 0
  %3415 = vmatpush1.bf16.msra.mxu0 0
  %3416 = vmatprep.subr.bf16.mxu0 0
  %3417 = vmatpush1.bf16.msra.mxu0 0
  %3418 = vmatprep.mubr.bf16.mxu0 0
  %3419 = vmatmul.mubr.bf16.gmra.mrb[0].mxu0 %v3189
  %v3420 = vpop.f32.mrb[0].mxu0
  %v3421 = vadd.f32 0.0, %v3420
  %v3422 = vpop.f32.mrb[0].mxu0
  %v3423 = vadd.f32 0.0, %v3422
  %v3424 = vpop.f32.mrb[0].mxu0
  %v3425 = vpop.f32.mrb[0].mxu0
  %3426 = vdwg.mxu0
  %3427 = vmatprep.subr.bf16.mxu0 %v3325
  %3428 = vmatpush1.bf16.msra.mxu0 %v3324
  %3429 = vmatprep.subr.bf16.mxu0 %v3329
  %3430 = vmatpush1.bf16.msra.mxu0 %v3328
  %3431 = vmatprep.subr.bf16.mxu0 %v3333
  %3432 = vmatpush1.bf16.msra.mxu0 %v3332
  %3433 = vmatprep.subr.bf16.mxu0 %v3337
  %3434 = vmatpush1.bf16.msra.mxu0 %v3336
  %3435 = vmatprep.subr.bf16.mxu0 %v3341
  %3436 = vmatpush1.bf16.msra.mxu0 %v3340
  %3437 = vmatprep.subr.bf16.mxu0 %v3345
  %3438 = vmatpush1.bf16.msra.mxu0 %v3344
  %3439 = vmatprep.subr.bf16.mxu0 %v3349
  %3440 = vmatpush1.bf16.msra.mxu0 %v3348
  %3441 = vmatprep.subr.bf16.mxu0 %v3353
  %3442 = vmatpush1.bf16.msra.mxu0 %v3352
  %3443 = vmatprep.subr.bf16.mxu0 0
  %3444 = vmatpush1.bf16.msra.mxu0 0
  %3445 = vmatprep.subr.bf16.mxu0 0
  %3446 = vmatpush1.bf16.msra.mxu0 0
  %3447 = vmatprep.subr.bf16.mxu0 0
  %3448 = vmatpush1.bf16.msra.mxu0 0
  %3449 = vmatprep.subr.bf16.mxu0 0
  %3450 = vmatpush1.bf16.msra.mxu0 0
  %3451 = vmatprep.subr.bf16.mxu0 0
  %3452 = vmatpush1.bf16.msra.mxu0 0
  %3453 = vmatprep.subr.bf16.mxu0 0
  %3454 = vmatpush1.bf16.msra.mxu0 0
  %3455 = vmatprep.subr.bf16.mxu0 0
  %3456 = vmatpush1.bf16.msra.mxu0 0
  %3457 = vmatprep.subr.bf16.mxu0 0
  %3458 = vmatpush1.bf16.msra.mxu0 0
  %3459 = vmatprep.mubr.bf16.mxu0 0
  %3460 = vmatmul.mubr.bf16.gmra.mrb[0].mxu0 %v3189
  %v3461 = vpop.f32.mrb[0].mxu0
  %v3462 = vadd.f32 0.0, %v3461
  %v3463 = vpop.f32.mrb[0].mxu0
  %v3464 = vadd.f32 0.0, %v3463
  %v3465 = vpop.f32.mrb[0].mxu0
  %v3466 = vpop.f32.mrb[0].mxu0
  %3467 = vdwg.mxu0
  %v3468 = vadd.f32 %v3190, %v3421
  %v3469 = vadd.f32 %v3191, %v3423
  %v3470 = vadd.f32 %v3192, %v3462
  %v3471 = vadd.f32 %v3193, %v3464
  %v3472 = vmul.f32 %v3468, 0.5
  %v3473 = vmul.f32 %v3469, 0.5
  %v3474 = vmul.f32 %v3470, 0.5
  %v3475 = vtanh.pop %v3472
  %v3476 = vtanh.pop %v3473
  %v3477 = vtanh.pop %v3474
  %v3478 = vmul.f32 %v3475, 0.5
  %v3479 = vmul.f32 %v3476, 0.5
  %v3480 = vmul.f32 %v3477, 0.5
  %v3481 = vadd.f32 %v3478, 0.5
  %v3482 = vadd.f32 %v3479, 0.5
  %v3483 = vadd.f32 %v3480, 0.5
  %v3484 = vtanh.pop %v3471
  %v3485 = vld [vmem:[#allocation5] sm:$0xff]
  %v3486 = vmul.f32 %v3482, %v3485
  %v3487 = vmul.f32 %v3481, %v3484
  %v3488 = vadd.f32 %v3486, %v3487
  %v3489 = vtanh.pop %v3488
  %v3490 = vmul.f32 %v3483, %v3489
  %3491 = vst [vmem:[#allocation5] sm:$0xff] %v3488
  %3492 = vst [vmem:[#allocation4] sm:$0xff] %v3490
  %v3493 = vld [vmem:[#allocation4] sm:$0xff]
  %v3494 = vpack.c.bf16 %v3493, %v3493
  %v3495 = vld [vmem:[%s616] sm:$0xff]
  %v3496 = vld [vmem:[%s616 + $0x8] sm:$0xff]
  %v3497 = vld [vmem:[%s616 + $0x10] sm:$0xff]
  %v3498 = vld [vmem:[%s616 + $0x18] sm:$0xff]
  %v3499 = vld [vmem:[%s5] sm:$0xff]
  %v3500 = vld [vmem:[%s5 + $0x8] sm:$0xff]
  %v3501 = vld [vmem:[%s5 + $0x10] sm:$0xff]
  %v3502 = vld [vmem:[%s5 + $0x18] sm:$0xff]
  %v3503 = vld [vmem:[%s5 + $0x20] sm:$0xff]
  %v3504 = vld [vmem:[%s5 + $0x28] sm:$0xff]
  %v3505 = vld [vmem:[%s5 + $0x30] sm:$0xff]
  %v3506 = vld [vmem:[%s5 + $0x38] sm:$0xff]
  %v3507 = vld [vmem:[%s5 + $0x40] sm:$0xff]
  %v3508 = vld [vmem:[%s5 + $0x48] sm:$0xff]
  %v3509 = vld [vmem:[%s5 + $0x50] sm:$0xff]
  %v3510 = vld [vmem:[%s5 + $0x58] sm:$0xff]
  %v3511 = vld [vmem:[%s5 + $0x60] sm:$0xff]
  %v3512 = vld [vmem:[%s5 + $0x68] sm:$0xff]
  %v3513 = vld [vmem:[%s5 + $0x70] sm:$0xff]
  %v3514 = vld [vmem:[%s5 + $0x78] sm:$0xff]
  %v3515 = vld [vmem:[%s5 + $0x80] sm:$0xff]
  %v3516 = vld [vmem:[%s5 + $0x88] sm:$0xff]
  %v3517 = vld [vmem:[%s5 + $0x90] sm:$0xff]
  %v3518 = vld [vmem:[%s5 + $0x98] sm:$0xff]
  %v3519 = vld [vmem:[%s5 + $0xa0] sm:$0xff]
  %v3520 = vld [vmem:[%s5 + $0xa8] sm:$0xff]
  %v3521 = vld [vmem:[%s5 + $0xb0] sm:$0xff]
  %v3522 = vld [vmem:[%s5 + $0xb8] sm:$0xff]
  %v3523 = vld [vmem:[%s5 + $0xc0] sm:$0xff]
  %v3524 = vld [vmem:[%s5 + $0xc8] sm:$0xff]
  %v3525 = vld [vmem:[%s5 + $0xd0] sm:$0xff]
  %v3526 = vld [vmem:[%s5 + $0xd8] sm:$0xff]
  %v3527 = vld [vmem:[%s5 + $0xe0] sm:$0xff]
  %v3528 = vld [vmem:[%s5 + $0xe8] sm:$0xff]
  %v3529 = vld [vmem:[%s5 + $0xf0] sm:$0xff]
  %v3530 = vld [vmem:[%s5 + $0xf8] sm:$0xff]
  %v3563 = vunpack.c.l.b16 %v3499
  %v3564 = vunpack.c.h.b16 %v3499
  %v3565 = vunpack.c.l.b16 %v3500
  %v3566 = vunpack.c.h.b16 %v3500
  %v3567 = vunpack.c.l.b16 %v3501
  %v3568 = vunpack.c.h.b16 %v3501
  %v3569 = vunpack.c.l.b16 %v3502
  %v3570 = vunpack.c.h.b16 %v3502
  %v3571 = vunpack.c.l.b16 %v3503
  %v3572 = vunpack.c.h.b16 %v3503
  %v3573 = vunpack.c.l.b16 %v3504
  %v3574 = vunpack.c.h.b16 %v3504
  %v3575 = vunpack.c.l.b16 %v3505
  %v3576 = vunpack.c.h.b16 %v3505
  %v3577 = vunpack.c.l.b16 %v3506
  %v3578 = vunpack.c.h.b16 %v3506
  %v3579 = vunpack.c.l.b16 %v3507
  %v3580 = vunpack.c.h.b16 %v3507
  %v3581 = vunpack.c.l.b16 %v3508
  %v3582 = vunpack.c.h.b16 %v3508
  %v3583 = vunpack.c.l.b16 %v3509
  %v3584 = vunpack.c.h.b16 %v3509
  %v3585 = vunpack.c.l.b16 %v3510
  %v3586 = vunpack.c.h.b16 %v3510
  %v3587 = vunpack.c.l.b16 %v3511
  %v3588 = vunpack.c.h.b16 %v3511
  %v3589 = vunpack.c.l.b16 %v3512
  %v3590 = vunpack.c.h.b16 %v3512
  %v3591 = vunpack.c.l.b16 %v3513
  %v3592 = vunpack.c.h.b16 %v3513
  %v3593 = vunpack.c.l.b16 %v3514
  %v3594 = vunpack.c.h.b16 %v3514
  %v3595 = vunpack.c.l.b16 %v3515
  %v3596 = vunpack.c.h.b16 %v3515
  %v3597 = vunpack.c.l.b16 %v3516
  %v3598 = vunpack.c.h.b16 %v3516
  %v3599 = vunpack.c.l.b16 %v3517
  %v3600 = vunpack.c.h.b16 %v3517
  %v3601 = vunpack.c.l.b16 %v3518
  %v3602 = vunpack.c.h.b16 %v3518
  %v3603 = vunpack.c.l.b16 %v3519
  %v3604 = vunpack.c.h.b16 %v3519
  %v3605 = vunpack.c.l.b16 %v3520
  %v3606 = vunpack.c.h.b16 %v3520
  %v3607 = vunpack.c.l.b16 %v3521
  %v3608 = vunpack.c.h.b16 %v3521
  %v3609 = vunpack.c.l.b16 %v3522
  %v3610 = vunpack.c.h.b16 %v3522
  %v3611 = vunpack.c.l.b16 %v3523
  %v3612 = vunpack.c.h.b16 %v3523
  %v3613 = vunpack.c.l.b16 %v3524
  %v3614 = vunpack.c.h.b16 %v3524
  %v3615 = vunpack.c.l.b16 %v3525
  %v3616 = vunpack.c.h.b16 %v3525
  %v3617 = vunpack.c.l.b16 %v3526
  %v3618 = vunpack.c.h.b16 %v3526
  %v3619 = vunpack.c.l.b16 %v3527
  %v3620 = vunpack.c.h.b16 %v3527
  %v3621 = vunpack.c.l.b16 %v3528
  %v3622 = vunpack.c.h.b16 %v3528
  %v3623 = vunpack.c.l.b16 %v3529
  %v3624 = vunpack.c.h.b16 %v3529
  %v3625 = vunpack.c.l.b16 %v3530
  %v3626 = vunpack.c.h.b16 %v3530
  %v3627 = vpack.c.b16 %v3567, %v3563
  %v3628 = vpack.c.b16 %v3568, %v3564
  %v3629 = vpack.c.b16 %v3569, %v3565
  %v3630 = vpack.c.b16 %v3570, %v3566
  %v3631 = vpack.c.b16 %v3575, %v3571
  %v3632 = vpack.c.b16 %v3576, %v3572
  %v3633 = vpack.c.b16 %v3577, %v3573
  %v3634 = vpack.c.b16 %v3578, %v3574
  %v3635 = vpack.c.b16 %v3583, %v3579
  %v3636 = vpack.c.b16 %v3584, %v3580
  %v3637 = vpack.c.b16 %v3585, %v3581
  %v3638 = vpack.c.b16 %v3586, %v3582
  %v3639 = vpack.c.b16 %v3591, %v3587
  %v3640 = vpack.c.b16 %v3592, %v3588
  %v3641 = vpack.c.b16 %v3593, %v3589
  %v3642 = vpack.c.b16 %v3594, %v3590
  %v3643 = vpack.c.b16 %v3599, %v3595
  %v3644 = vpack.c.b16 %v3600, %v3596
  %v3645 = vpack.c.b16 %v3601, %v3597
  %v3646 = vpack.c.b16 %v3602, %v3598
  %v3647 = vpack.c.b16 %v3607, %v3603
  %v3648 = vpack.c.b16 %v3608, %v3604
  %v3649 = vpack.c.b16 %v3609, %v3605
  %v3650 = vpack.c.b16 %v3610, %v3606
  %v3651 = vpack.c.b16 %v3615, %v3611
  %v3652 = vpack.c.b16 %v3616, %v3612
  %v3653 = vpack.c.b16 %v3617, %v3613
  %v3654 = vpack.c.b16 %v3618, %v3614
  %v3655 = vpack.c.b16 %v3623, %v3619
  %v3656 = vpack.c.b16 %v3624, %v3620
  %v3657 = vpack.c.b16 %v3625, %v3621
  %v3658 = vpack.c.b16 %v3626, %v3622
  %3691 = vmatprep.subr.bf16.mxu0 %v3628
  %3692 = vmatpush1.bf16.msra.mxu0 %v3627
  %3693 = vmatprep.subr.bf16.mxu0 %v3632
  %3694 = vmatpush1.bf16.msra.mxu0 %v3631
  %3695 = vmatprep.subr.bf16.mxu0 %v3636
  %3696 = vmatpush1.bf16.msra.mxu0 %v3635
  %3697 = vmatprep.subr.bf16.mxu0 %v3640
  %3698 = vmatpush1.bf16.msra.mxu0 %v3639
  %3699 = vmatprep.subr.bf16.mxu0 %v3644
  %3700 = vmatpush1.bf16.msra.mxu0 %v3643
  %3701 = vmatprep.subr.bf16.mxu0 %v3648
  %3702 = vmatpush1.bf16.msra.mxu0 %v3647
  %3703 = vmatprep.subr.bf16.mxu0 %v3652
  %3704 = vmatpush1.bf16.msra.mxu0 %v3651
  %3705 = vmatprep.subr.bf16.mxu0 %v3656
  %3706 = vmatpush1.bf16.msra.mxu0 %v3655
  %3707 = vmatprep.subr.bf16.mxu0 0
  %3708 = vmatpush1.bf16.msra.mxu0 0
  %3709 = vmatprep.subr.bf16.mxu0 0
  %3710 = vmatpush1.bf16.msra.mxu0 0
  %3711 = vmatprep.subr.bf16.mxu0 0
  %3712 = vmatpush1.bf16.msra.mxu0 0
  %3713 = vmatprep.subr.bf16.mxu0 0
  %3714 = vmatpush1.bf16.msra.mxu0 0
  %3715 = vmatprep.subr.bf16.mxu0 0
  %3716 = vmatpush1.bf16.msra.mxu0 0
  %3717 = vmatprep.subr.bf16.mxu0 0
  %3718 = vmatpush1.bf16.msra.mxu0 0
  %3719 = vmatprep.subr.bf16.mxu0 0
  %3720 = vmatpush1.bf16.msra.mxu0 0
  %3721 = vmatprep.subr.bf16.mxu0 0
  %3722 = vmatpush1.bf16.msra.mxu0 0
  %3723 = vmatprep.mubr.bf16.mxu0 0
  %3724 = vmatmul.mubr.bf16.gmra.mrb[0].mxu0 %v3494
  %v3725 = vpop.f32.mrb[0].mxu0
  %v3726 = vadd.f32 0.0, %v3725
  %v3727 = vpop.f32.mrb[0].mxu0
  %v3728 = vadd.f32 0.0, %v3727
  %v3729 = vpop.f32.mrb[0].mxu0
  %v3730 = vpop.f32.mrb[0].mxu0
  %3731 = vdwg.mxu0
  %3732 = vmatprep.subr.bf16.mxu0 %v3630
  %3733 = vmatpush1.bf16.msra.mxu0 %v3629
  %3734 = vmatprep.subr.bf16.mxu0 %v3634
  %3735 = vmatpush1.bf16.msra.mxu0 %v3633
  %3736 = vmatprep.subr.bf16.mxu0 %v3638
  %3737 = vmatpush1.bf16.msra.mxu0 %v3637
  %3738 = vmatprep.subr.bf16.mxu0 %v3642
  %3739 = vmatpush1.bf16.msra.mxu0 %v3641
  %3740 = vmatprep.subr.bf16.mxu0 %v3646
  %3741 = vmatpush1.bf16.msra.mxu0 %v3645
  %3742 = vmatprep.subr.bf16.mxu0 %v3650
  %3743 = vmatpush1.bf16.msra.mxu0 %v3649
  %3744 = vmatprep.subr.bf16.mxu0 %v3654
  %3745 = vmatpush1.bf16.msra.mxu0 %v3653
  %3746 = vmatprep.subr.bf16.mxu0 %v3658
  %3747 = vmatpush1.bf16.msra.mxu0 %v3657
  %3748 = vmatprep.subr.bf16.mxu0 0
  %3749 = vmatpush1.bf16.msra.mxu0 0
  %3750 = vmatprep.subr.bf16.mxu0 0
  %3751 = vmatpush1.bf16.msra.mxu0 0
  %3752 = vmatprep.subr.bf16.mxu0 0
  %3753 = vmatpush1.bf16.msra.mxu0 0
  %3754 = vmatprep.subr.bf16.mxu0 0
  %3755 = vmatpush1.bf16.msra.mxu0 0
  %3756 = vmatprep.subr.bf16.mxu0 0
  %3757 = vmatpush1.bf16.msra.mxu0 0
  %3758 = vmatprep.subr.bf16.mxu0 0
  %3759 = vmatpush1.bf16.msra.mxu0 0
  %3760 = vmatprep.subr.bf16.mxu0 0
  %3761 = vmatpush1.bf16.msra.mxu0 0
  %3762 = vmatprep.subr.bf16.mxu0 0
  %3763 = vmatpush1.bf16.msra.mxu0 0
  %3764 = vmatprep.mubr.bf16.mxu0 0
  %3765 = vmatmul.mubr.bf16.gmra.mrb[0].mxu0 %v3494
  %v3766 = vpop.f32.mrb[0].mxu0
  %v3767 = vadd.f32 0.0, %v3766
  %v3768 = vpop.f32.mrb[0].mxu0
  %v3769 = vadd.f32 0.0, %v3768
  %v3770 = vpop.f32.mrb[0].mxu0
  %v3771 = vpop.f32.mrb[0].mxu0
  %3772 = vdwg.mxu0
  %v3773 = vadd.f32 %v3495, %v3726
  %v3774 = vadd.f32 %v3496, %v3728
  %v3775 = vadd.f32 %v3497, %v3767
  %v3776 = vadd.f32 %v3498, %v3769
  %v3777 = vmul.f32 %v3773, 0.5
  %v3778 = vmul.f32 %v3774, 0.5
  %v3779 = vmul.f32 %v3775, 0.5
  %v3780 = vtanh.pop %v3777
  %v3781 = vtanh.pop %v3778
  %v3782 = vtanh.pop %v3779
  %v3783 = vmul.f32 %v3780, 0.5
  %v3784 = vmul.f32 %v3781, 0.5
  %v3785 = vmul.f32 %v3782, 0.5
  %v3786 = vadd.f32 %v3783, 0.5
  %v3787 = vadd.f32 %v3784, 0.5
  %v3788 = vadd.f32 %v3785, 0.5
  %v3789 = vtanh.pop %v3776
  %v3790 = vld [vmem:[#allocation5] sm:$0xff]
  %v3791 = vmul.f32 %v3787, %v3790
  %v3792 = vmul.f32 %v3786, %v3789
  %v3793 = vadd.f32 %v3791, %v3792
  %v3794 = vtanh.pop %v3793
  %v3795 = vmul.f32 %v3788, %v3794
  %3796 = vst [vmem:[#allocation5] sm:$0xff] %v3793
  %3797 = vst [vmem:[#allocation4] sm:$0xff] %v3795
  %v3798 = vld [vmem:[#allocation4] sm:$0xff]
  %v3799 = vpack.c.bf16 %v3798, %v3798
  %v3800 = vld [vmem:[%s926] sm:$0xff]
  %v3801 = vld [vmem:[%s926 + $0x8] sm:$0xff]
  %v3802 = vld [vmem:[%s926 + $0x10] sm:$0xff]
  %v3803 = vld [vmem:[%s926 + $0x18] sm:$0xff]
  %v3804 = vld [vmem:[%s5] sm:$0xff]
  %v3805 = vld [vmem:[%s5 + $0x8] sm:$0xff]
  %v3806 = vld [vmem:[%s5 + $0x10] sm:$0xff]
  %v3807 = vld [vmem:[%s5 + $0x18] sm:$0xff]
  %v3808 = vld [vmem:[%s5 + $0x20] sm:$0xff]
  %v3809 = vld [vmem:[%s5 + $0x28] sm:$0xff]
  %v3810 = vld [vmem:[%s5 + $0x30] sm:$0xff]
  %v3811 = vld [vmem:[%s5 + $0x38] sm:$0xff]
  %v3812 = vld [vmem:[%s5 + $0x40] sm:$0xff]
  %v3813 = vld [vmem:[%s5 + $0x48] sm:$0xff]
  %v3814 = vld [vmem:[%s5 + $0x50] sm:$0xff]
  %v3815 = vld [vmem:[%s5 + $0x58] sm:$0xff]
  %v3816 = vld [vmem:[%s5 + $0x60] sm:$0xff]
  %v3817 = vld [vmem:[%s5 + $0x68] sm:$0xff]
  %v3818 = vld [vmem:[%s5 + $0x70] sm:$0xff]
  %v3819 = vld [vmem:[%s5 + $0x78] sm:$0xff]
  %v3820 = vld [vmem:[%s5 + $0x80] sm:$0xff]
  %v3821 = vld [vmem:[%s5 + $0x88] sm:$0xff]
  %v3822 = vld [vmem:[%s5 + $0x90] sm:$0xff]
  %v3823 = vld [vmem:[%s5 + $0x98] sm:$0xff]
  %v3824 = vld [vmem:[%s5 + $0xa0] sm:$0xff]
  %v3825 = vld [vmem:[%s5 + $0xa8] sm:$0xff]
  %v3826 = vld [vmem:[%s5 + $0xb0] sm:$0xff]
  %v3827 = vld [vmem:[%s5 + $0xb8] sm:$0xff]
  %v3828 = vld [vmem:[%s5 + $0xc0] sm:$0xff]
  %v3829 = vld [vmem:[%s5 + $0xc8] sm:$0xff]
  %v3830 = vld [vmem:[%s5 + $0xd0] sm:$0xff]
  %v3831 = vld [vmem:[%s5 + $0xd8] sm:$0xff]
  %v3832 = vld [vmem:[%s5 + $0xe0] sm:$0xff]
  %v3833 = vld [vmem:[%s5 + $0xe8] sm:$0xff]
  %v3834 = vld [vmem:[%s5 + $0xf0] sm:$0xff]
  %v3835 = vld [vmem:[%s5 + $0xf8] sm:$0xff]
  %v3868 = vunpack.c.l.b16 %v3804
  %v3869 = vunpack.c.h.b16 %v3804
  %v3870 = vunpack.c.l.b16 %v3805
  %v3871 = vunpack.c.h.b16 %v3805
  %v3872 = vunpack.c.l.b16 %v3806
  %v3873 = vunpack.c.h.b16 %v3806
  %v3874 = vunpack.c.l.b16 %v3807
  %v3875 = vunpack.c.h.b16 %v3807
  %v3876 = vunpack.c.l.b16 %v3808
  %v3877 = vunpack.c.h.b16 %v3808
  %v3878 = vunpack.c.l.b16 %v3809
  %v3879 = vunpack.c.h.b16 %v3809
  %v3880 = vunpack.c.l.b16 %v3810
  %v3881 = vunpack.c.h.b16 %v3810
  %v3882 = vunpack.c.l.b16 %v3811
  %v3883 = vunpack.c.h.b16 %v3811
  %v3884 = vunpack.c.l.b16 %v3812
  %v3885 = vunpack.c.h.b16 %v3812
  %v3886 = vunpack.c.l.b16 %v3813
  %v3887 = vunpack.c.h.b16 %v3813
  %v3888 = vunpack.c.l.b16 %v3814
  %v3889 = vunpack.c.h.b16 %v3814
  %v3890 = vunpack.c.l.b16 %v3815
  %v3891 = vunpack.c.h.b16 %v3815
  %v3892 = vunpack.c.l.b16 %v3816
  %v3893 = vunpack.c.h.b16 %v3816
  %v3894 = vunpack.c.l.b16 %v3817
  %v3895 = vunpack.c.h.b16 %v3817
  %v3896 = vunpack.c.l.b16 %v3818
  %v3897 = vunpack.c.h.b16 %v3818
  %v3898 = vunpack.c.l.b16 %v3819
  %v3899 = vunpack.c.h.b16 %v3819
  %v3900 = vunpack.c.l.b16 %v3820
  %v3901 = vunpack.c.h.b16 %v3820
  %v3902 = vunpack.c.l.b16 %v3821
  %v3903 = vunpack.c.h.b16 %v3821
  %v3904 = vunpack.c.l.b16 %v3822
  %v3905 = vunpack.c.h.b16 %v3822
  %v3906 = vunpack.c.l.b16 %v3823
  %v3907 = vunpack.c.h.b16 %v3823
  %v3908 = vunpack.c.l.b16 %v3824
  %v3909 = vunpack.c.h.b16 %v3824
  %v3910 = vunpack.c.l.b16 %v3825
  %v3911 = vunpack.c.h.b16 %v3825
  %v3912 = vunpack.c.l.b16 %v3826
  %v3913 = vunpack.c.h.b16 %v3826
  %v3914 = vunpack.c.l.b16 %v3827
  %v3915 = vunpack.c.h.b16 %v3827
  %v3916 = vunpack.c.l.b16 %v3828
  %v3917 = vunpack.c.h.b16 %v3828
  %v3918 = vunpack.c.l.b16 %v3829
  %v3919 = vunpack.c.h.b16 %v3829
  %v3920 = vunpack.c.l.b16 %v3830
  %v3921 = vunpack.c.h.b16 %v3830
  %v3922 = vunpack.c.l.b16 %v3831
  %v3923 = vunpack.c.h.b16 %v3831
  %v3924 = vunpack.c.l.b16 %v3832
  %v3925 = vunpack.c.h.b16 %v3832
  %v3926 = vunpack.c.l.b16 %v3833
  %v3927 = vunpack.c.h.b16 %v3833
  %v3928 = vunpack.c.l.b16 %v3834
  %v3929 = vunpack.c.h.b16 %v3834
  %v3930 = vunpack.c.l.b16 %v3835
  %v3931 = vunpack.c.h.b16 %v3835
  %v3932 = vpack.c.b16 %v3872, %v3868
  %v3933 = vpack.c.b16 %v3873, %v3869
  %v3934 = vpack.c.b16 %v3874, %v3870
  %v3935 = vpack.c.b16 %v3875, %v3871
  %v3936 = vpack.c.b16 %v3880, %v3876
  %v3937 = vpack.c.b16 %v3881, %v3877
  %v3938 = vpack.c.b16 %v3882, %v3878
  %v3939 = vpack.c.b16 %v3883, %v3879
  %v3940 = vpack.c.b16 %v3888, %v3884
  %v3941 = vpack.c.b16 %v3889, %v3885
  %v3942 = vpack.c.b16 %v3890, %v3886
  %v3943 = vpack.c.b16 %v3891, %v3887
  %v3944 = vpack.c.b16 %v3896, %v3892
  %v3945 = vpack.c.b16 %v3897, %v3893
  %v3946 = vpack.c.b16 %v3898, %v3894
  %v3947 = vpack.c.b16 %v3899, %v3895
  %v3948 = vpack.c.b16 %v3904, %v3900
  %v3949 = vpack.c.b16 %v3905, %v3901
  %v3950 = vpack.c.b16 %v3906, %v3902
  %v3951 = vpack.c.b16 %v3907, %v3903
  %v3952 = vpack.c.b16 %v3912, %v3908
  %v3953 = vpack.c.b16 %v3913, %v3909
  %v3954 = vpack.c.b16 %v3914, %v3910
  %v3955 = vpack.c.b16 %v3915, %v3911
  %v3956 = vpack.c.b16 %v3920, %v3916
  %v3957 = vpack.c.b16 %v3921, %v3917
  %v3958 = vpack.c.b16 %v3922, %v3918
  %v3959 = vpack.c.b16 %v3923, %v3919
  %v3960 = vpack.c.b16 %v3928, %v3924
  %v3961 = vpack.c.b16 %v3929, %v3925
  %v3962 = vpack.c.b16 %v3930, %v3926
  %v3963 = vpack.c.b16 %v3931, %v3927
  %3996 = vmatprep.subr.bf16.mxu0 %v3933
  %3997 = vmatpush1.bf16.msra.mxu0 %v3932
  %3998 = vmatprep.subr.bf16.mxu0 %v3937
  %3999 = vmatpush1.bf16.msra.mxu0 %v3936
  %4000 = vmatprep.subr.bf16.mxu0 %v3941
  %4001 = vmatpush1.bf16.msra.mxu0 %v3940
  %4002 = vmatprep.subr.bf16.mxu0 %v3945
  %4003 = vmatpush1.bf16.msra.mxu0 %v3944
  %4004 = vmatprep.subr.bf16.mxu0 %v3949
  %4005 = vmatpush1.bf16.msra.mxu0 %v3948
  %4006 = vmatprep.subr.bf16.mxu0 %v3953
  %4007 = vmatpush1.bf16.msra.mxu0 %v3952
  %4008 = vmatprep.subr.bf16.mxu0 %v3957
  %4009 = vmatpush1.bf16.msra.mxu0 %v3956
  %4010 = vmatprep.subr.bf16.mxu0 %v3961
  %4011 = vmatpush1.bf16.msra.mxu0 %v3960
  %4012 = vmatprep.subr.bf16.mxu0 0
  %4013 = vmatpush1.bf16.msra.mxu0 0
  %4014 = vmatprep.subr.bf16.mxu0 0
  %4015 = vmatpush1.bf16.msra.mxu0 0
  %4016 = vmatprep.subr.bf16.mxu0 0
  %4017 = vmatpush1.bf16.msra.mxu0 0
  %4018 = vmatprep.subr.bf16.mxu0 0
  %4019 = vmatpush1.bf16.msra.mxu0 0
  %4020 = vmatprep.subr.bf16.mxu0 0
  %4021 = vmatpush1.bf16.msra.mxu0 0
  %4022 = vmatprep.subr.bf16.mxu0 0
  %4023 = vmatpush1.bf16.msra.mxu0 0
  %4024 = vmatprep.subr.bf16.mxu0 0
  %4025 = vmatpush1.bf16.msra.mxu0 0
  %4026 = vmatprep.subr.bf16.mxu0 0
  %4027 = vmatpush1.bf16.msra.mxu0 0
  %4028 = vmatprep.mubr.bf16.mxu0 0
  %4029 = vmatmul.mubr.bf16.gmra.mrb[0].mxu0 %v3799
  %v4030 = vpop.f32.mrb[0].mxu0
  %v4031 = vadd.f32 0.0, %v4030
  %v4032 = vpop.f32.mrb[0].mxu0
  %v4033 = vadd.f32 0.0, %v4032
  %v4034 = vpop.f32.mrb[0].mxu0
  %v4035 = vpop.f32.mrb[0].mxu0
  %4036 = vdwg.mxu0
  %4037 = vmatprep.subr.bf16.mxu0 %v3935
  %4038 = vmatpush1.bf16.msra.mxu0 %v3934
  %4039 = vmatprep.subr.bf16.mxu0 %v3939
  %4040 = vmatpush1.bf16.msra.mxu0 %v3938
  %4041 = vmatprep.subr.bf16.mxu0 %v3943
  %4042 = vmatpush1.bf16.msra.mxu0 %v3942
  %4043 = vmatprep.subr.bf16.mxu0 %v3947
  %4044 = vmatpush1.bf16.msra.mxu0 %v3946
  %4045 = vmatprep.subr.bf16.mxu0 %v3951
  %4046 = vmatpush1.bf16.msra.mxu0 %v3950
  %4047 = vmatprep.subr.bf16.mxu0 %v3955
  %4048 = vmatpush1.bf16.msra.mxu0 %v3954
  %4049 = vmatprep.subr.bf16.mxu0 %v3959
  %4050 = vmatpush1.bf16.msra.mxu0 %v3958
  %4051 = vmatprep.subr.bf16.mxu0 %v3963
  %4052 = vmatpush1.bf16.msra.mxu0 %v3962
  %4053 = vmatprep.subr.bf16.mxu0 0
  %4054 = vmatpush1.bf16.msra.mxu0 0
  %4055 = vmatprep.subr.bf16.mxu0 0
  %4056 = vmatpush1.bf16.msra.mxu0 0
  %4057 = vmatprep.subr.bf16.mxu0 0
  %4058 = vmatpush1.bf16.msra.mxu0 0
  %4059 = vmatprep.subr.bf16.mxu0 0
  %4060 = vmatpush1.bf16.msra.mxu0 0
  %4061 = vmatprep.subr.bf16.mxu0 0
  %4062 = vmatpush1.bf16.msra.mxu0 0
  %4063 = vmatprep.subr.bf16.mxu0 0
  %4064 = vmatpush1.bf16.msra.mxu0 0
  %4065 = vmatprep.subr.bf16.mxu0 0
  %4066 = vmatpush1.bf16.msra.mxu0 0
  %4067 = vmatprep.subr.bf16.mxu0 0
  %4068 = vmatpush1.bf16.msra.mxu0 0
  %4069 = vmatprep.mubr.bf16.mxu0 0
  %4070 = vmatmul.mubr.bf16.gmra.mrb[0].mxu0 %v3799
  %v4071 = vpop.f32.mrb[0].mxu0
  %v4072 = vadd.f32 0.0, %v4071
  %v4073 = vpop.f32.mrb[0].mxu0
  %v4074 = vadd.f32 0.0, %v4073
  %v4075 = vpop.f32.mrb[0].mxu0
  %v4076 = vpop.f32.mrb[0].mxu0
  %4077 = vdwg.mxu0
  %v4078 = vadd.f32 %v3800, %v4031
  %v4079 = vadd.f32 %v3801, %v4033
  %v4080 = vadd.f32 %v3802, %v4072
  %v4081 = vadd.f32 %v3803, %v4074
  %v4082 = vmul.f32 %v4078, 0.5
  %v4083 = vmul.f32 %v4079, 0.5
  %v4084 = vmul.f32 %v4080, 0.5
  %v4085 = vtanh.pop %v4082
  %v4086 = vtanh.pop %v4083
  %v4087 = vtanh.pop %v4084
  %v4088 = vmul.f32 %v4085, 0.5
  %v4089 = vmul.f32 %v4086, 0.5
  %v4090 = vmul.f32 %v4087, 0.5
  %v4091 = vadd.f32 %v4088, 0.5
  %v4092 = vadd.f32 %v4089, 0.5
  %v4093 = vadd.f32 %v4090, 0.5
  %v4094 = vtanh.pop %v4081
  %v4095 = vld [vmem:[#allocation5] sm:$0xff]
  %v4096 = vmul.f32 %v4092, %v4095
  %v4097 = vmul.f32 %v4091, %v4094
  %v4098 = vadd.f32 %v4096, %v4097
  %v4099 = vtanh.pop %v4098
  %v4100 = vmul.f32 %v4093, %v4099
  %4101 = vst [vmem:[#allocation5] sm:$0xff] %v4098
  %4102 = vst [vmem:[#allocation4] sm:$0xff] %v4100
  %v4103 = vld [vmem:[#allocation4] sm:$0xff]
  %v4104 = vpack.c.bf16 %v4103, %v4103
  %v4105 = vld [vmem:[%s1236] sm:$0xff]
  %v4106 = vld [vmem:[%s1236 + $0x8] sm:$0xff]
  %v4107 = vld [vmem:[%s1236 + $0x10] sm:$0xff]
  %v4108 = vld [vmem:[%s1236 + $0x18] sm:$0xff]
  %v4109 = vld [vmem:[%s5] sm:$0xff]
  %v4110 = vld [vmem:[%s5 + $0x8] sm:$0xff]
  %v4111 = vld [vmem:[%s5 + $0x10] sm:$0xff]
  %v4112 = vld [vmem:[%s5 + $0x18] sm:$0xff]
  %v4113 = vld [vmem:[%s5 + $0x20] sm:$0xff]
  %v4114 = vld [vmem:[%s5 + $0x28] sm:$0xff]
  %v4115 = vld [vmem:[%s5 + $0x30] sm:$0xff]
  %v4116 = vld [vmem:[%s5 + $0x38] sm:$0xff]
  %v4117 = vld [vmem:[%s5 + $0x40] sm:$0xff]
  %v4118 = vld [vmem:[%s5 + $0x48] sm:$0xff]
  %v4119 = vld [vmem:[%s5 + $0x50] sm:$0xff]
  %v4120 = vld [vmem:[%s5 + $0x58] sm:$0xff]
  %v4121 = vld [vmem:[%s5 + $0x60] sm:$0xff]
  %v4122 = vld [vmem:[%s5 + $0x68] sm:$0xff]
  %v4123 = vld [vmem:[%s5 + $0x70] sm:$0xff]
  %v4124 = vld [vmem:[%s5 + $0x78] sm:$0xff]
  %v4125 = vld [vmem:[%s5 + $0x80] sm:$0xff]
  %v4126 = vld [vmem:[%s5 + $0x88] sm:$0xff]
  %v4127 = vld [vmem:[%s5 + $0x90] sm:$0xff]
  %v4128 = vld [vmem:[%s5 + $0x98] sm:$0xff]
  %v4129 = vld [vmem:[%s5 + $0xa0] sm:$0xff]
  %v4130 = vld [vmem:[%s5 + $0xa8] sm:$0xff]
  %v4131 = vld [vmem:[%s5 + $0xb0] sm:$0xff]
  %v4132 = vld [vmem:[%s5 + $0xb8] sm:$0xff]
  %v4133 = vld [vmem:[%s5 + $0xc0] sm:$0xff]
  %v4134 = vld [vmem:[%s5 + $0xc8] sm:$0xff]
  %v4135 = vld [vmem:[%s5 + $0xd0] sm:$0xff]
  %v4136 = vld [vmem:[%s5 + $0xd8] sm:$0xff]
  %v4137 = vld [vmem:[%s5 + $0xe0] sm:$0xff]
  %v4138 = vld [vmem:[%s5 + $0xe8] sm:$0xff]
  %v4139 = vld [vmem:[%s5 + $0xf0] sm:$0xff]
  %v4140 = vld [vmem:[%s5 + $0xf8] sm:$0xff]
  %v4173 = vunpack.c.l.b16 %v4109
  %v4174 = vunpack.c.h.b16 %v4109
  %v4175 = vunpack.c.l.b16 %v4110
  %v4176 = vunpack.c.h.b16 %v4110
  %v4177 = vunpack.c.l.b16 %v4111
  %v4178 = vunpack.c.h.b16 %v4111
  %v4179 = vunpack.c.l.b16 %v4112
  %v4180 = vunpack.c.h.b16 %v4112
  %v4181 = vunpack.c.l.b16 %v4113
  %v4182 = vunpack.c.h.b16 %v4113
  %v4183 = vunpack.c.l.b16 %v4114
  %v4184 = vunpack.c.h.b16 %v4114
  %v4185 = vunpack.c.l.b16 %v4115
  %v4186 = vunpack.c.h.b16 %v4115
  %v4187 = vunpack.c.l.b16 %v4116
  %v4188 = vunpack.c.h.b16 %v4116
  %v4189 = vunpack.c.l.b16 %v4117
  %v4190 = vunpack.c.h.b16 %v4117
  %v4191 = vunpack.c.l.b16 %v4118
  %v4192 = vunpack.c.h.b16 %v4118
  %v4193 = vunpack.c.l.b16 %v4119
  %v4194 = vunpack.c.h.b16 %v4119
  %v4195 = vunpack.c.l.b16 %v4120
  %v4196 = vunpack.c.h.b16 %v4120
  %v4197 = vunpack.c.l.b16 %v4121
  %v4198 = vunpack.c.h.b16 %v4121
  %v4199 = vunpack.c.l.b16 %v4122
  %v4200 = vunpack.c.h.b16 %v4122
  %v4201 = vunpack.c.l.b16 %v4123
  %v4202 = vunpack.c.h.b16 %v4123
  %v4203 = vunpack.c.l.b16 %v4124
  %v4204 = vunpack.c.h.b16 %v4124
  %v4205 = vunpack.c.l.b16 %v4125
  %v4206 = vunpack.c.h.b16 %v4125
  %v4207 = vunpack.c.l.b16 %v4126
  %v4208 = vunpack.c.h.b16 %v4126
  %v4209 = vunpack.c.l.b16 %v4127
  %v4210 = vunpack.c.h.b16 %v4127
  %v4211 = vunpack.c.l.b16 %v4128
  %v4212 = vunpack.c.h.b16 %v4128
  %v4213 = vunpack.c.l.b16 %v4129
  %v4214 = vunpack.c.h.b16 %v4129
  %v4215 = vunpack.c.l.b16 %v4130
  %v4216 = vunpack.c.h.b16 %v4130
  %v4217 = vunpack.c.l.b16 %v4131
  %v4218 = vunpack.c.h.b16 %v4131
  %v4219 = vunpack.c.l.b16 %v4132
  %v4220 = vunpack.c.h.b16 %v4132
  %v4221 = vunpack.c.l.b16 %v4133
  %v4222 = vunpack.c.h.b16 %v4133
  %v4223 = vunpack.c.l.b16 %v4134
  %v4224 = vunpack.c.h.b16 %v4134
  %v4225 = vunpack.c.l.b16 %v4135
  %v4226 = vunpack.c.h.b16 %v4135
  %v4227 = vunpack.c.l.b16 %v4136
  %v4228 = vunpack.c.h.b16 %v4136
  %v4229 = vunpack.c.l.b16 %v4137
  %v4230 = vunpack.c.h.b16 %v4137
  %v4231 = vunpack.c.l.b16 %v4138
  %v4232 = vunpack.c.h.b16 %v4138
  %v4233 = vunpack.c.l.b16 %v4139
  %v4234 = vunpack.c.h.b16 %v4139
  %v4235 = vunpack.c.l.b16 %v4140
  %v4236 = vunpack.c.h.b16 %v4140
  %v4237 = vpack.c.b16 %v4177, %v4173
  %v4238 = vpack.c.b16 %v4178, %v4174
  %v4239 = vpack.c.b16 %v4179, %v4175
  %v4240 = vpack.c.b16 %v4180, %v4176
  %v4241 = vpack.c.b16 %v4185, %v4181
  %v4242 = vpack.c.b16 %v4186, %v4182
  %v4243 = vpack.c.b16 %v4187, %v4183
  %v4244 = vpack.c.b16 %v4188, %v4184
  %v4245 = vpack.c.b16 %v4193, %v4189
  %v4246 = vpack.c.b16 %v4194, %v4190
  %v4247 = vpack.c.b16 %v4195, %v4191
  %v4248 = vpack.c.b16 %v4196, %v4192
  %v4249 = vpack.c.b16 %v4201, %v4197
  %v4250 = vpack.c.b16 %v4202, %v4198
  %v4251 = vpack.c.b16 %v4203, %v4199
  %v4252 = vpack.c.b16 %v4204, %v4200
  %v4253 = vpack.c.b16 %v4209, %v4205
  %v4254 = vpack.c.b16 %v4210, %v4206
  %v4255 = vpack.c.b16 %v4211, %v4207
  %v4256 = vpack.c.b16 %v4212, %v4208
  %v4257 = vpack.c.b16 %v4217, %v4213
  %v4258 = vpack.c.b16 %v4218, %v4214
  %v4259 = vpack.c.b16 %v4219, %v4215
  %v4260 = vpack.c.b16 %v4220, %v4216
  %v4261 = vpack.c.b16 %v4225, %v4221
  %v4262 = vpack.c.b16 %v4226, %v4222
  %v4263 = vpack.c.b16 %v4227, %v4223
  %v4264 = vpack.c.b16 %v4228, %v4224
  %v4265 = vpack.c.b16 %v4233, %v4229
  %v4266 = vpack.c.b16 %v4234, %v4230
  %v4267 = vpack.c.b16 %v4235, %v4231
  %v4268 = vpack.c.b16 %v4236, %v4232
  %4301 = vmatprep.subr.bf16.mxu0 %v4238
  %4302 = vmatpush1.bf16.msra.mxu0 %v4237
  %4303 = vmatprep.subr.bf16.mxu0 %v4242
  %4304 = vmatpush1.bf16.msra.mxu0 %v4241
  %4305 = vmatprep.subr.bf16.mxu0 %v4246
  %4306 = vmatpush1.bf16.msra.mxu0 %v4245
  %4307 = vmatprep.subr.bf16.mxu0 %v4250
  %4308 = vmatpush1.bf16.msra.mxu0 %v4249
  %4309 = vmatprep.subr.bf16.mxu0 %v4254
  %4310 = vmatpush1.bf16.msra.mxu0 %v4253
  %4311 = vmatprep.subr.bf16.mxu0 %v4258
  %4312 = vmatpush1.bf16.msra.mxu0 %v4257
  %4313 = vmatprep.subr.bf16.mxu0 %v4262
  %4314 = vmatpush1.bf16.msra.mxu0 %v4261
  %4315 = vmatprep.subr.bf16.mxu0 %v4266
  %4316 = vmatpush1.bf16.msra.mxu0 %v4265
  %4317 = vmatprep.subr.bf16.mxu0 0
  %4318 = vmatpush1.bf16.msra.mxu0 0
  %4319 = vmatprep.subr.bf16.mxu0 0
  %4320 = vmatpush1.bf16.msra.mxu0 0
  %4321 = vmatprep.subr.bf16.mxu0 0
  %4322 = vmatpush1.bf16.msra.mxu0 0
  %4323 = vmatprep.subr.bf16.mxu0 0
  %4324 = vmatpush1.bf16.msra.mxu0 0
  %4325 = vmatprep.subr.bf16.mxu0 0
  %4326 = vmatpush1.bf16.msra.mxu0 0
  %4327 = vmatprep.subr.bf16.mxu0 0
  %4328 = vmatpush1.bf16.msra.mxu0 0
  %4329 = vmatprep.subr.bf16.mxu0 0
  %4330 = vmatpush1.bf16.msra.mxu0 0
  %4331 = vmatprep.subr.bf16.mxu0 0
  %4332 = vmatpush1.bf16.msra.mxu0 0
  %4333 = vmatprep.mubr.bf16.mxu0 0
  %4334 = vmatmul.mubr.bf16.gmra.mrb[0].mxu0 %v4104
  %v4335 = vpop.f32.mrb[0].mxu0
  %v4336 = vadd.f32 0.0, %v4335
  %v4337 = vpop.f32.mrb[0].mxu0
  %v4338 = vadd.f32 0.0, %v4337
  %v4339 = vpop.f32.mrb[0].mxu0
  %v4340 = vpop.f32.mrb[0].mxu0
  %4341 = vdwg.mxu0
  %4342 = vmatprep.subr.bf16.mxu0 %v4240
  %4343 = vmatpush1.bf16.msra.mxu0 %v4239
  %4344 = vmatprep.subr.bf16.mxu0 %v4244
  %4345 = vmatpush1.bf16.msra.mxu0 %v4243
  %4346 = vmatprep.subr.bf16.mxu0 %v4248
  %4347 = vmatpush1.bf16.msra.mxu0 %v4247
  %4348 = vmatprep.subr.bf16.mxu0 %v4252
  %4349 = vmatpush1.bf16.msra.mxu0 %v4251
  %4350 = vmatprep.subr.bf16.mxu0 %v4256
  %4351 = vmatpush1.bf16.msra.mxu0 %v4255
  %4352 = vmatprep.subr.bf16.mxu0 %v4260
  %4353 = vmatpush1.bf16.msra.mxu0 %v4259
  %4354 = vmatprep.subr.bf16.mxu0 %v4264
  %4355 = vmatpush1.bf16.msra.mxu0 %v4263
  %4356 = vmatprep.subr.bf16.mxu0 %v4268
  %4357 = vmatpush1.bf16.msra.mxu0 %v4267
  %4358 = vmatprep.subr.bf16.mxu0 0
  %4359 = vmatpush1.bf16.msra.mxu0 0
  %4360 = vmatprep.subr.bf16.mxu0 0
  %4361 = vmatpush1.bf16.msra.mxu0 0
  %4362 = vmatprep.subr.bf16.mxu0 0
  %4363 = vmatpush1.bf16.msra.mxu0 0
  %4364 = vmatprep.subr.bf16.mxu0 0
  %4365 = vmatpush1.bf16.msra.mxu0 0
  %4366 = vmatprep.subr.bf16.mxu0 0
  %4367 = vmatpush1.bf16.msra.mxu0 0
  %4368 = vmatprep.subr.bf16.mxu0 0
  %4369 = vmatpush1.bf16.msra.mxu0 0
  %4370 = vmatprep.subr.bf16.mxu0 0
  %4371 = vmatpush1.bf16.msra.mxu0 0
  %4372 = vmatprep.subr.bf16.mxu0 0
  %4373 = vmatpush1.bf16.msra.mxu0 0
  %4374 = vmatprep.mubr.bf16.mxu0 0
  %4375 = vmatmul.mubr.bf16.gmra.mrb[0].mxu0 %v4104
  %v4376 = vpop.f32.mrb[0].mxu0
  %v4377 = vadd.f32 0.0, %v4376
  %v4378 = vpop.f32.mrb[0].mxu0
  %v4379 = vadd.f32 0.0, %v4378
  %v4380 = vpop.f32.mrb[0].mxu0
  %v4381 = vpop.f32.mrb[0].mxu0
  %4382 = vdwg.mxu0
  %v4383 = vadd.f32 %v4105, %v4336
  %v4384 = vadd.f32 %v4106, %v4338
  %v4385 = vadd.f32 %v4107, %v4377
  %v4386 = vadd.f32 %v4108, %v4379
  %v4387 = vmul.f32 %v4383, 0.5
  %v4388 = vmul.f32 %v4384, 0.5
  %v4389 = vmul.f32 %v4385, 0.5
  %v4390 = vtanh.pop %v4387
  %v4391 = vtanh.pop %v4388
  %v4392 = vtanh.pop %v4389
  %v4393 = vmul.f32 %v4390, 0.5
  %v4394 = vmul.f32 %v4391, 0.5
  %v4395 = vmul.f32 %v4392, 0.5
  %v4396 = vadd.f32 %v4393, 0.5
  %v4397 = vadd.f32 %v4394, 0.5
  %v4398 = vadd.f32 %v4395, 0.5
  %v4399 = vtanh.pop %v4386
  %v4400 = vld [vmem:[#allocation5] sm:$0xff]
  %v4401 = vmul.f32 %v4397, %v4400
  %v4402 = vmul.f32 %v4396, %v4399
  %v4403 = vadd.f32 %v4401, %v4402
  %v4404 = vtanh.pop %v4403
  %v4405 = vmul.f32 %v4398, %v4404
  %4406 = vst [vmem:[#allocation5] sm:$0xff] %v4403
  %4407 = vst [vmem:[#allocation4] sm:$0xff] %v4405
  %v4408 = vld [vmem:[#allocation4] sm:$0xff]
  %v4409 = vpack.c.bf16 %v4408, %v4408
  %v4410 = vld [vmem:[%s1546] sm:$0xff]
  %v4411 = vld [vmem:[%s1546 + $0x8] sm:$0xff]
  %v4412 = vld [vmem:[%s1546 + $0x10] sm:$0xff]
  %v4413 = vld [vmem:[%s1546 + $0x18] sm:$0xff]
  %v4414 = vld [vmem:[%s5] sm:$0xff]
  %v4415 = vld [vmem:[%s5 + $0x8] sm:$0xff]
  %v4416 = vld [vmem:[%s5 + $0x10] sm:$0xff]
  %v4417 = vld [vmem:[%s5 + $0x18] sm:$0xff]
  %v4418 = vld [vmem:[%s5 + $0x20] sm:$0xff]
  %v4419 = vld [vmem:[%s5 + $0x28] sm:$0xff]
  %v4420 = vld [vmem:[%s5 + $0x30] sm:$0xff]
  %v4421 = vld [vmem:[%s5 + $0x38] sm:$0xff]
  %v4422 = vld [vmem:[%s5 + $0x40] sm:$0xff]
  %v4423 = vld [vmem:[%s5 + $0x48] sm:$0xff]
  %v4424 = vld [vmem:[%s5 + $0x50] sm:$0xff]
  %v4425 = vld [vmem:[%s5 + $0x58] sm:$0xff]
  %v4426 = vld [vmem:[%s5 + $0x60] sm:$0xff]
  %v4427 = vld [vmem:[%s5 + $0x68] sm:$0xff]
  %v4428 = vld [vmem:[%s5 + $0x70] sm:$0xff]
  %v4429 = vld [vmem:[%s5 + $0x78] sm:$0xff]
  %v4430 = vld [vmem:[%s5 + $0x80] sm:$0xff]
  %v4431 = vld [vmem:[%s5 + $0x88] sm:$0xff]
  %v4432 = vld [vmem:[%s5 + $0x90] sm:$0xff]
  %v4433 = vld [vmem:[%s5 + $0x98] sm:$0xff]
  %v4434 = vld [vmem:[%s5 + $0xa0] sm:$0xff]
  %v4435 = vld [vmem:[%s5 + $0xa8] sm:$0xff]
  %v4436 = vld [vmem:[%s5 + $0xb0] sm:$0xff]
  %v4437 = vld [vmem:[%s5 + $0xb8] sm:$0xff]
  %v4438 = vld [vmem:[%s5 + $0xc0] sm:$0xff]
  %v4439 = vld [vmem:[%s5 + $0xc8] sm:$0xff]
  %v4440 = vld [vmem:[%s5 + $0xd0] sm:$0xff]
  %v4441 = vld [vmem:[%s5 + $0xd8] sm:$0xff]
  %v4442 = vld [vmem:[%s5 + $0xe0] sm:$0xff]
  %v4443 = vld [vmem:[%s5 + $0xe8] sm:$0xff]
  %v4444 = vld [vmem:[%s5 + $0xf0] sm:$0xff]
  %v4445 = vld [vmem:[%s5 + $0xf8] sm:$0xff]
  %v4478 = vunpack.c.l.b16 %v4414
  %v4479 = vunpack.c.h.b16 %v4414
  %v4480 = vunpack.c.l.b16 %v4415
  %v4481 = vunpack.c.h.b16 %v4415
  %v4482 = vunpack.c.l.b16 %v4416
  %v4483 = vunpack.c.h.b16 %v4416
  %v4484 = vunpack.c.l.b16 %v4417
  %v4485 = vunpack.c.h.b16 %v4417
  %v4486 = vunpack.c.l.b16 %v4418
  %v4487 = vunpack.c.h.b16 %v4418
  %v4488 = vunpack.c.l.b16 %v4419
  %v4489 = vunpack.c.h.b16 %v4419
  %v4490 = vunpack.c.l.b16 %v4420
  %v4491 = vunpack.c.h.b16 %v4420
  %v4492 = vunpack.c.l.b16 %v4421
  %v4493 = vunpack.c.h.b16 %v4421
  %v4494 = vunpack.c.l.b16 %v4422
  %v4495 = vunpack.c.h.b16 %v4422
  %v4496 = vunpack.c.l.b16 %v4423
  %v4497 = vunpack.c.h.b16 %v4423
  %v4498 = vunpack.c.l.b16 %v4424
  %v4499 = vunpack.c.h.b16 %v4424
  %v4500 = vunpack.c.l.b16 %v4425
  %v4501 = vunpack.c.h.b16 %v4425
  %v4502 = vunpack.c.l.b16 %v4426
  %v4503 = vunpack.c.h.b16 %v4426
  %v4504 = vunpack.c.l.b16 %v4427
  %v4505 = vunpack.c.h.b16 %v4427
  %v4506 = vunpack.c.l.b16 %v4428
  %v4507 = vunpack.c.h.b16 %v4428
  %v4508 = vunpack.c.l.b16 %v4429
  %v4509 = vunpack.c.h.b16 %v4429
  %v4510 = vunpack.c.l.b16 %v4430
  %v4511 = vunpack.c.h.b16 %v4430
  %v4512 = vunpack.c.l.b16 %v4431
  %v4513 = vunpack.c.h.b16 %v4431
  %v4514 = vunpack.c.l.b16 %v4432
  %v4515 = vunpack.c.h.b16 %v4432
  %v4516 = vunpack.c.l.b16 %v4433
  %v4517 = vunpack.c.h.b16 %v4433
  %v4518 = vunpack.c.l.b16 %v4434
  %v4519 = vunpack.c.h.b16 %v4434
  %v4520 = vunpack.c.l.b16 %v4435
  %v4521 = vunpack.c.h.b16 %v4435
  %v4522 = vunpack.c.l.b16 %v4436
  %v4523 = vunpack.c.h.b16 %v4436
  %v4524 = vunpack.c.l.b16 %v4437
  %v4525 = vunpack.c.h.b16 %v4437
  %v4526 = vunpack.c.l.b16 %v4438
  %v4527 = vunpack.c.h.b16 %v4438
  %v4528 = vunpack.c.l.b16 %v4439
  %v4529 = vunpack.c.h.b16 %v4439
  %v4530 = vunpack.c.l.b16 %v4440
  %v4531 = vunpack.c.h.b16 %v4440
  %v4532 = vunpack.c.l.b16 %v4441
  %v4533 = vunpack.c.h.b16 %v4441
  %v4534 = vunpack.c.l.b16 %v4442
  %v4535 = vunpack.c.h.b16 %v4442
  %v4536 = vunpack.c.l.b16 %v4443
  %v4537 = vunpack.c.h.b16 %v4443
  %v4538 = vunpack.c.l.b16 %v4444
  %v4539 = vunpack.c.h.b16 %v4444
  %v4540 = vunpack.c.l.b16 %v4445
  %v4541 = vunpack.c.h.b16 %v4445
  %v4542 = vpack.c.b16 %v4482, %v4478
  %v4543 = vpack.c.b16 %v4483, %v4479
  %v4544 = vpack.c.b16 %v4484, %v4480
  %v4545 = vpack.c.b16 %v4485, %v4481
  %v4546 = vpack.c.b16 %v4490, %v4486
  %v4547 = vpack.c.b16 %v4491, %v4487
  %v4548 = vpack.c.b16 %v4492, %v4488
  %v4549 = vpack.c.b16 %v4493, %v4489
  %v4550 = vpack.c.b16 %v4498, %v4494
  %v4551 = vpack.c.b16 %v4499, %v4495
  %v4552 = vpack.c.b16 %v4500, %v4496
  %v4553 = vpack.c.b16 %v4501, %v4497
  %v4554 = vpack.c.b16 %v4506, %v4502
  %v4555 = vpack.c.b16 %v4507, %v4503
  %v4556 = vpack.c.b16 %v4508, %v4504
  %v4557 = vpack.c.b16 %v4509, %v4505
  %v4558 = vpack.c.b16 %v4514, %v4510
  %v4559 = vpack.c.b16 %v4515, %v4511
  %v4560 = vpack.c.b16 %v4516, %v4512
  %v4561 = vpack.c.b16 %v4517, %v4513
  %v4562 = vpack.c.b16 %v4522, %v4518
  %v4563 = vpack.c.b16 %v4523, %v4519
  %v4564 = vpack.c.b16 %v4524, %v4520
  %v4565 = vpack.c.b16 %v4525, %v4521
  %v4566 = vpack.c.b16 %v4530, %v4526
  %v4567 = vpack.c.b16 %v4531, %v4527
  %v4568 = vpack.c.b16 %v4532, %v4528
  %v4569 = vpack.c.b16 %v4533, %v4529
  %v4570 = vpack.c.b16 %v4538, %v4534
  %v4571 = vpack.c.b16 %v4539, %v4535
  %v4572 = vpack.c.b16 %v4540, %v4536
  %v4573 = vpack.c.b16 %v4541, %v4537
  %4606 = vmatprep.subr.bf16.mxu0 %v4543
  %4607 = vmatpush1.bf16.msra.mxu0 %v4542
  %4608 = vmatprep.subr.bf16.mxu0 %v4547
  %4609 = vmatpush1.bf16.msra.mxu0 %v4546
  %4610 = vmatprep.subr.bf16.mxu0 %v4551
  %4611 = vmatpush1.bf16.msra.mxu0 %v4550
  %4612 = vmatprep.subr.bf16.mxu0 %v4555
  %4613 = vmatpush1.bf16.msra.mxu0 %v4554
  %4614 = vmatprep.subr.bf16.mxu0 %v4559
  %4615 = vmatpush1.bf16.msra.mxu0 %v4558
  %4616 = vmatprep.subr.bf16.mxu0 %v4563
  %4617 = vmatpush1.bf16.msra.mxu0 %v4562
  %4618 = vmatprep.subr.bf16.mxu0 %v4567
  %4619 = vmatpush1.bf16.msra.mxu0 %v4566
  %4620 = vmatprep.subr.bf16.mxu0 %v4571
  %4621 = vmatpush1.bf16.msra.mxu0 %v4570
  %4622 = vmatprep.subr.bf16.mxu0 0
  %4623 = vmatpush1.bf16.msra.mxu0 0
  %4624 = vmatprep.subr.bf16.mxu0 0
  %4625 = vmatpush1.bf16.msra.mxu0 0
  %4626 = vmatprep.subr.bf16.mxu0 0
  %4627 = vmatpush1.bf16.msra.mxu0 0
  %4628 = vmatprep.subr.bf16.mxu0 0
  %4629 = vmatpush1.bf16.msra.mxu0 0
  %4630 = vmatprep.subr.bf16.mxu0 0
  %4631 = vmatpush1.bf16.msra.mxu0 0
  %4632 = vmatprep.subr.bf16.mxu0 0
  %4633 = vmatpush1.bf16.msra.mxu0 0
  %4634 = vmatprep.subr.bf16.mxu0 0
  %4635 = vmatpush1.bf16.msra.mxu0 0
  %4636 = vmatprep.subr.bf16.mxu0 0
  %4637 = vmatpush1.bf16.msra.mxu0 0
  %4638 = vmatprep.mubr.bf16.mxu0 0
  %4639 = vmatmul.mubr.bf16.gmra.mrb[0].mxu0 %v4409
  %v4640 = vpop.f32.mrb[0].mxu0
  %v4641 = vadd.f32 0.0, %v4640
  %v4642 = vpop.f32.mrb[0].mxu0
  %v4643 = vadd.f32 0.0, %v4642
  %v4644 = vpop.f32.mrb[0].mxu0
  %v4645 = vpop.f32.mrb[0].mxu0
  %4646 = vdwg.mxu0
  %4647 = vmatprep.subr.bf16.mxu0 %v4545
  %4648 = vmatpush1.bf16.msra.mxu0 %v4544
  %4649 = vmatprep.subr.bf16.mxu0 %v4549
  %4650 = vmatpush1.bf16.msra.mxu0 %v4548
  %4651 = vmatprep.subr.bf16.mxu0 %v4553
  %4652 = vmatpush1.bf16.msra.mxu0 %v4552
  %4653 = vmatprep.subr.bf16.mxu0 %v4557
  %4654 = vmatpush1.bf16.msra.mxu0 %v4556
  %4655 = vmatprep.subr.bf16.mxu0 %v4561
  %4656 = vmatpush1.bf16.msra.mxu0 %v4560
  %4657 = vmatprep.subr.bf16.mxu0 %v4565
  %4658 = vmatpush1.bf16.msra.mxu0 %v4564
  %4659 = vmatprep.subr.bf16.mxu0 %v4569
  %4660 = vmatpush1.bf16.msra.mxu0 %v4568
  %4661 = vmatprep.subr.bf16.mxu0 %v4573
  %4662 = vmatpush1.bf16.msra.mxu0 %v4572
  %4663 = vmatprep.subr.bf16.mxu0 0
  %4664 = vmatpush1.bf16.msra.mxu0 0
  %4665 = vmatprep.subr.bf16.mxu0 0
  %4666 = vmatpush1.bf16.msra.mxu0 0
  %4667 = vmatprep.subr.bf16.mxu0 0
  %4668 = vmatpush1.bf16.msra.mxu0 0
  %4669 = vmatprep.subr.bf16.mxu0 0
  %4670 = vmatpush1.bf16.msra.mxu0 0
  %4671 = vmatprep.subr.bf16.mxu0 0
  %4672 = vmatpush1.bf16.msra.mxu0 0
  %4673 = vmatprep.subr.bf16.mxu0 0
  %4674 = vmatpush1.bf16.msra.mxu0 0
  %4675 = vmatprep.subr.bf16.mxu0 0
  %4676 = vmatpush1.bf16.msra.mxu0 0
  %4677 = vmatprep.subr.bf16.mxu0 0
  %4678 = vmatpush1.bf16.msra.mxu0 0
  %4679 = vmatprep.mubr.bf16.mxu0 0
  %4680 = vmatmul.mubr.bf16.gmra.mrb[0].mxu0 %v4409
  %v4681 = vpop.f32.mrb[0].mxu0
  %v4682 = vadd.f32 0.0, %v4681
  %v4683 = vpop.f32.mrb[0].mxu0
  %v4684 = vadd.f32 0.0, %v4683
  %v4685 = vpop.f32.mrb[0].mxu0
  %v4686 = vpop.f32.mrb[0].mxu0
  %4687 = vdwg.mxu0
  %v4688 = vadd.f32 %v4410, %v4641
  %v4689 = vadd.f32 %v4411, %v4643
  %v4690 = vadd.f32 %v4412, %v4682
  %v4691 = vadd.f32 %v4413, %v4684
  %v4692 = vmul.f32 %v4688, 0.5
  %v4693 = vmul.f32 %v4689, 0.5
  %v4694 = vmul.f32 %v4690, 0.5
  %v4695 = vtanh.pop %v4692
  %v4696 = vtanh.pop %v4693
  %v4697 = vtanh.pop %v4694
  %v4698 = vmul.f32 %v4695, 0.5
  %v4699 = vmul.f32 %v4696, 0.5
  %v4700 = vmul.f32 %v4697, 0.5
  %v4701 = vadd.f32 %v4698, 0.5
  %v4702 = vadd.f32 %v4699, 0.5
  %v4703 = vadd.f32 %v4700, 0.5
  %v4704 = vtanh.pop %v4691
  %v4705 = vld [vmem:[#allocation5] sm:$0xff]
  %v4706 = vmul.f32 %v4702, %v4705
  %v4707 = vmul.f32 %v4701, %v4704
  %v4708 = vadd.f32 %v4706, %v4707
  %v4709 = vtanh.pop %v4708
  %v4710 = vmul.f32 %v4703, %v4709
  %4711 = vst [vmem:[#allocation5] sm:$0xff] %v4708
  %4712 = vst [vmem:[#allocation4] sm:$0xff] %v4710
  %v4713 = vld [vmem:[#allocation4] sm:$0xff]
  %v4714 = vpack.c.bf16 %v4713, %v4713
  %v4715 = vld [vmem:[%s1856] sm:$0xff]
  %v4716 = vld [vmem:[%s1856 + $0x8] sm:$0xff]
  %v4717 = vld [vmem:[%s1856 + $0x10] sm:$0xff]
  %v4718 = vld [vmem:[%s1856 + $0x18] sm:$0xff]
  %v4719 = vld [vmem:[%s5] sm:$0xff]
  %v4720 = vld [vmem:[%s5 + $0x8] sm:$0xff]
  %v4721 = vld [vmem:[%s5 + $0x10] sm:$0xff]
  %v4722 = vld [vmem:[%s5 + $0x18] sm:$0xff]
  %v4723 = vld [vmem:[%s5 + $0x20] sm:$0xff]
  %v4724 = vld [vmem:[%s5 + $0x28] sm:$0xff]
  %v4725 = vld [vmem:[%s5 + $0x30] sm:$0xff]
  %v4726 = vld [vmem:[%s5 + $0x38] sm:$0xff]
  %v4727 = vld [vmem:[%s5 + $0x40] sm:$0xff]
  %v4728 = vld [vmem:[%s5 + $0x48] sm:$0xff]
  %v4729 = vld [vmem:[%s5 + $0x50] sm:$0xff]
  %v4730 = vld [vmem:[%s5 + $0x58] sm:$0xff]
  %v4731 = vld [vmem:[%s5 + $0x60] sm:$0xff]
  %v4732 = vld [vmem:[%s5 + $0x68] sm:$0xff]
  %v4733 = vld [vmem:[%s5 + $0x70] sm:$0xff]
  %v4734 = vld [vmem:[%s5 + $0x78] sm:$0xff]
  %v4735 = vld [vmem:[%s5 + $0x80] sm:$0xff]
  %v4736 = vld [vmem:[%s5 + $0x88] sm:$0xff]
  %v4737 = vld [vmem:[%s5 + $0x90] sm:$0xff]
  %v4738 = vld [vmem:[%s5 + $0x98] sm:$0xff]
  %v4739 = vld [vmem:[%s5 + $0xa0] sm:$0xff]
  %v4740 = vld [vmem:[%s5 + $0xa8] sm:$0xff]
  %v4741 = vld [vmem:[%s5 + $0xb0] sm:$0xff]
  %v4742 = vld [vmem:[%s5 + $0xb8] sm:$0xff]
  %v4743 = vld [vmem:[%s5 + $0xc0] sm:$0xff]
  %v4744 = vld [vmem:[%s5 + $0xc8] sm:$0xff]
  %v4745 = vld [vmem:[%s5 + $0xd0] sm:$0xff]
  %v4746 = vld [vmem:[%s5 + $0xd8] sm:$0xff]
  %v4747 = vld [vmem:[%s5 + $0xe0] sm:$0xff]
  %v4748 = vld [vmem:[%s5 + $0xe8] sm:$0xff]
  %v4749 = vld [vmem:[%s5 + $0xf0] sm:$0xff]
  %v4750 = vld [vmem:[%s5 + $0xf8] sm:$0xff]
  %v4783 = vunpack.c.l.b16 %v4719
  %v4784 = vunpack.c.h.b16 %v4719
  %v4785 = vunpack.c.l.b16 %v4720
  %v4786 = vunpack.c.h.b16 %v4720
  %v4787 = vunpack.c.l.b16 %v4721
  %v4788 = vunpack.c.h.b16 %v4721
  %v4789 = vunpack.c.l.b16 %v4722
  %v4790 = vunpack.c.h.b16 %v4722
  %v4791 = vunpack.c.l.b16 %v4723
  %v4792 = vunpack.c.h.b16 %v4723
  %v4793 = vunpack.c.l.b16 %v4724
  %v4794 = vunpack.c.h.b16 %v4724
  %v4795 = vunpack.c.l.b16 %v4725
  %v4796 = vunpack.c.h.b16 %v4725
  %v4797 = vunpack.c.l.b16 %v4726
  %v4798 = vunpack.c.h.b16 %v4726
  %v4799 = vunpack.c.l.b16 %v4727
  %v4800 = vunpack.c.h.b16 %v4727
  %v4801 = vunpack.c.l.b16 %v4728
  %v4802 = vunpack.c.h.b16 %v4728
  %v4803 = vunpack.c.l.b16 %v4729
  %v4804 = vunpack.c.h.b16 %v4729
  %v4805 = vunpack.c.l.b16 %v4730
  %v4806 = vunpack.c.h.b16 %v4730
  %v4807 = vunpack.c.l.b16 %v4731
  %v4808 = vunpack.c.h.b16 %v4731
  %v4809 = vunpack.c.l.b16 %v4732
  %v4810 = vunpack.c.h.b16 %v4732
  %v4811 = vunpack.c.l.b16 %v4733
  %v4812 = vunpack.c.h.b16 %v4733
  %v4813 = vunpack.c.l.b16 %v4734
  %v4814 = vunpack.c.h.b16 %v4734
  %v4815 = vunpack.c.l.b16 %v4735
  %v4816 = vunpack.c.h.b16 %v4735
  %v4817 = vunpack.c.l.b16 %v4736
  %v4818 = vunpack.c.h.b16 %v4736
  %v4819 = vunpack.c.l.b16 %v4737
  %v4820 = vunpack.c.h.b16 %v4737
  %v4821 = vunpack.c.l.b16 %v4738
  %v4822 = vunpack.c.h.b16 %v4738
  %v4823 = vunpack.c.l.b16 %v4739
  %v4824 = vunpack.c.h.b16 %v4739
  %v4825 = vunpack.c.l.b16 %v4740
  %v4826 = vunpack.c.h.b16 %v4740
  %v4827 = vunpack.c.l.b16 %v4741
  %v4828 = vunpack.c.h.b16 %v4741
  %v4829 = vunpack.c.l.b16 %v4742
  %v4830 = vunpack.c.h.b16 %v4742
  %v4831 = vunpack.c.l.b16 %v4743
  %v4832 = vunpack.c.h.b16 %v4743
  %v4833 = vunpack.c.l.b16 %v4744
  %v4834 = vunpack.c.h.b16 %v4744
  %v4835 = vunpack.c.l.b16 %v4745
  %v4836 = vunpack.c.h.b16 %v4745
  %v4837 = vunpack.c.l.b16 %v4746
  %v4838 = vunpack.c.h.b16 %v4746
  %v4839 = vunpack.c.l.b16 %v4747
  %v4840 = vunpack.c.h.b16 %v4747
  %v4841 = vunpack.c.l.b16 %v4748
  %v4842 = vunpack.c.h.b16 %v4748
  %v4843 = vunpack.c.l.b16 %v4749
  %v4844 = vunpack.c.h.b16 %v4749
  %v4845 = vunpack.c.l.b16 %v4750
  %v4846 = vunpack.c.h.b16 %v4750
  %v4847 = vpack.c.b16 %v4787, %v4783
  %v4848 = vpack.c.b16 %v4788, %v4784
  %v4849 = vpack.c.b16 %v4789, %v4785
  %v4850 = vpack.c.b16 %v4790, %v4786
  %v4851 = vpack.c.b16 %v4795, %v4791
  %v4852 = vpack.c.b16 %v4796, %v4792
  %v4853 = vpack.c.b16 %v4797, %v4793
  %v4854 = vpack.c.b16 %v4798, %v4794
  %v4855 = vpack.c.b16 %v4803, %v4799
  %v4856 = vpack.c.b16 %v4804, %v4800
  %v4857 = vpack.c.b16 %v4805, %v4801
  %v4858 = vpack.c.b16 %v4806, %v4802
  %v4859 = vpack.c.b16 %v4811, %v4807
  %v4860 = vpack.c.b16 %v4812, %v4808
  %v4861 = vpack.c.b16 %v4813, %v4809
  %v4862 = vpack.c.b16 %v4814, %v4810
  %v4863 = vpack.c.b16 %v4819, %v4815
  %v4864 = vpack.c.b16 %v4820, %v4816
  %v4865 = vpack.c.b16 %v4821, %v4817
  %v4866 = vpack.c.b16 %v4822, %v4818
  %v4867 = vpack.c.b16 %v4827, %v4823
  %v4868 = vpack.c.b16 %v4828, %v4824
  %v4869 = vpack.c.b16 %v4829, %v4825
  %v4870 = vpack.c.b16 %v4830, %v4826
  %v4871 = vpack.c.b16 %v4835, %v4831
  %v4872 = vpack.c.b16 %v4836, %v4832
  %v4873 = vpack.c.b16 %v4837, %v4833
  %v4874 = vpack.c.b16 %v4838, %v4834
  %v4875 = vpack.c.b16 %v4843, %v4839
  %v4876 = vpack.c.b16 %v4844, %v4840
  %v4877 = vpack.c.b16 %v4845, %v4841
  %v4878 = vpack.c.b16 %v4846, %v4842
  %4911 = vmatprep.subr.bf16.mxu0 %v4848
  %4912 = vmatpush1.bf16.msra.mxu0 %v4847
  %4913 = vmatprep.subr.bf16.mxu0 %v4852
  %4914 = vmatpush1.bf16.msra.mxu0 %v4851
  %4915 = vmatprep.subr.bf16.mxu0 %v4856
  %4916 = vmatpush1.bf16.msra.mxu0 %v4855
  %4917 = vmatprep.subr.bf16.mxu0 %v4860
  %4918 = vmatpush1.bf16.msra.mxu0 %v4859
  %4919 = vmatprep.subr.bf16.mxu0 %v4864
  %4920 = vmatpush1.bf16.msra.mxu0 %v4863
  %4921 = vmatprep.subr.bf16.mxu0 %v4868
  %4922 = vmatpush1.bf16.msra.mxu0 %v4867
  %4923 = vmatprep.subr.bf16.mxu0 %v4872
  %4924 = vmatpush1.bf16.msra.mxu0 %v4871
  %4925 = vmatprep.subr.bf16.mxu0 %v4876
  %4926 = vmatpush1.bf16.msra.mxu0 %v4875
  %4927 = vmatprep.subr.bf16.mxu0 0
  %4928 = vmatpush1.bf16.msra.mxu0 0
  %4929 = vmatprep.subr.bf16.mxu0 0
  %4930 = vmatpush1.bf16.msra.mxu0 0
  %4931 = vmatprep.subr.bf16.mxu0 0
  %4932 = vmatpush1.bf16.msra.mxu0 0
  %4933 = vmatprep.subr.bf16.mxu0 0
  %4934 = vmatpush1.bf16.msra.mxu0 0
  %4935 = vmatprep.subr.bf16.mxu0 0
  %4936 = vmatpush1.bf16.msra.mxu0 0
  %4937 = vmatprep.subr.bf16.mxu0 0
  %4938 = vmatpush1.bf16.msra.mxu0 0
  %4939 = vmatprep.subr.bf16.mxu0 0
  %4940 = vmatpush1.bf16.msra.mxu0 0
  %4941 = vmatprep.subr.bf16.mxu0 0
  %4942 = vmatpush1.bf16.msra.mxu0 0
  %4943 = vmatprep.mubr.bf16.mxu0 0
  %4944 = vmatmul.mubr.bf16.gmra.mrb[0].mxu0 %v4714
  %v4945 = vpop.f32.mrb[0].mxu0
  %v4946 = vadd.f32 0.0, %v4945
  %v4947 = vpop.f32.mrb[0].mxu0
  %v4948 = vadd.f32 0.0, %v4947
  %v4949 = vpop.f32.mrb[0].mxu0
  %v4950 = vpop.f32.mrb[0].mxu0
  %4951 = vdwg.mxu0
  %4952 = vmatprep.subr.bf16.mxu0 %v4850
  %4953 = vmatpush1.bf16.msra.mxu0 %v4849
  %4954 = vmatprep.subr.bf16.mxu0 %v4854
  %4955 = vmatpush1.bf16.msra.mxu0 %v4853
  %4956 = vmatprep.subr.bf16.mxu0 %v4858
  %4957 = vmatpush1.bf16.msra.mxu0 %v4857
  %4958 = vmatprep.subr.bf16.mxu0 %v4862
  %4959 = vmatpush1.bf16.msra.mxu0 %v4861
  %4960 = vmatprep.subr.bf16.mxu0 %v4866
  %4961 = vmatpush1.bf16.msra.mxu0 %v4865
  %4962 = vmatprep.subr.bf16.mxu0 %v4870
  %4963 = vmatpush1.bf16.msra.mxu0 %v4869
  %4964 = vmatprep.subr.bf16.mxu0 %v4874
  %4965 = vmatpush1.bf16.msra.mxu0 %v4873
  %4966 = vmatprep.subr.bf16.mxu0 %v4878
  %4967 = vmatpush1.bf16.msra.mxu0 %v4877
  %4968 = vmatprep.subr.bf16.mxu0 0
  %4969 = vmatpush1.bf16.msra.mxu0 0
  %4970 = vmatprep.subr.bf16.mxu0 0
  %4971 = vmatpush1.bf16.msra.mxu0 0
  %4972 = vmatprep.subr.bf16.mxu0 0
  %4973 = vmatpush1.bf16.msra.mxu0 0
  %4974 = vmatprep.subr.bf16.mxu0 0
  %4975 = vmatpush1.bf16.msra.mxu0 0
  %4976 = vmatprep.subr.bf16.mxu0 0
  %4977 = vmatpush1.bf16.msra.mxu0 0
  %4978 = vmatprep.subr.bf16.mxu0 0
  %4979 = vmatpush1.bf16.msra.mxu0 0
  %4980 = vmatprep.subr.bf16.mxu0 0
  %4981 = vmatpush1.bf16.msra.mxu0 0
  %4982 = vmatprep.subr.bf16.mxu0 0
  %4983 = vmatpush1.bf16.msra.mxu0 0
  %4984 = vmatprep.mubr.bf16.mxu0 0
  %4985 = vmatmul.mubr.bf16.gmra.mrb[0].mxu0 %v4714
  %v4986 = vpop.f32.mrb[0].mxu0
  %v4987 = vadd.f32 0.0, %v4986
  %v4988 = vpop.f32.mrb[0].mxu0
  %v4989 = vadd.f32 0.0, %v4988
  %v4990 = vpop.f32.mrb[0].mxu0
  %v4991 = vpop.f32.mrb[0].mxu0
  %4992 = vdwg.mxu0
  %v4993 = vadd.f32 %v4715, %v4946
  %v4994 = vadd.f32 %v4716, %v4948
  %v4995 = vadd.f32 %v4717, %v4987
  %v4996 = vadd.f32 %v4718, %v4989
  %v4997 = vmul.f32 %v4993, 0.5
  %v4998 = vmul.f32 %v4994, 0.5
  %v4999 = vmul.f32 %v4995, 0.5
  %v5000 = vtanh.pop %v4997
  %v5001 = vtanh.pop %v4998
  %v5002 = vtanh.pop %v4999
  %v5003 = vmul.f32 %v5000, 0.5
  %v5004 = vmul.f32 %v5001, 0.5
  %v5005 = vmul.f32 %v5002, 0.5
  %v5006 = vadd.f32 %v5003, 0.5
  %v5007 = vadd.f32 %v5004, 0.5
  %v5008 = vadd.f32 %v5005, 0.5
  %v5009 = vtanh.pop %v4996
  %v5010 = vld [vmem:[#allocation5] sm:$0xff]
  %v5011 = vmul.f32 %v5007, %v5010
  %v5012 = vmul.f32 %v5006, %v5009
  %v5013 = vadd.f32 %v5011, %v5012
  %v5014 = vtanh.pop %v5013
  %v5015 = vmul.f32 %v5008, %v5014
  %5016 = vst [vmem:[#allocation5] sm:$0xff] %v5013
  %5017 = vst [vmem:[#allocation4] sm:$0xff] %v5015
  %v5018 = vld [vmem:[#allocation4] sm:$0xff]
  %v5019 = vpack.c.bf16 %v5018, %v5018
  %v5020 = vld [vmem:[%s2166] sm:$0xff]
  %v5021 = vld [vmem:[%s2166 + $0x8] sm:$0xff]
  %v5022 = vld [vmem:[%s2166 + $0x10] sm:$0xff]
  %v5023 = vld [vmem:[%s2166 + $0x18] sm:$0xff]
  %v5024 = vld [vmem:[%s5] sm:$0xff]
  %v5025 = vld [vmem:[%s5 + $0x8] sm:$0xff]
  %v5026 = vld [vmem:[%s5 + $0x10] sm:$0xff]
  %v5027 = vld [vmem:[%s5 + $0x18] sm:$0xff]
  %v5028 = vld [vmem:[%s5 + $0x20] sm:$0xff]
  %v5029 = vld [vmem:[%s5 + $0x28] sm:$0xff]
  %v5030 = vld [vmem:[%s5 + $0x30] sm:$0xff]
  %v5031 = vld [vmem:[%s5 + $0x38] sm:$0xff]
  %v5032 = vld [vmem:[%s5 + $0x40] sm:$0xff]
  %v5033 = vld [vmem:[%s5 + $0x48] sm:$0xff]
  %v5034 = vld [vmem:[%s5 + $0x50] sm:$0xff]
  %v5035 = vld [vmem:[%s5 + $0x58] sm:$0xff]
  %v5036 = vld [vmem:[%s5 + $0x60] sm:$0xff]
  %v5037 = vld [vmem:[%s5 + $0x68] sm:$0xff]
  %v5038 = vld [vmem:[%s5 + $0x70] sm:$0xff]
  %v5039 = vld [vmem:[%s5 + $0x78] sm:$0xff]
  %v5040 = vld [vmem:[%s5 + $0x80] sm:$0xff]
  %v5041 = vld [vmem:[%s5 + $0x88] sm:$0xff]
  %v5042 = vld [vmem:[%s5 + $0x90] sm:$0xff]
  %v5043 = vld [vmem:[%s5 + $0x98] sm:$0xff]
  %v5044 = vld [vmem:[%s5 + $0xa0] sm:$0xff]
  %v5045 = vld [vmem:[%s5 + $0xa8] sm:$0xff]
  %v5046 = vld [vmem:[%s5 + $0xb0] sm:$0xff]
  %v5047 = vld [vmem:[%s5 + $0xb8] sm:$0xff]
  %v5048 = vld [vmem:[%s5 + $0xc0] sm:$0xff]
  %v5049 = vld [vmem:[%s5 + $0xc8] sm:$0xff]
  %v5050 = vld [vmem:[%s5 + $0xd0] sm:$0xff]
  %v5051 = vld [vmem:[%s5 + $0xd8] sm:$0xff]
  %v5052 = vld [vmem:[%s5 + $0xe0] sm:$0xff]
  %v5053 = vld [vmem:[%s5 + $0xe8] sm:$0xff]
  %v5054 = vld [vmem:[%s5 + $0xf0] sm:$0xff]
  %v5055 = vld [vmem:[%s5 + $0xf8] sm:$0xff]
  %v5088 = vunpack.c.l.b16 %v5024
  %v5089 = vunpack.c.h.b16 %v5024
  %v5090 = vunpack.c.l.b16 %v5025
  %v5091 = vunpack.c.h.b16 %v5025
  %v5092 = vunpack.c.l.b16 %v5026
  %v5093 = vunpack.c.h.b16 %v5026
  %v5094 = vunpack.c.l.b16 %v5027
  %v5095 = vunpack.c.h.b16 %v5027
  %v5096 = vunpack.c.l.b16 %v5028
  %v5097 = vunpack.c.h.b16 %v5028
  %v5098 = vunpack.c.l.b16 %v5029
  %v5099 = vunpack.c.h.b16 %v5029
  %v5100 = vunpack.c.l.b16 %v5030
  %v5101 = vunpack.c.h.b16 %v5030
  %v5102 = vunpack.c.l.b16 %v5031
  %v5103 = vunpack.c.h.b16 %v5031
  %v5104 = vunpack.c.l.b16 %v5032
  %v5105 = vunpack.c.h.b16 %v5032
  %v5106 = vunpack.c.l.b16 %v5033
  %v5107 = vunpack.c.h.b16 %v5033
  %v5108 = vunpack.c.l.b16 %v5034
  %v5109 = vunpack.c.h.b16 %v5034
  %v5110 = vunpack.c.l.b16 %v5035
  %v5111 = vunpack.c.h.b16 %v5035
  %v5112 = vunpack.c.l.b16 %v5036
  %v5113 = vunpack.c.h.b16 %v5036
  %v5114 = vunpack.c.l.b16 %v5037
  %v5115 = vunpack.c.h.b16 %v5037
  %v5116 = vunpack.c.l.b16 %v5038
  %v5117 = vunpack.c.h.b16 %v5038
  %v5118 = vunpack.c.l.b16 %v5039
  %v5119 = vunpack.c.h.b16 %v5039
  %v5120 = vunpack.c.l.b16 %v5040
  %v5121 = vunpack.c.h.b16 %v5040
  %v5122 = vunpack.c.l.b16 %v5041
  %v5123 = vunpack.c.h.b16 %v5041
  %v5124 = vunpack.c.l.b16 %v5042
  %v5125 = vunpack.c.h.b16 %v5042
  %v5126 = vunpack.c.l.b16 %v5043
  %v5127 = vunpack.c.h.b16 %v5043
  %v5128 = vunpack.c.l.b16 %v5044
  %v5129 = vunpack.c.h.b16 %v5044
  %v5130 = vunpack.c.l.b16 %v5045
  %v5131 = vunpack.c.h.b16 %v5045
  %v5132 = vunpack.c.l.b16 %v5046
  %v5133 = vunpack.c.h.b16 %v5046
  %v5134 = vunpack.c.l.b16 %v5047
  %v5135 = vunpack.c.h.b16 %v5047
  %v5136 = vunpack.c.l.b16 %v5048
  %v5137 = vunpack.c.h.b16 %v5048
  %v5138 = vunpack.c.l.b16 %v5049
  %v5139 = vunpack.c.h.b16 %v5049
  %v5140 = vunpack.c.l.b16 %v5050
  %v5141 = vunpack.c.h.b16 %v5050
  %v5142 = vunpack.c.l.b16 %v5051
  %v5143 = vunpack.c.h.b16 %v5051
  %v5144 = vunpack.c.l.b16 %v5052
  %v5145 = vunpack.c.h.b16 %v5052
  %v5146 = vunpack.c.l.b16 %v5053
  %v5147 = vunpack.c.h.b16 %v5053
  %v5148 = vunpack.c.l.b16 %v5054
  %v5149 = vunpack.c.h.b16 %v5054
  %v5150 = vunpack.c.l.b16 %v5055
  %v5151 = vunpack.c.h.b16 %v5055
  %v5152 = vpack.c.b16 %v5092, %v5088
  %v5153 = vpack.c.b16 %v5093, %v5089
  %v5154 = vpack.c.b16 %v5094, %v5090
  %v5155 = vpack.c.b16 %v5095, %v5091
  %v5156 = vpack.c.b16 %v5100, %v5096
  %v5157 = vpack.c.b16 %v5101, %v5097
  %v5158 = vpack.c.b16 %v5102, %v5098
  %v5159 = vpack.c.b16 %v5103, %v5099
  %v5160 = vpack.c.b16 %v5108, %v5104
  %v5161 = vpack.c.b16 %v5109, %v5105
  %v5162 = vpack.c.b16 %v5110, %v5106
  %v5163 = vpack.c.b16 %v5111, %v5107
  %v5164 = vpack.c.b16 %v5116, %v5112
  %v5165 = vpack.c.b16 %v5117, %v5113
  %v5166 = vpack.c.b16 %v5118, %v5114
  %v5167 = vpack.c.b16 %v5119, %v5115
  %v5168 = vpack.c.b16 %v5124, %v5120
  %v5169 = vpack.c.b16 %v5125, %v5121
  %v5170 = vpack.c.b16 %v5126, %v5122
  %v5171 = vpack.c.b16 %v5127, %v5123
  %v5172 = vpack.c.b16 %v5132, %v5128
  %v5173 = vpack.c.b16 %v5133, %v5129
  %v5174 = vpack.c.b16 %v5134, %v5130
  %v5175 = vpack.c.b16 %v5135, %v5131
  %v5176 = vpack.c.b16 %v5140, %v5136
  %v5177 = vpack.c.b16 %v5141, %v5137
  %v5178 = vpack.c.b16 %v5142, %v5138
  %v5179 = vpack.c.b16 %v5143, %v5139
  %v5180 = vpack.c.b16 %v5148, %v5144
  %v5181 = vpack.c.b16 %v5149, %v5145
  %v5182 = vpack.c.b16 %v5150, %v5146
  %v5183 = vpack.c.b16 %v5151, %v5147
  %5216 = vmatprep.subr.bf16.mxu0 %v5153
  %5217 = vmatpush1.bf16.msra.mxu0 %v5152
  %5218 = vmatprep.subr.bf16.mxu0 %v5157
  %5219 = vmatpush1.bf16.msra.mxu0 %v5156
  %5220 = vmatprep.subr.bf16.mxu0 %v5161
  %5221 = vmatpush1.bf16.msra.mxu0 %v5160
  %5222 = vmatprep.subr.bf16.mxu0 %v5165
  %5223 = vmatpush1.bf16.msra.mxu0 %v5164
  %5224 = vmatprep.subr.bf16.mxu0 %v5169
  %5225 = vmatpush1.bf16.msra.mxu0 %v5168
  %5226 = vmatprep.subr.bf16.mxu0 %v5173
  %5227 = vmatpush1.bf16.msra.mxu0 %v5172
  %5228 = vmatprep.subr.bf16.mxu0 %v5177
  %5229 = vmatpush1.bf16.msra.mxu0 %v5176
  %5230 = vmatprep.subr.bf16.mxu0 %v5181
  %5231 = vmatpush1.bf16.msra.mxu0 %v5180
  %5232 = vmatprep.subr.bf16.mxu0 0
  %5233 = vmatpush1.bf16.msra.mxu0 0
  %5234 = vmatprep.subr.bf16.mxu0 0
  %5235 = vmatpush1.bf16.msra.mxu0 0
  %5236 = vmatprep.subr.bf16.mxu0 0
  %5237 = vmatpush1.bf16.msra.mxu0 0
  %5238 = vmatprep.subr.bf16.mxu0 0
  %5239 = vmatpush1.bf16.msra.mxu0 0
  %5240 = vmatprep.subr.bf16.mxu0 0
  %5241 = vmatpush1.bf16.msra.mxu0 0
  %5242 = vmatprep.subr.bf16.mxu0 0
  %5243 = vmatpush1.bf16.msra.mxu0 0
  %5244 = vmatprep.subr.bf16.mxu0 0
  %5245 = vmatpush1.bf16.msra.mxu0 0
  %5246 = vmatprep.subr.bf16.mxu0 0
  %5247 = vmatpush1.bf16.msra.mxu0 0
  %5248 = vmatprep.mubr.bf16.mxu0 0
  %5249 = vmatmul.mubr.bf16.gmra.mrb[0].mxu0 %v5019
  %v5250 = vpop.f32.mrb[0].mxu0
  %v5251 = vadd.f32 0.0, %v5250
  %v5252 = vpop.f32.mrb[0].mxu0
  %v5253 = vadd.f32 0.0, %v5252
  %v5254 = vpop.f32.mrb[0].mxu0
  %v5255 = vpop.f32.mrb[0].mxu0
  %5256 = vdwg.mxu0
  %5257 = vmatprep.subr.bf16.mxu0 %v5155
  %5258 = vmatpush1.bf16.msra.mxu0 %v5154
  %5259 = vmatprep.subr.bf16.mxu0 %v5159
  %5260 = vmatpush1.bf16.msra.mxu0 %v5158
  %5261 = vmatprep.subr.bf16.mxu0 %v5163
  %5262 = vmatpush1.bf16.msra.mxu0 %v5162
  %5263 = vmatprep.subr.bf16.mxu0 %v5167
  %5264 = vmatpush1.bf16.msra.mxu0 %v5166
  %5265 = vmatprep.subr.bf16.mxu0 %v5171
  %5266 = vmatpush1.bf16.msra.mxu0 %v5170
  %5267 = vmatprep.subr.bf16.mxu0 %v5175
  %5268 = vmatpush1.bf16.msra.mxu0 %v5174
  %5269 = vmatprep.subr.bf16.mxu0 %v5179
  %5270 = vmatpush1.bf16.msra.mxu0 %v5178
  %5271 = vmatprep.subr.bf16.mxu0 %v5183
  %5272 = vmatpush1.bf16.msra.mxu0 %v5182
  %5273 = vmatprep.subr.bf16.mxu0 0
  %5274 = vmatpush1.bf16.msra.mxu0 0
  %5275 = vmatprep.subr.bf16.mxu0 0
  %5276 = vmatpush1.bf16.msra.mxu0 0
  %5277 = vmatprep.subr.bf16.mxu0 0
  %5278 = vmatpush1.bf16.msra.mxu0 0
  %5279 = vmatprep.subr.bf16.mxu0 0
  %5280 = vmatpush1.bf16.msra.mxu0 0
  %5281 = vmatprep.subr.bf16.mxu0 0
  %5282 = vmatpush1.bf16.msra.mxu0 0
  %5283 = vmatprep.subr.bf16.mxu0 0
  %5284 = vmatpush1.bf16.msra.mxu0 0
  %5285 = vmatprep.subr.bf16.mxu0 0
  %5286 = vmatpush1.bf16.msra.mxu0 0
  %5287 = vmatprep.subr.bf16.mxu0 0
  %5288 = vmatpush1.bf16.msra.mxu0 0
  %5289 = vmatprep.mubr.bf16.mxu0 0
  %5290 = vmatmul.mubr.bf16.gmra.mrb[0].mxu0 %v5019
  %v5291 = vpop.f32.mrb[0].mxu0
  %v5292 = vadd.f32 0.0, %v5291
  %v5293 = vpop.f32.mrb[0].mxu0
  %v5294 = vadd.f32 0.0, %v5293
  %v5295 = vpop.f32.mrb[0].mxu0
  %v5296 = vpop.f32.mrb[0].mxu0
  %5297 = vdwg.mxu0
  %v5298 = vadd.f32 %v5020, %v5251
  %v5299 = vadd.f32 %v5021, %v5253
  %v5300 = vadd.f32 %v5022, %v5292
  %v5301 = vadd.f32 %v5023, %v5294
  %v5302 = vmul.f32 %v5298, 0.5
  %v5303 = vmul.f32 %v5299, 0.5
  %v5304 = vmul.f32 %v5300, 0.5
  %v5305 = vtanh.pop %v5302
  %v5306 = vtanh.pop %v5303
  %v5307 = vtanh.pop %v5304
  %v5308 = vmul.f32 %v5305, 0.5
  %v5309 = vmul.f32 %v5306, 0.5
  %v5310 = vmul.f32 %v5307, 0.5
  %v5311 = vadd.f32 %v5308, 0.5
  %v5312 = vadd.f32 %v5309, 0.5
  %v5313 = vadd.f32 %v5310, 0.5
  %v5314 = vtanh.pop %v5301
  %v5315 = vld [vmem:[#allocation5] sm:$0xff]
  %v5316 = vmul.f32 %v5312, %v5315
  %v5317 = vmul.f32 %v5311, %v5314
  %v5318 = vadd.f32 %v5316, %v5317
  %v5319 = vtanh.pop %v5318
  %v5320 = vmul.f32 %v5313, %v5319
  %5321 = vst [vmem:[#allocation5] sm:$0xff] %v5318
  %5322 = vst [vmem:[#allocation4] sm:$0xff] %v5320
  %v5323 = vld [vmem:[#allocation4] sm:$0xff]
  %v5324 = vpack.c.bf16 %v5323, %v5323
  %v5325 = vld [vmem:[%s2476] sm:$0xff]
  %v5326 = vld [vmem:[%s2476 + $0x8] sm:$0xff]
  %v5327 = vld [vmem:[%s2476 + $0x10] sm:$0xff]
  %v5328 = vld [vmem:[%s2476 + $0x18] sm:$0xff]
  %v5329 = vld [vmem:[%s5] sm:$0xff]
  %v5330 = vld [vmem:[%s5 + $0x8] sm:$0xff]
  %v5331 = vld [vmem:[%s5 + $0x10] sm:$0xff]
  %v5332 = vld [vmem:[%s5 + $0x18] sm:$0xff]
  %v5333 = vld [vmem:[%s5 + $0x20] sm:$0xff]
  %v5334 = vld [vmem:[%s5 + $0x28] sm:$0xff]
  %v5335 = vld [vmem:[%s5 + $0x30] sm:$0xff]
  %v5336 = vld [vmem:[%s5 + $0x38] sm:$0xff]
  %v5337 = vld [vmem:[%s5 + $0x40] sm:$0xff]
  %v5338 = vld [vmem:[%s5 + $0x48] sm:$0xff]
  %v5339 = vld [vmem:[%s5 + $0x50] sm:$0xff]
  %v5340 = vld [vmem:[%s5 + $0x58] sm:$0xff]
  %v5341 = vld [vmem:[%s5 + $0x60] sm:$0xff]
  %v5342 = vld [vmem:[%s5 + $0x68] sm:$0xff]
  %v5343 = vld [vmem:[%s5 + $0x70] sm:$0xff]
  %v5344 = vld [vmem:[%s5 + $0x78] sm:$0xff]
  %v5345 = vld [vmem:[%s5 + $0x80] sm:$0xff]
  %v5346 = vld [vmem:[%s5 + $0x88] sm:$0xff]
  %v5347 = vld [vmem:[%s5 + $0x90] sm:$0xff]
  %v5348 = vld [vmem:[%s5 + $0x98] sm:$0xff]
  %v5349 = vld [vmem:[%s5 + $0xa0] sm:$0xff]
  %v5350 = vld [vmem:[%s5 + $0xa8] sm:$0xff]
  %v5351 = vld [vmem:[%s5 + $0xb0] sm:$0xff]
  %v5352 = vld [vmem:[%s5 + $0xb8] sm:$0xff]
  %v5353 = vld [vmem:[%s5 + $0xc0] sm:$0xff]
  %v5354 = vld [vmem:[%s5 + $0xc8] sm:$0xff]
  %v5355 = vld [vmem:[%s5 + $0xd0] sm:$0xff]
  %v5356 = vld [vmem:[%s5 + $0xd8] sm:$0xff]
  %v5357 = vld [vmem:[%s5 + $0xe0] sm:$0xff]
  %v5358 = vld [vmem:[%s5 + $0xe8] sm:$0xff]
  %v5359 = vld [vmem:[%s5 + $0xf0] sm:$0xff]
  %v5360 = vld [vmem:[%s5 + $0xf8] sm:$0xff]
  %v5393 = vunpack.c.l.b16 %v5329
  %v5394 = vunpack.c.h.b16 %v5329
  %v5395 = vunpack.c.l.b16 %v5330
  %v5396 = vunpack.c.h.b16 %v5330
  %v5397 = vunpack.c.l.b16 %v5331
  %v5398 = vunpack.c.h.b16 %v5331
  %v5399 = vunpack.c.l.b16 %v5332
  %v5400 = vunpack.c.h.b16 %v5332
  %v5401 = vunpack.c.l.b16 %v5333
  %v5402 = vunpack.c.h.b16 %v5333
  %v5403 = vunpack.c.l.b16 %v5334
  %v5404 = vunpack.c.h.b16 %v5334
  %v5405 = vunpack.c.l.b16 %v5335
  %v5406 = vunpack.c.h.b16 %v5335
  %v5407 = vunpack.c.l.b16 %v5336
  %v5408 = vunpack.c.h.b16 %v5336
  %v5409 = vunpack.c.l.b16 %v5337
  %v5410 = vunpack.c.h.b16 %v5337
  %v5411 = vunpack.c.l.b16 %v5338
  %v5412 = vunpack.c.h.b16 %v5338
  %v5413 = vunpack.c.l.b16 %v5339
  %v5414 = vunpack.c.h.b16 %v5339
  %v5415 = vunpack.c.l.b16 %v5340
  %v5416 = vunpack.c.h.b16 %v5340
  %v5417 = vunpack.c.l.b16 %v5341
  %v5418 = vunpack.c.h.b16 %v5341
  %v5419 = vunpack.c.l.b16 %v5342
  %v5420 = vunpack.c.h.b16 %v5342
  %v5421 = vunpack.c.l.b16 %v5343
  %v5422 = vunpack.c.h.b16 %v5343
  %v5423 = vunpack.c.l.b16 %v5344
  %v5424 = vunpack.c.h.b16 %v5344
  %v5425 = vunpack.c.l.b16 %v5345
  %v5426 = vunpack.c.h.b16 %v5345
  %v5427 = vunpack.c.l.b16 %v5346
  %v5428 = vunpack.c.h.b16 %v5346
  %v5429 = vunpack.c.l.b16 %v5347
  %v5430 = vunpack.c.h.b16 %v5347
  %v5431 = vunpack.c.l.b16 %v5348
  %v5432 = vunpack.c.h.b16 %v5348
  %v5433 = vunpack.c.l.b16 %v5349
  %v5434 = vunpack.c.h.b16 %v5349
  %v5435 = vunpack.c.l.b16 %v5350
  %v5436 = vunpack.c.h.b16 %v5350
  %v5437 = vunpack.c.l.b16 %v5351
  %v5438 = vunpack.c.h.b16 %v5351
  %v5439 = vunpack.c.l.b16 %v5352
  %v5440 = vunpack.c.h.b16 %v5352
  %v5441 = vunpack.c.l.b16 %v5353
  %v5442 = vunpack.c.h.b16 %v5353
  %v5443 = vunpack.c.l.b16 %v5354
  %v5444 = vunpack.c.h.b16 %v5354
  %v5445 = vunpack.c.l.b16 %v5355
  %v5446 = vunpack.c.h.b16 %v5355
  %v5447 = vunpack.c.l.b16 %v5356
  %v5448 = vunpack.c.h.b16 %v5356
  %v5449 = vunpack.c.l.b16 %v5357
  %v5450 = vunpack.c.h.b16 %v5357
  %v5451 = vunpack.c.l.b16 %v5358
  %v5452 = vunpack.c.h.b16 %v5358
  %v5453 = vunpack.c.l.b16 %v5359
  %v5454 = vunpack.c.h.b16 %v5359
  %v5455 = vunpack.c.l.b16 %v5360
  %v5456 = vunpack.c.h.b16 %v5360
  %v5457 = vpack.c.b16 %v5397, %v5393
  %v5458 = vpack.c.b16 %v5398, %v5394
  %v5459 = vpack.c.b16 %v5399, %v5395
  %v5460 = vpack.c.b16 %v5400, %v5396
  %v5461 = vpack.c.b16 %v5405, %v5401
  %v5462 = vpack.c.b16 %v5406, %v5402
  %v5463 = vpack.c.b16 %v5407, %v5403
  %v5464 = vpack.c.b16 %v5408, %v5404
  %v5465 = vpack.c.b16 %v5413, %v5409
  %v5466 = vpack.c.b16 %v5414, %v5410
  %v5467 = vpack.c.b16 %v5415, %v5411
  %v5468 = vpack.c.b16 %v5416, %v5412
  %v5469 = vpack.c.b16 %v5421, %v5417
  %v5470 = vpack.c.b16 %v5422, %v5418
  %v5471 = vpack.c.b16 %v5423, %v5419
  %v5472 = vpack.c.b16 %v5424, %v5420
  %v5473 = vpack.c.b16 %v5429, %v5425
  %v5474 = vpack.c.b16 %v5430, %v5426
  %v5475 = vpack.c.b16 %v5431, %v5427
  %v5476 = vpack.c.b16 %v5432, %v5428
  %v5477 = vpack.c.b16 %v5437, %v5433
  %v5478 = vpack.c.b16 %v5438, %v5434
  %v5479 = vpack.c.b16 %v5439, %v5435
  %v5480 = vpack.c.b16 %v5440, %v5436
  %v5481 = vpack.c.b16 %v5445, %v5441
  %v5482 = vpack.c.b16 %v5446, %v5442
  %v5483 = vpack.c.b16 %v5447, %v5443
  %v5484 = vpack.c.b16 %v5448, %v5444
  %v5485 = vpack.c.b16 %v5453, %v5449
  %v5486 = vpack.c.b16 %v5454, %v5450
  %v5487 = vpack.c.b16 %v5455, %v5451
  %v5488 = vpack.c.b16 %v5456, %v5452
  %5521 = vmatprep.subr.bf16.mxu0 %v5458
  %5522 = vmatpush1.bf16.msra.mxu0 %v5457
  %5523 = vmatprep.subr.bf16.mxu0 %v5462
  %5524 = vmatpush1.bf16.msra.mxu0 %v5461
  %5525 = vmatprep.subr.bf16.mxu0 %v5466
  %5526 = vmatpush1.bf16.msra.mxu0 %v5465
  %5527 = vmatprep.subr.bf16.mxu0 %v5470
  %5528 = vmatpush1.bf16.msra.mxu0 %v5469
  %5529 = vmatprep.subr.bf16.mxu0 %v5474
  %5530 = vmatpush1.bf16.msra.mxu0 %v5473
  %5531 = vmatprep.subr.bf16.mxu0 %v5478
  %5532 = vmatpush1.bf16.msra.mxu0 %v5477
  %5533 = vmatprep.subr.bf16.mxu0 %v5482
  %5534 = vmatpush1.bf16.msra.mxu0 %v5481
  %5535 = vmatprep.subr.bf16.mxu0 %v5486
  %5536 = vmatpush1.bf16.msra.mxu0 %v5485
  %5537 = vmatprep.subr.bf16.mxu0 0
  %5538 = vmatpush1.bf16.msra.mxu0 0
  %5539 = vmatprep.subr.bf16.mxu0 0
  %5540 = vmatpush1.bf16.msra.mxu0 0
  %5541 = vmatprep.subr.bf16.mxu0 0
  %5542 = vmatpush1.bf16.msra.mxu0 0
  %5543 = vmatprep.subr.bf16.mxu0 0
  %5544 = vmatpush1.bf16.msra.mxu0 0
  %5545 = vmatprep.subr.bf16.mxu0 0
  %5546 = vmatpush1.bf16.msra.mxu0 0
  %5547 = vmatprep.subr.bf16.mxu0 0
  %5548 = vmatpush1.bf16.msra.mxu0 0
  %5549 = vmatprep.subr.bf16.mxu0 0
  %5550 = vmatpush1.bf16.msra.mxu0 0
  %5551 = vmatprep.subr.bf16.mxu0 0
  %5552 = vmatpush1.bf16.msra.mxu0 0
  %5553 = vmatprep.mubr.bf16.mxu0 0
  %5554 = vmatmul.mubr.bf16.gmra.mrb[0].mxu0 %v5324
  %v5555 = vpop.f32.mrb[0].mxu0
  %v5556 = vadd.f32 0.0, %v5555
  %v5557 = vpop.f32.mrb[0].mxu0
  %v5558 = vadd.f32 0.0, %v5557
  %v5559 = vpop.f32.mrb[0].mxu0
  %v5560 = vpop.f32.mrb[0].mxu0
  %5561 = vdwg.mxu0
  %5562 = vmatprep.subr.bf16.mxu0 %v5460
  %5563 = vmatpush1.bf16.msra.mxu0 %v5459
  %5564 = vmatprep.subr.bf16.mxu0 %v5464
  %5565 = vmatpush1.bf16.msra.mxu0 %v5463
  %5566 = vmatprep.subr.bf16.mxu0 %v5468
  %5567 = vmatpush1.bf16.msra.mxu0 %v5467
  %5568 = vmatprep.subr.bf16.mxu0 %v5472
  %5569 = vmatpush1.bf16.msra.mxu0 %v5471
  %5570 = vmatprep.subr.bf16.mxu0 %v5476
  %5571 = vmatpush1.bf16.msra.mxu0 %v5475
  %5572 = vmatprep.subr.bf16.mxu0 %v5480
  %5573 = vmatpush1.bf16.msra.mxu0 %v5479
  %5574 = vmatprep.subr.bf16.mxu0 %v5484
  %5575 = vmatpush1.bf16.msra.mxu0 %v5483
  %5576 = vmatprep.subr.bf16.mxu0 %v5488
  %5577 = vmatpush1.bf16.msra.mxu0 %v5487
  %5578 = vmatprep.subr.bf16.mxu0 0
  %5579 = vmatpush1.bf16.msra.mxu0 0
  %5580 = vmatprep.subr.bf16.mxu0 0
  %5581 = vmatpush1.bf16.msra.mxu0 0
  %5582 = vmatprep.subr.bf16.mxu0 0
  %5583 = vmatpush1.bf16.msra.mxu0 0
  %5584 = vmatprep.subr.bf16.mxu0 0
  %5585 = vmatpush1.bf16.msra.mxu0 0
  %5586 = vmatprep.subr.bf16.mxu0 0
  %5587 = vmatpush1.bf16.msra.mxu0 0
  %5588 = vmatprep.subr.bf16.mxu0 0
  %5589 = vmatpush1.bf16.msra.mxu0 0
  %5590 = vmatprep.subr.bf16.mxu0 0
  %5591 = vmatpush1.bf16.msra.mxu0 0
  %5592 = vmatprep.subr.bf16.mxu0 0
  %5593 = vmatpush1.bf16.msra.mxu0 0
  %5594 = vmatprep.mubr.bf16.mxu0 0
  %5595 = vmatmul.mubr.bf16.gmra.mrb[0].mxu0 %v5324
  %v5596 = vpop.f32.mrb[0].mxu0
  %v5597 = vadd.f32 0.0, %v5596
  %v5598 = vpop.f32.mrb[0].mxu0
  %v5599 = vadd.f32 0.0, %v5598
  %v5600 = vpop.f32.mrb[0].mxu0
  %v5601 = vpop.f32.mrb[0].mxu0
  %5602 = vdwg.mxu0
  %v5603 = vadd.f32 %v5325, %v5556
  %v5604 = vadd.f32 %v5326, %v5558
  %v5605 = vadd.f32 %v5327, %v5597
  %v5606 = vadd.f32 %v5328, %v5599
  %v5607 = vmul.f32 %v5603, 0.5
  %v5608 = vmul.f32 %v5604, 0.5
  %v5609 = vmul.f32 %v5605, 0.5
  %v5610 = vtanh.pop %v5607
  %v5611 = vtanh.pop %v5608
  %v5612 = vtanh.pop %v5609
  %v5613 = vmul.f32 %v5610, 0.5
  %v5614 = vmul.f32 %v5611, 0.5
  %v5615 = vmul.f32 %v5612, 0.5
  %v5616 = vadd.f32 %v5613, 0.5
  %v5617 = vadd.f32 %v5614, 0.5
  %v5618 = vadd.f32 %v5615, 0.5
  %v5619 = vtanh.pop %v5606
  %v5620 = vld [vmem:[#allocation5] sm:$0xff]
  %v5621 = vmul.f32 %v5617, %v5620
  %v5622 = vmul.f32 %v5616, %v5619
  %v5623 = vadd.f32 %v5621, %v5622
  %v5624 = vtanh.pop %v5623
  %v5625 = vmul.f32 %v5618, %v5624
  %5626 = vst [vmem:[#allocation5] sm:$0xff] %v5623
  %5627 = vst [vmem:[#allocation4] sm:$0xff] %v5625
  %v5628 = vld [vmem:[#allocation4] sm:$0xff]
  %v5629 = vpack.c.bf16 %v5628, %v5628
  %v5630 = vld [vmem:[%s7] sm:$0xf]
  %v5631 = vld [vmem:[%s7 + $0x4] sm:$0xf]
  %v5632 = vld [vmem:[%s7 + $0x8] sm:$0xf]
  %v5633 = vld [vmem:[%s7 + $0xc] sm:$0xf]
  %v5634 = vld [vmem:[%s7 + $0x10] sm:$0xf]
  %v5635 = vld [vmem:[%s7 + $0x14] sm:$0xf]
  %v5636 = vld [vmem:[%s7 + $0x18] sm:$0xf]
  %v5637 = vld [vmem:[%s7 + $0x1c] sm:$0xf]
  %v5638 = vld [vmem:[%s7 + $0x20] sm:$0xf]
  %v5639 = vld [vmem:[%s7 + $0x24] sm:$0xf]
  %v5640 = vld [vmem:[%s7 + $0x28] sm:$0xf]
  %v5641 = vld [vmem:[%s7 + $0x2c] sm:$0xf]
  %v5642 = vld [vmem:[%s7 + $0x30] sm:$0xf]
  %v5643 = vld [vmem:[%s7 + $0x34] sm:$0xf]
  %v5644 = vld [vmem:[%s7 + $0x38] sm:$0xf]
  %v5645 = vld [vmem:[%s7 + $0x3c] sm:$0xf]
  %v5646 = vld [vmem:[#allocation6] sm:$0x1]
  %v5648 = vlaneseq
  %v5649 = vshrl.u32 %v5648, 7
  %v5650 = vsub.s32 0, %v5649
  %v5651 = vrot.slane %v5646, %v5650
  %v5669 = vunpack.c.l.b16 %v5630
  %v5670 = vunpack.c.l.b16 %v5631
  %v5671 = vunpack.c.l.b16 %v5632
  %v5672 = vunpack.c.l.b16 %v5633
  %v5673 = vunpack.c.l.b16 %v5634
  %v5674 = vunpack.c.l.b16 %v5635
  %v5675 = vunpack.c.l.b16 %v5636
  %v5676 = vunpack.c.l.b16 %v5637
  %v5677 = vunpack.c.l.b16 %v5638
  %v5678 = vunpack.c.l.b16 %v5639
  %v5679 = vunpack.c.l.b16 %v5640
  %v5680 = vunpack.c.l.b16 %v5641
  %v5681 = vunpack.c.l.b16 %v5642
  %v5682 = vunpack.c.l.b16 %v5643
  %v5683 = vunpack.c.l.b16 %v5644
  %v5684 = vunpack.c.l.b16 %v5645
  %v5685 = vpack.c.b16 %v5670, %v5669
  %v5686 = vpack.c.b16 %v5672, %v5671
  %v5687 = vpack.c.b16 %v5674, %v5673
  %v5688 = vpack.c.b16 %v5676, %v5675
  %v5689 = vpack.c.b16 %v5678, %v5677
  %v5690 = vpack.c.b16 %v5680, %v5679
  %v5691 = vpack.c.b16 %v5682, %v5681
  %v5692 = vpack.c.b16 %v5684, %v5683
  %5701 = vmatprep.subr.bf16.mxu0 0
  %5702 = vmatpush1.bf16.msra.mxu0 %v5685
  %5703 = vmatprep.subr.bf16.mxu0 0
  %5704 = vmatpush1.bf16.msra.mxu0 %v5686
  %5705 = vmatprep.subr.bf16.mxu0 0
  %5706 = vmatpush1.bf16.msra.mxu0 %v5687
  %5707 = vmatprep.subr.bf16.mxu0 0
  %5708 = vmatpush1.bf16.msra.mxu0 %v5688
  %5709 = vmatprep.subr.bf16.mxu0 0
  %5710 = vmatpush1.bf16.msra.mxu0 %v5689
  %5711 = vmatprep.subr.bf16.mxu0 0
  %5712 = vmatpush1.bf16.msra.mxu0 %v5690
  %5713 = vmatprep.subr.bf16.mxu0 0
  %5714 = vmatpush1.bf16.msra.mxu0 %v5691
  %5715 = vmatprep.subr.bf16.mxu0 0
  %5716 = vmatpush1.bf16.msra.mxu0 %v5692
  %5717 = vmatprep.subr.bf16.mxu0 0
  %5718 = vmatpush1.bf16.msra.mxu0 0
  %5719 = vmatprep.subr.bf16.mxu0 0
  %5720 = vmatpush1.bf16.msra.mxu0 0
  %5721 = vmatprep.subr.bf16.mxu0 0
  %5722 = vmatpush1.bf16.msra.mxu0 0
  %5723 = vmatprep.subr.bf16.mxu0 0
  %5724 = vmatpush1.bf16.msra.mxu0 0
  %5725 = vmatprep.subr.bf16.mxu0 0
  %5726 = vmatpush1.bf16.msra.mxu0 0
  %5727 = vmatprep.subr.bf16.mxu0 0
  %5728 = vmatpush1.bf16.msra.mxu0 0
  %5729 = vmatprep.subr.bf16.mxu0 0
  %5730 = vmatpush1.bf16.msra.mxu0 0
  %5731 = vmatprep.subr.bf16.mxu0 0
  %5732 = vmatpush1.bf16.msra.mxu0 0
  %5733 = vmatprep.mubr.bf16.mxu0 0
  %5734 = vmatmul.mubr.bf16.gmra.mrb[0].mxu0 %v5629
  %v5735 = vpop.f32.mrb[0].mxu0
  %v5736 = vadd.f32 %v5651, %v5735
  %v5737 = vpop.f32.mrb[0].mxu0
  %v5738 = vpop.f32.mrb[0].mxu0
  %v5739 = vpop.f32.mrb[0].mxu0
  %5740 = vdwg.mxu0
  %vm5741 = vcmask 7168
  %5742 = vst.msk [vmem:[%s9] sm:$0xff] %vm5741, %v5736
  // Predicated region
  $region38: #{lstm_model_forward.1} parent=0 // pred_check
    _
  $region39: #{lstm_model_forward.1} parent=0 // pred_check_branch
    %5744 = sbr.rel (0) target = $region41
  $region40: #{lstm_model_forward.1} parent=0 // pred_region
    _
  $region41: #{lstm_model_forward.1} parent=0 // pred_fallthru
    _
  // Predicated region
  $region42: #{lstm_model_forward.1} parent=0 // pred_check
    _
  $region43: #{lstm_model_forward.1} parent=0 // pred_check_branch
    %5746 = sbr.rel (0) target = $region45
  $region44: #{lstm_model_forward.1} parent=0 // pred_region
    _
  $region45: #{lstm_model_forward.1} parent=0 // pred_fallthru
    _

</llo_original>
